<compile_context>
chip_gen: v6e
topology: v6e:2x2x1
jax: 0.10.0
libtpu: 0.0.40
codegen_flags: <defaults>
</compile_context>

<pallas_src>
import functools

import jax
import jax.numpy as jnp
from jax import lax
from jax.experimental import pallas as pl
from jax.experimental.pallas import tpu as pltpu

VMEM_SPEC = pl.BlockSpec(memory_space=pltpu.MemorySpace.VMEM)


# ------------------------------ fused kernel -------------------------------

def _ada_decoder_kernel(
    x_ref, z_ref,
    fc1wT_ref, fc1b_ref, fc2wT_ref, fc2b_ref, fc3w_ref, fc3b_ref,
    cw1_ref, cb1_ref, cw2_ref, cb2_ref, cw3_ref, cb3_ref,
    cw4_ref, cb4_ref, bng_ref, bnb_ref,
    o_ref,
    patch_ref,
    *, B, H, W, dim, eps):
  f32 = jnp.float32
  bf16 = jnp.bfloat16
  S = H * W
  BS = B * S
  inv_S = 1.0 / S

  # ---------------------- style MLP (lane-dense) ----------------------------
  h = jnp.dot(z_ref[...], fc1wT_ref[...], preferred_element_type=f32)
  h = jnp.maximum(h + fc1b_ref[...], 0.0)                       # (B, 256)
  h = jnp.dot(h.astype(bf16), fc2wT_ref[...], preferred_element_type=f32)
  h = jnp.maximum(h + fc2b_ref[...], 0.0)                       # (B, 256)
  # fc3 with transposed-RHS contraction: output lands as (4*dim, B) columns.
  adp = lax.dot_general(fc3w_ref[...], h.astype(bf16),
                        dimension_numbers=(((1,), (1,)), ((), ())),
                        preferred_element_type=f32)             # (4*dim, B)
  adp = jnp.maximum(adp + fc3b_ref[...], 0.0)
  mean1, std1 = adp[0 * dim:1 * dim], adp[1 * dim:2 * dim]      # (dim, B)
  mean2, std2 = adp[2 * dim:3 * dim], adp[3 * dim:4 * dim]

  # -------------- per-image lane masks & 3x3 SAME-conv tap geometry ---------
  lane = lax.broadcasted_iota(jnp.int32, (1, BS), 1)
  if (S & (S - 1)) == 0:
    s_loc = jnp.bitwise_and(lane, S - 1)          # index within its image
  else:                                           # not exercised in the demo
    s_loc = lane % S
  if (W & (W - 1)) == 0:
    xx = jnp.bitwise_and(lane, W - 1)
  else:                                           # not exercised in the demo
    xx = lane % W

  img_mask = [((lane >= bi * S) & (lane < (bi + 1) * S)).astype(f32)
              for bi in range(B)]

  taps = []
  for dy in (-1, 0, 1):
    for dx in (-1, 0, 1):
      off = dy * W + dx
      shift = (-off) % BS                          # result[s] = x[s + off]
      ok = ((s_loc >= -dy * W) & (s_loc < (H - dy) * W) &
            (xx + dx >= 0) & (xx + dx < W))
      taps.append((shift, ok.astype(f32)))

  def conv_mxu(x, w_ref, b_ref):
    # im2col into an 8-row-aligned VMEM slab (one aligned store per tap), then
    # one bf16 MXU GEMM (Cout, 9*dim) @ (9*dim, B*S) covering both images.
    for t, (shift, m) in enumerate(taps):
      tap = x if shift == 0 else pltpu.roll(x, shift, 1) * m
      patch_ref[t * dim:(t + 1) * dim, :] = tap
    patch = patch_ref[...].astype(bf16)
    return jnp.dot(w_ref[...], patch, preferred_element_type=f32) + b_ref[...]

  def inorm(x, std_cols, mean_cols):
    # AdaptiveInstanceNorm2d: per-(image, channel) biased stats over spatial,
    # via masked lane reductions; applied as one fused x*A + B map.
    x2 = x * x
    a_map = None
    b_map = None
    for bi in range(B):
      mb = img_mask[bi]
      mu = jnp.sum(x * mb, axis=1, keepdims=True) * inv_S       # (C, 1)
      ex2 = jnp.sum(x2 * mb, axis=1, keepdims=True) * inv_S
      rstd = lax.rsqrt(ex2 - mu * mu + eps)
      scale = rstd * std_cols[:, bi:bi + 1]                     # (C, 1)
      offset = mean_cols[:, bi:bi + 1] - mu * scale
      a_b = scale * mb                                          # (C, B*S)
      b_b = offset * mb
      a_map = a_b if a_map is None else a_map + a_b
      b_map = b_b if b_map is None else b_map + b_b
    return x * a_map + b_map

  # -------------------------------- decoder ---------------------------------
  x = x_ref[...]                                  # (dim, B*S) f32
  mx = jnp.max(x, axis=0, keepdims=True)          # channel softmax (sublanes)
  e = jnp.exp(x - mx)
  x = e * pl.reciprocal(jnp.sum(e, axis=0, keepdims=True), approx=True)

  out = inorm(conv_mxu(x, cw1_ref, cb1_ref), std1, mean1)
  out = inorm(conv_mxu(out, cw2_ref, cb2_ref), std2, mean2)
  out = conv_mxu(out, cw3_ref, cb3_ref)           # (half, B*S)

  # bn3: training-mode batch stats over batch+spatial (= all lanes at once).
  mu = jnp.mean(out, axis=1, keepdims=True)
  var = jnp.mean((out - mu) ** 2, axis=1, keepdims=True)
  xb = (out - mu) * (lax.rsqrt(var + eps) * bng_ref[...]) + bnb_ref[...]

  # conv4 (Cout=1): VPU tap accumulation at (half, B*S), one sublane reduce.
  w4 = cw4_ref[...]                               # (half, 9), hoisted
  acc = None
  for t, (shift, m4) in enumerate(taps):
    r = xb if shift == 0 else pltpu.roll(xb, shift, 1) * m4
    term = r * w4[:, t:t + 1]
    acc = term if acc is None else acc + term
  y = jnp.sum(acc, axis=0, keepdims=True) + cb4_ref[...]        # (1, B*S)
  o_ref[...] = jnp.tanh(y)


# ------------------------------- host wrapper -------------------------------

def _conv_gemm_weight(w_hwio):
  # (3, 3, Cin, Cout) -> (Cout, 9*Cin) bf16, rows ordered tap-major, ci-minor
  # (matches the im2col slab order).
  kh, kw, cin, cout = w_hwio.shape
  return jnp.transpose(w_hwio.reshape(kh * kw * cin, cout)).astype(jnp.bfloat16)


def _col(v):
  return v.reshape(-1, 1).astype(jnp.float32)


def _row(v):
  return v.reshape(1, -1).astype(jnp.float32)


def ada_decoder_forward(params, a_nchw, z, meta_loss=None, meta_step_size=1e-3,
                        stop_gradient=False):
  del meta_loss, meta_step_size, stop_gradient   # plain path (meta_loss=None)
  B, dim, H, W = a_nchw.shape
  half = dim // 2
  S = H * W

  # Batch-merged lane-dense layout: channels on sublanes, [img0 | img1 | ...]
  # flattened spatial on lanes.
  a_merged = jnp.transpose(a_nchw.reshape(B, dim, S), (1, 0, 2)).reshape(dim, B * S)

  args = (
      a_merged, z.astype(jnp.float32),
      jnp.transpose(params['fc1_w']).astype(jnp.float32), _row(params['fc1_b']),
      jnp.transpose(params['fc2_w']).astype(jnp.bfloat16), _row(params['fc2_b']),
      params['fc3_w'].astype(jnp.bfloat16), _col(params['fc3_b']),
      _conv_gemm_weight(params['conv1_w']), _col(params['conv1_b']),
      _conv_gemm_weight(params['conv2_w']), _col(params['conv2_b']),
      _conv_gemm_weight(params['conv3_w']), _col(params['conv3_b']),
      jnp.transpose(params['conv4_w'].reshape(9, half)).astype(jnp.float32),
      _col(params['conv4_b']),
      _col(params['bn3_gamma']), _col(params['bn3_beta']),
  )

  kernel = functools.partial(_ada_decoder_kernel, B=B, H=H, W=W, dim=dim,
                             eps=1e-5)
  out = pl.pallas_call(
      kernel,
      out_shape=jax.ShapeDtypeStruct((1, B * S), jnp.float32),
      in_specs=[VMEM_SPEC] * len(args),
      out_specs=VMEM_SPEC,
      scratch_shapes=[pltpu.VMEM((9 * dim, B * S), jnp.float32)],
  )(*args)
  return out.reshape(B, 1, H, W)


# ---------------------------- params & reference ----------------------------

def init_params(key, dim, z_length, output_dim=1):
  """Deterministic synthetic init (shapes follow the PyTorch __init__)."""
  ks = jax.random.split(key, 14)
  half = dim // 2
  n_adain = 4 * dim  # 2*dim (adain1) + 2*dim (adain2)

  def conv_w(k, cin, cout):     # stored HWIO
    return 0.1 * jax.random.normal(k, (3, 3, cin, cout), jnp.float32)

  def lin_w(k, fin, fout):      # PyTorch nn.Linear layout: (out, in)
    return 0.1 * jax.random.normal(k, (fout, fin), jnp.float32)

  def bias(k, n):
    return 0.01 * jax.random.normal(k, (n,), jnp.float32)

  return dict(
      conv1_w=conv_w(ks[0], dim, dim), conv1_b=bias(ks[1], dim),
      conv2_w=conv_w(ks[2], dim, dim), conv2_b=bias(ks[3], dim),
      conv3_w=conv_w(ks[4], dim, half), conv3_b=bias(ks[5], half),
      conv4_w=conv_w(ks[6], half, output_dim), conv4_b=bias(ks[7], output_dim),
      bn3_gamma=jnp.ones((half,), jnp.float32),
      bn3_beta=jnp.zeros((half,), jnp.float32),
      fc1_w=lin_w(ks[8], z_length, 256), fc1_b=bias(ks[9], 256),
      fc2_w=lin_w(ks[10], 256, 256), fc2_b=bias(ks[11], 256),
      fc3_w=lin_w(ks[12], 256, n_adain), fc3_b=bias(ks[13], n_adain),
  )


def reference_forward(params, a, z):
  """Pure-JAX/XLA f32 reference mirroring the PyTorch forward (validation)."""
  B, dim, H, W = a.shape
  eps = 1e-5

  h = jnp.maximum(z @ params['fc1_w'].T + params['fc1_b'], 0.0)
  h = jnp.maximum(h @ params['fc2_w'].T + params['fc2_b'], 0.0)
  ap = jnp.maximum(h @ params['fc3_w'].T + params['fc3_b'], 0.0)  # (B, 4*dim)
  mean1, std1 = ap[:, 0 * dim:1 * dim], ap[:, 1 * dim:2 * dim]
  mean2, std2 = ap[:, 2 * dim:3 * dim], ap[:, 3 * dim:4 * dim]

  def conv(x, w_hwio, b):
    y = lax.conv_general_dilated(
        x, w_hwio, window_strides=(1, 1), padding='SAME',
        dimension_numbers=('NCHW', 'HWIO', 'NCHW'))
    return y + b[None, :, None, None]

  def adain(x, std, mean):
    mu = jnp.mean(x, axis=(2, 3), keepdims=True)
    var = jnp.mean((x - mu) ** 2, axis=(2, 3), keepdims=True)
    return (x - mu) / jnp.sqrt(var + eps) * std[:, :, None, None] + mean[:, :, None, None]

  x = jax.nn.softmax(a, axis=1)
  out = adain(conv(x, params['conv1_w'], params['conv1_b']), std1, mean1)
  out = adain(conv(out, params['conv2_w'], params['conv2_b']), std2, mean2)
  out = conv(out, params['conv3_w'], params['conv3_b'])
  mu = jnp.mean(out, axis=(0, 2, 3), keepdims=True)
  var = jnp.mean((out - mu) ** 2, axis=(0, 2, 3), keepdims=True)
  out = (out - mu) / jnp.sqrt(var + eps)
  out = out * params['bn3_gamma'][None, :, None, None] + params['bn3_beta'][None, :, None, None]
  return jnp.tanh(conv(out, params['conv4_w'], params['conv4_b']))


# ---------------------------------- main ------------------------------------

if __name__ == "__main__":
  anatomy_out_channels = 8   # Decoder dim
  z_length = 16              # style code length
  B, H, W = 2, 16, 16

  key = jax.random.PRNGKey(0)
  k_param, k_a, k_z = jax.random.split(key, 3)
  params = init_params(k_param, anatomy_out_channels, z_length)

  a = jax.random.normal(k_a, (B, anatomy_out_channels, H, W), jnp.float32)
  z = jax.random.normal(k_z, (B, z_length), jnp.float32)

  fwd = jax.jit(functools.partial(ada_decoder_forward, params))
  images_recon = jax.block_until_ready(fwd(a, z))

  assert images_recon.shape == (B, 1, H, W), images_recon.shape
  assert bool(jnp.all(jnp.isfinite(images_recon)))

  ref = reference_forward(params, a, z)
  err = float(jnp.max(jnp.abs(images_recon - ref)))
  # bf16 MXU operands (conv1-3 / fc2 / fc3) loosen parity vs the f32 reference.
  assert err < 3e-2, f"max abs error vs reference: {err}"

  print("KERNEL_OK")
</pallas_src>

<mosaic_0001>
module attributes {stable_mosaic.version = 11 : i64} {
  func.func @_ada_decoder_kernel(%arg0: memref<8x512xf32, #tpu.memory_space<vmem>>, %arg1: memref<2x16xf32, #tpu.memory_space<vmem>>, %arg2: memref<16x256xf32, #tpu.memory_space<vmem>>, %arg3: memref<1x256xf32, #tpu.memory_space<vmem>>, %arg4: memref<256x256xbf16, #tpu.memory_space<vmem>>, %arg5: memref<1x256xf32, #tpu.memory_space<vmem>>, %arg6: memref<32x256xbf16, #tpu.memory_space<vmem>>, %arg7: memref<32x1xf32, #tpu.memory_space<vmem>>, %arg8: memref<8x72xbf16, #tpu.memory_space<vmem>>, %arg9: memref<8x1xf32, #tpu.memory_space<vmem>>, %arg10: memref<8x72xbf16, #tpu.memory_space<vmem>>, %arg11: memref<8x1xf32, #tpu.memory_space<vmem>>, %arg12: memref<4x72xbf16, #tpu.memory_space<vmem>>, %arg13: memref<4x1xf32, #tpu.memory_space<vmem>>, %arg14: memref<4x9xf32, #tpu.memory_space<vmem>>, %arg15: memref<1x1xf32, #tpu.memory_space<vmem>>, %arg16: memref<4x1xf32, #tpu.memory_space<vmem>>, %arg17: memref<4x1xf32, #tpu.memory_space<vmem>>, %arg18: memref<1x512xf32, #tpu.memory_space<vmem>>, %arg19: memref<72x512xf32, #tpu.memory_space<vmem>>) attributes {dimension_semantics = [], scalar_prefetch = 0 : i64, scratch_operands = 1 : i64, tpu.core_type = #tpu.core_type<tc>} {
    %c0 = arith.constant 0 : index
    %c0_0 = arith.constant 0 : index
    %0 = vector.load %arg1[%c0, %c0_0] : memref<2x16xf32, #tpu.memory_space<vmem>>, vector<2x16xf32>
    %c0_1 = arith.constant 0 : index
    %c0_2 = arith.constant 0 : index
    %1 = vector.load %arg2[%c0_1, %c0_2] : memref<16x256xf32, #tpu.memory_space<vmem>>, vector<16x256xf32>
    %cst = arith.constant dense<0.000000e+00> : vector<2x256xf32>
    %2 = tpu.matmul %0, %1, %cst {dimension_numbers = #tpu.dot_dimension_numbers<[1], [0], [0], [1], [0, 0, 1, 1], [], []>} : vector<2x16xf32>, vector<16x256xf32>, vector<2x256xf32> -> vector<2x256xf32>
    %c0_3 = arith.constant 0 : index
    %c0_4 = arith.constant 0 : index
    %3 = vector.load %arg3[%c0_3, %c0_4] : memref<1x256xf32, #tpu.memory_space<vmem>>, vector<1x256xf32>
    %4 = vector.broadcast %3 : vector<1x256xf32> to vector<2x256xf32>
    %5 = arith.addf %2, %4 : vector<2x256xf32>
    %cst_5 = arith.constant 0.000000e+00 : f32
    %6 = vector.broadcast %cst_5 : f32 to vector<2x256xf32>
    %7 = arith.maximumf %5, %6 : vector<2x256xf32>
    %8 = arith.truncf %7 : vector<2x256xf32> to vector<2x256xbf16>
    %c0_6 = arith.constant 0 : index
    %c0_7 = arith.constant 0 : index
    %9 = vector.load %arg4[%c0_6, %c0_7] : memref<256x256xbf16, #tpu.memory_space<vmem>>, vector<256x256xbf16>
    %cst_8 = arith.constant dense<0.000000e+00> : vector<2x256xf32>
    %10 = tpu.matmul %8, %9, %cst_8 {dimension_numbers = #tpu.dot_dimension_numbers<[1], [0], [0], [1], [0, 0, 1, 1], [], []>} : vector<2x256xbf16>, vector<256x256xbf16>, vector<2x256xf32> -> vector<2x256xf32>
    %c0_9 = arith.constant 0 : index
    %c0_10 = arith.constant 0 : index
    %11 = vector.load %arg5[%c0_9, %c0_10] : memref<1x256xf32, #tpu.memory_space<vmem>>, vector<1x256xf32>
    %12 = vector.broadcast %11 : vector<1x256xf32> to vector<2x256xf32>
    %13 = arith.addf %10, %12 : vector<2x256xf32>
    %cst_11 = arith.constant 0.000000e+00 : f32
    %14 = vector.broadcast %cst_11 : f32 to vector<2x256xf32>
    %15 = arith.maximumf %13, %14 : vector<2x256xf32>
    %c0_12 = arith.constant 0 : index
    %c0_13 = arith.constant 0 : index
    %16 = vector.load %arg6[%c0_12, %c0_13] : memref<32x256xbf16, #tpu.memory_space<vmem>>, vector<32x256xbf16>
    %17 = arith.truncf %15 : vector<2x256xf32> to vector<2x256xbf16>
    %cst_14 = arith.constant dense<0.000000e+00> : vector<32x2xf32>
    %18 = tpu.matmul %16, %17, %cst_14 {dimension_numbers = #tpu.dot_dimension_numbers<[1], [1], [0], [0], [0, 0, 1, 0], [], []>} : vector<32x256xbf16>, vector<2x256xbf16>, vector<32x2xf32> -> vector<32x2xf32>
    %c0_15 = arith.constant 0 : index
    %c0_16 = arith.constant 0 : index
    %19 = vector.load %arg7[%c0_15, %c0_16] : memref<32x1xf32, #tpu.memory_space<vmem>>, vector<32x1xf32>
    %20 = vector.broadcast %19 : vector<32x1xf32> to vector<32x2xf32>
    %21 = arith.addf %18, %20 : vector<32x2xf32>
    %cst_17 = arith.constant 0.000000e+00 : f32
    %22 = vector.broadcast %cst_17 : f32 to vector<32x2xf32>
    %23 = arith.maximumf %21, %22 : vector<32x2xf32>
    %24 = vector.extract_strided_slice %23 {offsets = [0, 0], sizes = [8, 2], strides = [1, 1]} : vector<32x2xf32> to vector<8x2xf32>
    %25 = vector.extract_strided_slice %23 {offsets = [8, 0], sizes = [8, 2], strides = [1, 1]} : vector<32x2xf32> to vector<8x2xf32>
    %26 = vector.extract_strided_slice %23 {offsets = [16, 0], sizes = [8, 2], strides = [1, 1]} : vector<32x2xf32> to vector<8x2xf32>
    %27 = vector.extract_strided_slice %23 {offsets = [24, 0], sizes = [8, 2], strides = [1, 1]} : vector<32x2xf32> to vector<8x2xf32>
    %28 = tpu.iota {dimensions = array<i32: 1>} : vector<1x512xi32>
    %c255_i32 = arith.constant 255 : i32
    %29 = vector.broadcast %c255_i32 : i32 to vector<1x512xi32>
    %30 = arith.andi %28, %29 : vector<1x512xi32>
    %c15_i32 = arith.constant 15 : i32
    %31 = vector.broadcast %c15_i32 : i32 to vector<1x512xi32>
    %32 = arith.andi %28, %31 : vector<1x512xi32>
    %c0_i32 = arith.constant 0 : i32
    %33 = vector.broadcast %c0_i32 : i32 to vector<1x512xi32>
    %34 = arith.cmpi sge, %28, %33 : vector<1x512xi32>
    %c256_i32 = arith.constant 256 : i32
    %35 = vector.broadcast %c256_i32 : i32 to vector<1x512xi32>
    %36 = arith.cmpi slt, %28, %35 : vector<1x512xi32>
    %37 = arith.andi %34, %36 : vector<1x512xi1>
    %38 = arith.extui %37 : vector<1x512xi1> to vector<1x512xi32>
    %39 = arith.sitofp %38 : vector<1x512xi32> to vector<1x512xf32>
    %c256_i32_18 = arith.constant 256 : i32
    %40 = vector.broadcast %c256_i32_18 : i32 to vector<1x512xi32>
    %41 = arith.cmpi sge, %28, %40 : vector<1x512xi32>
    %c512_i32 = arith.constant 512 : i32
    %42 = vector.broadcast %c512_i32 : i32 to vector<1x512xi32>
    %43 = arith.cmpi slt, %28, %42 : vector<1x512xi32>
    %44 = arith.andi %41, %43 : vector<1x512xi1>
    %45 = arith.extui %44 : vector<1x512xi1> to vector<1x512xi32>
    %46 = arith.sitofp %45 : vector<1x512xi32> to vector<1x512xf32>
    %c16_i32 = arith.constant 16 : i32
    %47 = vector.broadcast %c16_i32 : i32 to vector<1x512xi32>
    %48 = arith.cmpi sge, %30, %47 : vector<1x512xi32>
    %c272_i32 = arith.constant 272 : i32
    %49 = vector.broadcast %c272_i32 : i32 to vector<1x512xi32>
    %50 = arith.cmpi slt, %30, %49 : vector<1x512xi32>
    %51 = arith.andi %48, %50 : vector<1x512xi1>
    %c-1_i32 = arith.constant -1 : i32
    %52 = vector.broadcast %c-1_i32 : i32 to vector<1x512xi32>
    %53 = arith.addi %32, %52 : vector<1x512xi32>
    %c0_i32_19 = arith.constant 0 : i32
    %54 = vector.broadcast %c0_i32_19 : i32 to vector<1x512xi32>
    %55 = arith.cmpi sge, %53, %54 : vector<1x512xi32>
    %56 = arith.andi %51, %55 : vector<1x512xi1>
    %c-1_i32_20 = arith.constant -1 : i32
    %57 = vector.broadcast %c-1_i32_20 : i32 to vector<1x512xi32>
    %58 = arith.addi %32, %57 : vector<1x512xi32>
    %c16_i32_21 = arith.constant 16 : i32
    %59 = vector.broadcast %c16_i32_21 : i32 to vector<1x512xi32>
    %60 = arith.cmpi slt, %58, %59 : vector<1x512xi32>
    %61 = arith.andi %56, %60 : vector<1x512xi1>
    %62 = arith.extui %61 : vector<1x512xi1> to vector<1x512xi32>
    %63 = arith.sitofp %62 : vector<1x512xi32> to vector<1x512xf32>
    %c16_i32_22 = arith.constant 16 : i32
    %64 = vector.broadcast %c16_i32_22 : i32 to vector<1x512xi32>
    %65 = arith.cmpi sge, %30, %64 : vector<1x512xi32>
    %c272_i32_23 = arith.constant 272 : i32
    %66 = vector.broadcast %c272_i32_23 : i32 to vector<1x512xi32>
    %67 = arith.cmpi slt, %30, %66 : vector<1x512xi32>
    %68 = arith.andi %65, %67 : vector<1x512xi1>
    %c0_i32_24 = arith.constant 0 : i32
    %69 = vector.broadcast %c0_i32_24 : i32 to vector<1x512xi32>
    %70 = arith.addi %32, %69 : vector<1x512xi32>
    %c0_i32_25 = arith.constant 0 : i32
    %71 = vector.broadcast %c0_i32_25 : i32 to vector<1x512xi32>
    %72 = arith.cmpi sge, %70, %71 : vector<1x512xi32>
    %73 = arith.andi %68, %72 : vector<1x512xi1>
    %c0_i32_26 = arith.constant 0 : i32
    %74 = vector.broadcast %c0_i32_26 : i32 to vector<1x512xi32>
    %75 = arith.addi %32, %74 : vector<1x512xi32>
    %c16_i32_27 = arith.constant 16 : i32
    %76 = vector.broadcast %c16_i32_27 : i32 to vector<1x512xi32>
    %77 = arith.cmpi slt, %75, %76 : vector<1x512xi32>
    %78 = arith.andi %73, %77 : vector<1x512xi1>
    %79 = arith.extui %78 : vector<1x512xi1> to vector<1x512xi32>
    %80 = arith.sitofp %79 : vector<1x512xi32> to vector<1x512xf32>
    %c16_i32_28 = arith.constant 16 : i32
    %81 = vector.broadcast %c16_i32_28 : i32 to vector<1x512xi32>
    %82 = arith.cmpi sge, %30, %81 : vector<1x512xi32>
    %c272_i32_29 = arith.constant 272 : i32
    %83 = vector.broadcast %c272_i32_29 : i32 to vector<1x512xi32>
    %84 = arith.cmpi slt, %30, %83 : vector<1x512xi32>
    %85 = arith.andi %82, %84 : vector<1x512xi1>
    %c1_i32 = arith.constant 1 : i32
    %86 = vector.broadcast %c1_i32 : i32 to vector<1x512xi32>
    %87 = arith.addi %32, %86 : vector<1x512xi32>
    %c0_i32_30 = arith.constant 0 : i32
    %88 = vector.broadcast %c0_i32_30 : i32 to vector<1x512xi32>
    %89 = arith.cmpi sge, %87, %88 : vector<1x512xi32>
    %90 = arith.andi %85, %89 : vector<1x512xi1>
    %c1_i32_31 = arith.constant 1 : i32
    %91 = vector.broadcast %c1_i32_31 : i32 to vector<1x512xi32>
    %92 = arith.addi %32, %91 : vector<1x512xi32>
    %c16_i32_32 = arith.constant 16 : i32
    %93 = vector.broadcast %c16_i32_32 : i32 to vector<1x512xi32>
    %94 = arith.cmpi slt, %92, %93 : vector<1x512xi32>
    %95 = arith.andi %90, %94 : vector<1x512xi1>
    %96 = arith.extui %95 : vector<1x512xi1> to vector<1x512xi32>
    %97 = arith.sitofp %96 : vector<1x512xi32> to vector<1x512xf32>
    %c0_i32_33 = arith.constant 0 : i32
    %98 = vector.broadcast %c0_i32_33 : i32 to vector<1x512xi32>
    %99 = arith.cmpi sge, %30, %98 : vector<1x512xi32>
    %c256_i32_34 = arith.constant 256 : i32
    %100 = vector.broadcast %c256_i32_34 : i32 to vector<1x512xi32>
    %101 = arith.cmpi slt, %30, %100 : vector<1x512xi32>
    %102 = arith.andi %99, %101 : vector<1x512xi1>
    %c-1_i32_35 = arith.constant -1 : i32
    %103 = vector.broadcast %c-1_i32_35 : i32 to vector<1x512xi32>
    %104 = arith.addi %32, %103 : vector<1x512xi32>
    %c0_i32_36 = arith.constant 0 : i32
    %105 = vector.broadcast %c0_i32_36 : i32 to vector<1x512xi32>
    %106 = arith.cmpi sge, %104, %105 : vector<1x512xi32>
    %107 = arith.andi %102, %106 : vector<1x512xi1>
    %c-1_i32_37 = arith.constant -1 : i32
    %108 = vector.broadcast %c-1_i32_37 : i32 to vector<1x512xi32>
    %109 = arith.addi %32, %108 : vector<1x512xi32>
    %c16_i32_38 = arith.constant 16 : i32
    %110 = vector.broadcast %c16_i32_38 : i32 to vector<1x512xi32>
    %111 = arith.cmpi slt, %109, %110 : vector<1x512xi32>
    %112 = arith.andi %107, %111 : vector<1x512xi1>
    %113 = arith.extui %112 : vector<1x512xi1> to vector<1x512xi32>
    %114 = arith.sitofp %113 : vector<1x512xi32> to vector<1x512xf32>
    %c0_i32_39 = arith.constant 0 : i32
    %115 = vector.broadcast %c0_i32_39 : i32 to vector<1x512xi32>
    %116 = arith.cmpi sge, %30, %115 : vector<1x512xi32>
    %c256_i32_40 = arith.constant 256 : i32
    %117 = vector.broadcast %c256_i32_40 : i32 to vector<1x512xi32>
    %118 = arith.cmpi slt, %30, %117 : vector<1x512xi32>
    %119 = arith.andi %116, %118 : vector<1x512xi1>
    %c1_i32_41 = arith.constant 1 : i32
    %120 = vector.broadcast %c1_i32_41 : i32 to vector<1x512xi32>
    %121 = arith.addi %32, %120 : vector<1x512xi32>
    %c0_i32_42 = arith.constant 0 : i32
    %122 = vector.broadcast %c0_i32_42 : i32 to vector<1x512xi32>
    %123 = arith.cmpi sge, %121, %122 : vector<1x512xi32>
    %124 = arith.andi %119, %123 : vector<1x512xi1>
    %c1_i32_43 = arith.constant 1 : i32
    %125 = vector.broadcast %c1_i32_43 : i32 to vector<1x512xi32>
    %126 = arith.addi %32, %125 : vector<1x512xi32>
    %c16_i32_44 = arith.constant 16 : i32
    %127 = vector.broadcast %c16_i32_44 : i32 to vector<1x512xi32>
    %128 = arith.cmpi slt, %126, %127 : vector<1x512xi32>
    %129 = arith.andi %124, %128 : vector<1x512xi1>
    %130 = arith.extui %129 : vector<1x512xi1> to vector<1x512xi32>
    %131 = arith.sitofp %130 : vector<1x512xi32> to vector<1x512xf32>
    %c-16_i32 = arith.constant -16 : i32
    %132 = vector.broadcast %c-16_i32 : i32 to vector<1x512xi32>
    %133 = arith.cmpi sge, %30, %132 : vector<1x512xi32>
    %c240_i32 = arith.constant 240 : i32
    %134 = vector.broadcast %c240_i32 : i32 to vector<1x512xi32>
    %135 = arith.cmpi slt, %30, %134 : vector<1x512xi32>
    %136 = arith.andi %133, %135 : vector<1x512xi1>
    %c-1_i32_45 = arith.constant -1 : i32
    %137 = vector.broadcast %c-1_i32_45 : i32 to vector<1x512xi32>
    %138 = arith.addi %32, %137 : vector<1x512xi32>
    %c0_i32_46 = arith.constant 0 : i32
    %139 = vector.broadcast %c0_i32_46 : i32 to vector<1x512xi32>
    %140 = arith.cmpi sge, %138, %139 : vector<1x512xi32>
    %141 = arith.andi %136, %140 : vector<1x512xi1>
    %c-1_i32_47 = arith.constant -1 : i32
    %142 = vector.broadcast %c-1_i32_47 : i32 to vector<1x512xi32>
    %143 = arith.addi %32, %142 : vector<1x512xi32>
    %c16_i32_48 = arith.constant 16 : i32
    %144 = vector.broadcast %c16_i32_48 : i32 to vector<1x512xi32>
    %145 = arith.cmpi slt, %143, %144 : vector<1x512xi32>
    %146 = arith.andi %141, %145 : vector<1x512xi1>
    %147 = arith.extui %146 : vector<1x512xi1> to vector<1x512xi32>
    %148 = arith.sitofp %147 : vector<1x512xi32> to vector<1x512xf32>
    %c-16_i32_49 = arith.constant -16 : i32
    %149 = vector.broadcast %c-16_i32_49 : i32 to vector<1x512xi32>
    %150 = arith.cmpi sge, %30, %149 : vector<1x512xi32>
    %c240_i32_50 = arith.constant 240 : i32
    %151 = vector.broadcast %c240_i32_50 : i32 to vector<1x512xi32>
    %152 = arith.cmpi slt, %30, %151 : vector<1x512xi32>
    %153 = arith.andi %150, %152 : vector<1x512xi1>
    %c0_i32_51 = arith.constant 0 : i32
    %154 = vector.broadcast %c0_i32_51 : i32 to vector<1x512xi32>
    %155 = arith.addi %32, %154 : vector<1x512xi32>
    %c0_i32_52 = arith.constant 0 : i32
    %156 = vector.broadcast %c0_i32_52 : i32 to vector<1x512xi32>
    %157 = arith.cmpi sge, %155, %156 : vector<1x512xi32>
    %158 = arith.andi %153, %157 : vector<1x512xi1>
    %c0_i32_53 = arith.constant 0 : i32
    %159 = vector.broadcast %c0_i32_53 : i32 to vector<1x512xi32>
    %160 = arith.addi %32, %159 : vector<1x512xi32>
    %c16_i32_54 = arith.constant 16 : i32
    %161 = vector.broadcast %c16_i32_54 : i32 to vector<1x512xi32>
    %162 = arith.cmpi slt, %160, %161 : vector<1x512xi32>
    %163 = arith.andi %158, %162 : vector<1x512xi1>
    %164 = arith.extui %163 : vector<1x512xi1> to vector<1x512xi32>
    %165 = arith.sitofp %164 : vector<1x512xi32> to vector<1x512xf32>
    %c-16_i32_55 = arith.constant -16 : i32
    %166 = vector.broadcast %c-16_i32_55 : i32 to vector<1x512xi32>
    %167 = arith.cmpi sge, %30, %166 : vector<1x512xi32>
    %c240_i32_56 = arith.constant 240 : i32
    %168 = vector.broadcast %c240_i32_56 : i32 to vector<1x512xi32>
    %169 = arith.cmpi slt, %30, %168 : vector<1x512xi32>
    %170 = arith.andi %167, %169 : vector<1x512xi1>
    %c1_i32_57 = arith.constant 1 : i32
    %171 = vector.broadcast %c1_i32_57 : i32 to vector<1x512xi32>
    %172 = arith.addi %32, %171 : vector<1x512xi32>
    %c0_i32_58 = arith.constant 0 : i32
    %173 = vector.broadcast %c0_i32_58 : i32 to vector<1x512xi32>
    %174 = arith.cmpi sge, %172, %173 : vector<1x512xi32>
    %175 = arith.andi %170, %174 : vector<1x512xi1>
    %c1_i32_59 = arith.constant 1 : i32
    %176 = vector.broadcast %c1_i32_59 : i32 to vector<1x512xi32>
    %177 = arith.addi %32, %176 : vector<1x512xi32>
    %c16_i32_60 = arith.constant 16 : i32
    %178 = vector.broadcast %c16_i32_60 : i32 to vector<1x512xi32>
    %179 = arith.cmpi slt, %177, %178 : vector<1x512xi32>
    %180 = arith.andi %175, %179 : vector<1x512xi1>
    %181 = arith.extui %180 : vector<1x512xi1> to vector<1x512xi32>
    %182 = arith.sitofp %181 : vector<1x512xi32> to vector<1x512xf32>
    %c0_61 = arith.constant 0 : index
    %c0_62 = arith.constant 0 : index
    %183 = vector.load %arg0[%c0_61, %c0_62] : memref<8x512xf32, #tpu.memory_space<vmem>>, vector<8x512xf32>
    %cst_63 = arith.constant dense<0xFF800000> : vector<512xf32>
    %184 = vector.multi_reduction <maximumf>, %183, %cst_63 [0] : vector<8x512xf32> to vector<512xf32>
    %185 = vector.shape_cast %184 : vector<512xf32> to vector<1x512xf32>
    %186 = vector.broadcast %185 : vector<1x512xf32> to vector<8x512xf32>
    %187 = arith.subf %183, %186 : vector<8x512xf32>
    %188 = math.exp %187 : vector<8x512xf32>
    %cst_64 = arith.constant dense<0.000000e+00> : vector<512xf32>
    %189 = vector.multi_reduction <add>, %188, %cst_64 [0] : vector<8x512xf32> to vector<512xf32>
    %190 = vector.shape_cast %189 : vector<512xf32> to vector<1x512xf32>
    %191 = tpu.reciprocal %190 {approx = true} : vector<1x512xf32> -> vector<1x512xf32>
    %192 = vector.broadcast %191 : vector<1x512xf32> to vector<8x512xf32>
    %193 = arith.mulf %188, %192 : vector<8x512xf32>
    %c17_i32 = arith.constant 17 : i32
    %194 = tpu.dynamic_rotate %193 by %c17_i32 dim 1 : vector<8x512xf32>, i32 -> vector<8x512xf32>
    %195 = vector.broadcast %63 : vector<1x512xf32> to vector<8x512xf32>
    %196 = arith.mulf %194, %195 : vector<8x512xf32>
    %c0_65 = arith.constant 0 : index
    %c0_66 = arith.constant 0 : index
    %197 = vector.load %arg19[%c0_65, %c0_66] : memref<72x512xf32, #tpu.memory_space<vmem>>, vector<8x512xf32>
    tpu.vector_store %arg19[%c0_65, %c0_66], %196 {strides = array<i32>} : memref<72x512xf32, #tpu.memory_space<vmem>>, vector<8x512xf32>,
    %c16_i32_67 = arith.constant 16 : i32
    %198 = tpu.dynamic_rotate %193 by %c16_i32_67 dim 1 : vector<8x512xf32>, i32 -> vector<8x512xf32>
    %199 = vector.broadcast %80 : vector<1x512xf32> to vector<8x512xf32>
    %200 = arith.mulf %198, %199 : vector<8x512xf32>
    %c8 = arith.constant 8 : index
    %c0_68 = arith.constant 0 : index
    %201 = vector.load %arg19[%c8, %c0_68] : memref<72x512xf32, #tpu.memory_space<vmem>>, vector<8x512xf32>
    tpu.vector_store %arg19[%c8, %c0_68], %200 {strides = array<i32>} : memref<72x512xf32, #tpu.memory_space<vmem>>, vector<8x512xf32>,
    %c15_i32_69 = arith.constant 15 : i32
    %202 = tpu.dynamic_rotate %193 by %c15_i32_69 dim 1 : vector<8x512xf32>, i32 -> vector<8x512xf32>
    %203 = vector.broadcast %97 : vector<1x512xf32> to vector<8x512xf32>
    %204 = arith.mulf %202, %203 : vector<8x512xf32>
    %c16 = arith.constant 16 : index
    %c0_70 = arith.constant 0 : index
    %205 = vector.load %arg19[%c16, %c0_70] : memref<72x512xf32, #tpu.memory_space<vmem>>, vector<8x512xf32>
    tpu.vector_store %arg19[%c16, %c0_70], %204 {strides = array<i32>} : memref<72x512xf32, #tpu.memory_space<vmem>>, vector<8x512xf32>,
    %c1_i32_71 = arith.constant 1 : i32
    %206 = tpu.dynamic_rotate %193 by %c1_i32_71 dim 1 : vector<8x512xf32>, i32 -> vector<8x512xf32>
    %207 = vector.broadcast %114 : vector<1x512xf32> to vector<8x512xf32>
    %208 = arith.mulf %206, %207 : vector<8x512xf32>
    %c24 = arith.constant 24 : index
    %c0_72 = arith.constant 0 : index
    %209 = vector.load %arg19[%c24, %c0_72] : memref<72x512xf32, #tpu.memory_space<vmem>>, vector<8x512xf32>
    tpu.vector_store %arg19[%c24, %c0_72], %208 {strides = array<i32>} : memref<72x512xf32, #tpu.memory_space<vmem>>, vector<8x512xf32>,
    %c32 = arith.constant 32 : index
    %c0_73 = arith.constant 0 : index
    %210 = vector.load %arg19[%c32, %c0_73] : memref<72x512xf32, #tpu.memory_space<vmem>>, vector<8x512xf32>
    tpu.vector_store %arg19[%c32, %c0_73], %193 {strides = array<i32>} : memref<72x512xf32, #tpu.memory_space<vmem>>, vector<8x512xf32>,
    %c511_i32 = arith.constant 511 : i32
    %211 = tpu.dynamic_rotate %193 by %c511_i32 dim 1 : vector<8x512xf32>, i32 -> vector<8x512xf32>
    %212 = vector.broadcast %131 : vector<1x512xf32> to vector<8x512xf32>
    %213 = arith.mulf %211, %212 : vector<8x512xf32>
    %c40 = arith.constant 40 : index
    %c0_74 = arith.constant 0 : index
    %214 = vector.load %arg19[%c40, %c0_74] : memref<72x512xf32, #tpu.memory_space<vmem>>, vector<8x512xf32>
    tpu.vector_store %arg19[%c40, %c0_74], %213 {strides = array<i32>} : memref<72x512xf32, #tpu.memory_space<vmem>>, vector<8x512xf32>,
    %c497_i32 = arith.constant 497 : i32
    %215 = tpu.dynamic_rotate %193 by %c497_i32 dim 1 : vector<8x512xf32>, i32 -> vector<8x512xf32>
    %216 = vector.broadcast %148 : vector<1x512xf32> to vector<8x512xf32>
    %217 = arith.mulf %215, %216 : vector<8x512xf32>
    %c48 = arith.constant 48 : index
    %c0_75 = arith.constant 0 : index
    %218 = vector.load %arg19[%c48, %c0_75] : memref<72x512xf32, #tpu.memory_space<vmem>>, vector<8x512xf32>
    tpu.vector_store %arg19[%c48, %c0_75], %217 {strides = array<i32>} : memref<72x512xf32, #tpu.memory_space<vmem>>, vector<8x512xf32>,
    %c496_i32 = arith.constant 496 : i32
    %219 = tpu.dynamic_rotate %193 by %c496_i32 dim 1 : vector<8x512xf32>, i32 -> vector<8x512xf32>
    %220 = vector.broadcast %165 : vector<1x512xf32> to vector<8x512xf32>
    %221 = arith.mulf %219, %220 : vector<8x512xf32>
    %c56 = arith.constant 56 : index
    %c0_76 = arith.constant 0 : index
    %222 = vector.load %arg19[%c56, %c0_76] : memref<72x512xf32, #tpu.memory_space<vmem>>, vector<8x512xf32>
    tpu.vector_store %arg19[%c56, %c0_76], %221 {strides = array<i32>} : memref<72x512xf32, #tpu.memory_space<vmem>>, vector<8x512xf32>,
    %c495_i32 = arith.constant 495 : i32
    %223 = tpu.dynamic_rotate %193 by %c495_i32 dim 1 : vector<8x512xf32>, i32 -> vector<8x512xf32>
    %224 = vector.broadcast %182 : vector<1x512xf32> to vector<8x512xf32>
    %225 = arith.mulf %223, %224 : vector<8x512xf32>
    %c64 = arith.constant 64 : index
    %c0_77 = arith.constant 0 : index
    %226 = vector.load %arg19[%c64, %c0_77] : memref<72x512xf32, #tpu.memory_space<vmem>>, vector<8x512xf32>
    tpu.vector_store %arg19[%c64, %c0_77], %225 {strides = array<i32>} : memref<72x512xf32, #tpu.memory_space<vmem>>, vector<8x512xf32>,
    %c0_78 = arith.constant 0 : index
    %c0_79 = arith.constant 0 : index
    %227 = vector.load %arg19[%c0_78, %c0_79] : memref<72x512xf32, #tpu.memory_space<vmem>>, vector<72x512xf32>
    %228 = arith.truncf %227 : vector<72x512xf32> to vector<72x512xbf16>
    %c0_80 = arith.constant 0 : index
    %c0_81 = arith.constant 0 : index
    %229 = vector.load %arg8[%c0_80, %c0_81] : memref<8x72xbf16, #tpu.memory_space<vmem>>, vector<8x72xbf16>
    %cst_82 = arith.constant dense<0.000000e+00> : vector<8x512xf32>
    %230 = tpu.matmul %229, %228, %cst_82 {dimension_numbers = #tpu.dot_dimension_numbers<[1], [0], [0], [1], [0, 0, 1, 1], [], []>} : vector<8x72xbf16>, vector<72x512xbf16>, vector<8x512xf32> -> vector<8x512xf32>
    %c0_83 = arith.constant 0 : index
    %c0_84 = arith.constant 0 : index
    %231 = vector.load %arg9[%c0_83, %c0_84] : memref<8x1xf32, #tpu.memory_space<vmem>>, vector<8x1xf32>
    %232 = vector.broadcast %231 : vector<8x1xf32> to vector<8x512xf32>
    %233 = arith.addf %230, %232 : vector<8x512xf32>
    %234 = arith.mulf %233, %233 : vector<8x512xf32>
    %235 = vector.broadcast %39 : vector<1x512xf32> to vector<8x512xf32>
    %236 = arith.mulf %233, %235 : vector<8x512xf32>
    %cst_85 = arith.constant dense<0.000000e+00> : vector<8xf32>
    %237 = vector.multi_reduction <add>, %236, %cst_85 [1] : vector<8x512xf32> to vector<8xf32>
    %238 = vector.shape_cast %237 : vector<8xf32> to vector<8x1xf32>
    %cst_86 = arith.constant 3.906250e-03 : f32
    %239 = vector.broadcast %cst_86 : f32 to vector<8x1xf32>
    %240 = arith.mulf %238, %239 : vector<8x1xf32>
    %241 = vector.broadcast %39 : vector<1x512xf32> to vector<8x512xf32>
    %242 = arith.mulf %234, %241 : vector<8x512xf32>
    %cst_87 = arith.constant dense<0.000000e+00> : vector<8xf32>
    %243 = vector.multi_reduction <add>, %242, %cst_87 [1] : vector<8x512xf32> to vector<8xf32>
    %244 = vector.shape_cast %243 : vector<8xf32> to vector<8x1xf32>
    %cst_88 = arith.constant 3.906250e-03 : f32
    %245 = vector.broadcast %cst_88 : f32 to vector<8x1xf32>
    %246 = arith.mulf %244, %245 : vector<8x1xf32>
    %247 = arith.mulf %240, %240 : vector<8x1xf32>
    %248 = arith.subf %246, %247 : vector<8x1xf32>
    %cst_89 = arith.constant 9.99999974E-6 : f32
    %249 = vector.broadcast %cst_89 : f32 to vector<8x1xf32>
    %250 = arith.addf %248, %249 : vector<8x1xf32>
    %251 = math.rsqrt %250 : vector<8x1xf32>
    %252 = vector.extract_strided_slice %25 {offsets = [0, 0], sizes = [8, 1], strides = [1, 1]} : vector<8x2xf32> to vector<8x1xf32>
    %253 = arith.mulf %251, %252 : vector<8x1xf32>
    %254 = vector.extract_strided_slice %24 {offsets = [0, 0], sizes = [8, 1], strides = [1, 1]} : vector<8x2xf32> to vector<8x1xf32>
    %255 = arith.mulf %240, %253 : vector<8x1xf32>
    %256 = arith.subf %254, %255 : vector<8x1xf32>
    %257 = vector.broadcast %253 : vector<8x1xf32> to vector<8x512xf32>
    %258 = vector.broadcast %39 : vector<1x512xf32> to vector<8x512xf32>
    %259 = arith.mulf %257, %258 : vector<8x512xf32>
    %260 = vector.broadcast %256 : vector<8x1xf32> to vector<8x512xf32>
    %261 = vector.broadcast %39 : vector<1x512xf32> to vector<8x512xf32>
    %262 = arith.mulf %260, %261 : vector<8x512xf32>
    %263 = vector.broadcast %46 : vector<1x512xf32> to vector<8x512xf32>
    %264 = arith.mulf %233, %263 : vector<8x512xf32>
    %cst_90 = arith.constant dense<0.000000e+00> : vector<8xf32>
    %265 = vector.multi_reduction <add>, %264, %cst_90 [1] : vector<8x512xf32> to vector<8xf32>
    %266 = vector.shape_cast %265 : vector<8xf32> to vector<8x1xf32>
    %cst_91 = arith.constant 3.906250e-03 : f32
    %267 = vector.broadcast %cst_91 : f32 to vector<8x1xf32>
    %268 = arith.mulf %266, %267 : vector<8x1xf32>
    %269 = vector.broadcast %46 : vector<1x512xf32> to vector<8x512xf32>
    %270 = arith.mulf %234, %269 : vector<8x512xf32>
    %cst_92 = arith.constant dense<0.000000e+00> : vector<8xf32>
    %271 = vector.multi_reduction <add>, %270, %cst_92 [1] : vector<8x512xf32> to vector<8xf32>
    %272 = vector.shape_cast %271 : vector<8xf32> to vector<8x1xf32>
    %cst_93 = arith.constant 3.906250e-03 : f32
    %273 = vector.broadcast %cst_93 : f32 to vector<8x1xf32>
    %274 = arith.mulf %272, %273 : vector<8x1xf32>
    %275 = arith.mulf %268, %268 : vector<8x1xf32>
    %276 = arith.subf %274, %275 : vector<8x1xf32>
    %cst_94 = arith.constant 9.99999974E-6 : f32
    %277 = vector.broadcast %cst_94 : f32 to vector<8x1xf32>
    %278 = arith.addf %276, %277 : vector<8x1xf32>
    %279 = math.rsqrt %278 : vector<8x1xf32>
    %280 = vector.extract_strided_slice %25 {offsets = [0, 1], sizes = [8, 1], strides = [1, 1]} : vector<8x2xf32> to vector<8x1xf32>
    %281 = arith.mulf %279, %280 : vector<8x1xf32>
    %282 = vector.extract_strided_slice %24 {offsets = [0, 1], sizes = [8, 1], strides = [1, 1]} : vector<8x2xf32> to vector<8x1xf32>
    %283 = arith.mulf %268, %281 : vector<8x1xf32>
    %284 = arith.subf %282, %283 : vector<8x1xf32>
    %285 = vector.broadcast %281 : vector<8x1xf32> to vector<8x512xf32>
    %286 = vector.broadcast %46 : vector<1x512xf32> to vector<8x512xf32>
    %287 = arith.mulf %285, %286 : vector<8x512xf32>
    %288 = vector.broadcast %284 : vector<8x1xf32> to vector<8x512xf32>
    %289 = vector.broadcast %46 : vector<1x512xf32> to vector<8x512xf32>
    %290 = arith.mulf %288, %289 : vector<8x512xf32>
    %291 = arith.addf %259, %287 : vector<8x512xf32>
    %292 = arith.addf %262, %290 : vector<8x512xf32>
    %293 = arith.mulf %233, %291 : vector<8x512xf32>
    %294 = arith.addf %293, %292 : vector<8x512xf32>
    %c17_i32_95 = arith.constant 17 : i32
    %295 = tpu.dynamic_rotate %294 by %c17_i32_95 dim 1 : vector<8x512xf32>, i32 -> vector<8x512xf32>
    %296 = vector.broadcast %63 : vector<1x512xf32> to vector<8x512xf32>
    %297 = arith.mulf %295, %296 : vector<8x512xf32>
    %c0_96 = arith.constant 0 : index
    %c0_97 = arith.constant 0 : index
    %298 = vector.load %arg19[%c0_96, %c0_97] : memref<72x512xf32, #tpu.memory_space<vmem>>, vector<8x512xf32>
    tpu.vector_store %arg19[%c0_96, %c0_97], %297 {strides = array<i32>} : memref<72x512xf32, #tpu.memory_space<vmem>>, vector<8x512xf32>,
    %c16_i32_98 = arith.constant 16 : i32
    %299 = tpu.dynamic_rotate %294 by %c16_i32_98 dim 1 : vector<8x512xf32>, i32 -> vector<8x512xf32>
    %300 = vector.broadcast %80 : vector<1x512xf32> to vector<8x512xf32>
    %301 = arith.mulf %299, %300 : vector<8x512xf32>
    %c8_99 = arith.constant 8 : index
    %c0_100 = arith.constant 0 : index
    %302 = vector.load %arg19[%c8_99, %c0_100] : memref<72x512xf32, #tpu.memory_space<vmem>>, vector<8x512xf32>
    tpu.vector_store %arg19[%c8_99, %c0_100], %301 {strides = array<i32>} : memref<72x512xf32, #tpu.memory_space<vmem>>, vector<8x512xf32>,
    %c15_i32_101 = arith.constant 15 : i32
    %303 = tpu.dynamic_rotate %294 by %c15_i32_101 dim 1 : vector<8x512xf32>, i32 -> vector<8x512xf32>
    %304 = vector.broadcast %97 : vector<1x512xf32> to vector<8x512xf32>
    %305 = arith.mulf %303, %304 : vector<8x512xf32>
    %c16_102 = arith.constant 16 : index
    %c0_103 = arith.constant 0 : index
    %306 = vector.load %arg19[%c16_102, %c0_103] : memref<72x512xf32, #tpu.memory_space<vmem>>, vector<8x512xf32>
    tpu.vector_store %arg19[%c16_102, %c0_103], %305 {strides = array<i32>} : memref<72x512xf32, #tpu.memory_space<vmem>>, vector<8x512xf32>,
    %c1_i32_104 = arith.constant 1 : i32
    %307 = tpu.dynamic_rotate %294 by %c1_i32_104 dim 1 : vector<8x512xf32>, i32 -> vector<8x512xf32>
    %308 = vector.broadcast %114 : vector<1x512xf32> to vector<8x512xf32>
    %309 = arith.mulf %307, %308 : vector<8x512xf32>
    %c24_105 = arith.constant 24 : index
    %c0_106 = arith.constant 0 : index
    %310 = vector.load %arg19[%c24_105, %c0_106] : memref<72x512xf32, #tpu.memory_space<vmem>>, vector<8x512xf32>
    tpu.vector_store %arg19[%c24_105, %c0_106], %309 {strides = array<i32>} : memref<72x512xf32, #tpu.memory_space<vmem>>, vector<8x512xf32>,
    %c32_107 = arith.constant 32 : index
    %c0_108 = arith.constant 0 : index
    %311 = vector.load %arg19[%c32_107, %c0_108] : memref<72x512xf32, #tpu.memory_space<vmem>>, vector<8x512xf32>
    tpu.vector_store %arg19[%c32_107, %c0_108], %294 {strides = array<i32>} : memref<72x512xf32, #tpu.memory_space<vmem>>, vector<8x512xf32>,
    %c511_i32_109 = arith.constant 511 : i32
    %312 = tpu.dynamic_rotate %294 by %c511_i32_109 dim 1 : vector<8x512xf32>, i32 -> vector<8x512xf32>
    %313 = vector.broadcast %131 : vector<1x512xf32> to vector<8x512xf32>
    %314 = arith.mulf %312, %313 : vector<8x512xf32>
    %c40_110 = arith.constant 40 : index
    %c0_111 = arith.constant 0 : index
    %315 = vector.load %arg19[%c40_110, %c0_111] : memref<72x512xf32, #tpu.memory_space<vmem>>, vector<8x512xf32>
    tpu.vector_store %arg19[%c40_110, %c0_111], %314 {strides = array<i32>} : memref<72x512xf32, #tpu.memory_space<vmem>>, vector<8x512xf32>,
    %c497_i32_112 = arith.constant 497 : i32
    %316 = tpu.dynamic_rotate %294 by %c497_i32_112 dim 1 : vector<8x512xf32>, i32 -> vector<8x512xf32>
    %317 = vector.broadcast %148 : vector<1x512xf32> to vector<8x512xf32>
    %318 = arith.mulf %316, %317 : vector<8x512xf32>
    %c48_113 = arith.constant 48 : index
    %c0_114 = arith.constant 0 : index
    %319 = vector.load %arg19[%c48_113, %c0_114] : memref<72x512xf32, #tpu.memory_space<vmem>>, vector<8x512xf32>
    tpu.vector_store %arg19[%c48_113, %c0_114], %318 {strides = array<i32>} : memref<72x512xf32, #tpu.memory_space<vmem>>, vector<8x512xf32>,
    %c496_i32_115 = arith.constant 496 : i32
    %320 = tpu.dynamic_rotate %294 by %c496_i32_115 dim 1 : vector<8x512xf32>, i32 -> vector<8x512xf32>
    %321 = vector.broadcast %165 : vector<1x512xf32> to vector<8x512xf32>
    %322 = arith.mulf %320, %321 : vector<8x512xf32>
    %c56_116 = arith.constant 56 : index
    %c0_117 = arith.constant 0 : index
    %323 = vector.load %arg19[%c56_116, %c0_117] : memref<72x512xf32, #tpu.memory_space<vmem>>, vector<8x512xf32>
    tpu.vector_store %arg19[%c56_116, %c0_117], %322 {strides = array<i32>} : memref<72x512xf32, #tpu.memory_space<vmem>>, vector<8x512xf32>,
    %c495_i32_118 = arith.constant 495 : i32
    %324 = tpu.dynamic_rotate %294 by %c495_i32_118 dim 1 : vector<8x512xf32>, i32 -> vector<8x512xf32>
    %325 = vector.broadcast %182 : vector<1x512xf32> to vector<8x512xf32>
    %326 = arith.mulf %324, %325 : vector<8x512xf32>
    %c64_119 = arith.constant 64 : index
    %c0_120 = arith.constant 0 : index
    %327 = vector.load %arg19[%c64_119, %c0_120] : memref<72x512xf32, #tpu.memory_space<vmem>>, vector<8x512xf32>
    tpu.vector_store %arg19[%c64_119, %c0_120], %326 {strides = array<i32>} : memref<72x512xf32, #tpu.memory_space<vmem>>, vector<8x512xf32>,
    %c0_121 = arith.constant 0 : index
    %c0_122 = arith.constant 0 : index
    %328 = vector.load %arg19[%c0_121, %c0_122] : memref<72x512xf32, #tpu.memory_space<vmem>>, vector<72x512xf32>
    %329 = arith.truncf %328 : vector<72x512xf32> to vector<72x512xbf16>
    %c0_123 = arith.constant 0 : index
    %c0_124 = arith.constant 0 : index
    %330 = vector.load %arg10[%c0_123, %c0_124] : memref<8x72xbf16, #tpu.memory_space<vmem>>, vector<8x72xbf16>
    %cst_125 = arith.constant dense<0.000000e+00> : vector<8x512xf32>
    %331 = tpu.matmul %330, %329, %cst_125 {dimension_numbers = #tpu.dot_dimension_numbers<[1], [0], [0], [1], [0, 0, 1, 1], [], []>} : vector<8x72xbf16>, vector<72x512xbf16>, vector<8x512xf32> -> vector<8x512xf32>
    %c0_126 = arith.constant 0 : index
    %c0_127 = arith.constant 0 : index
    %332 = vector.load %arg11[%c0_126, %c0_127] : memref<8x1xf32, #tpu.memory_space<vmem>>, vector<8x1xf32>
    %333 = vector.broadcast %332 : vector<8x1xf32> to vector<8x512xf32>
    %334 = arith.addf %331, %333 : vector<8x512xf32>
    %335 = arith.mulf %334, %334 : vector<8x512xf32>
    %336 = vector.broadcast %39 : vector<1x512xf32> to vector<8x512xf32>
    %337 = arith.mulf %334, %336 : vector<8x512xf32>
    %cst_128 = arith.constant dense<0.000000e+00> : vector<8xf32>
    %338 = vector.multi_reduction <add>, %337, %cst_128 [1] : vector<8x512xf32> to vector<8xf32>
    %339 = vector.shape_cast %338 : vector<8xf32> to vector<8x1xf32>
    %cst_129 = arith.constant 3.906250e-03 : f32
    %340 = vector.broadcast %cst_129 : f32 to vector<8x1xf32>
    %341 = arith.mulf %339, %340 : vector<8x1xf32>
    %342 = vector.broadcast %39 : vector<1x512xf32> to vector<8x512xf32>
    %343 = arith.mulf %335, %342 : vector<8x512xf32>
    %cst_130 = arith.constant dense<0.000000e+00> : vector<8xf32>
    %344 = vector.multi_reduction <add>, %343, %cst_130 [1] : vector<8x512xf32> to vector<8xf32>
    %345 = vector.shape_cast %344 : vector<8xf32> to vector<8x1xf32>
    %cst_131 = arith.constant 3.906250e-03 : f32
    %346 = vector.broadcast %cst_131 : f32 to vector<8x1xf32>
    %347 = arith.mulf %345, %346 : vector<8x1xf32>
    %348 = arith.mulf %341, %341 : vector<8x1xf32>
    %349 = arith.subf %347, %348 : vector<8x1xf32>
    %cst_132 = arith.constant 9.99999974E-6 : f32
    %350 = vector.broadcast %cst_132 : f32 to vector<8x1xf32>
    %351 = arith.addf %349, %350 : vector<8x1xf32>
    %352 = math.rsqrt %351 : vector<8x1xf32>
    %353 = vector.extract_strided_slice %27 {offsets = [0, 0], sizes = [8, 1], strides = [1, 1]} : vector<8x2xf32> to vector<8x1xf32>
    %354 = arith.mulf %352, %353 : vector<8x1xf32>
    %355 = vector.extract_strided_slice %26 {offsets = [0, 0], sizes = [8, 1], strides = [1, 1]} : vector<8x2xf32> to vector<8x1xf32>
    %356 = arith.mulf %341, %354 : vector<8x1xf32>
    %357 = arith.subf %355, %356 : vector<8x1xf32>
    %358 = vector.broadcast %354 : vector<8x1xf32> to vector<8x512xf32>
    %359 = vector.broadcast %39 : vector<1x512xf32> to vector<8x512xf32>
    %360 = arith.mulf %358, %359 : vector<8x512xf32>
    %361 = vector.broadcast %357 : vector<8x1xf32> to vector<8x512xf32>
    %362 = vector.broadcast %39 : vector<1x512xf32> to vector<8x512xf32>
    %363 = arith.mulf %361, %362 : vector<8x512xf32>
    %364 = vector.broadcast %46 : vector<1x512xf32> to vector<8x512xf32>
    %365 = arith.mulf %334, %364 : vector<8x512xf32>
    %cst_133 = arith.constant dense<0.000000e+00> : vector<8xf32>
    %366 = vector.multi_reduction <add>, %365, %cst_133 [1] : vector<8x512xf32> to vector<8xf32>
    %367 = vector.shape_cast %366 : vector<8xf32> to vector<8x1xf32>
    %cst_134 = arith.constant 3.906250e-03 : f32
    %368 = vector.broadcast %cst_134 : f32 to vector<8x1xf32>
    %369 = arith.mulf %367, %368 : vector<8x1xf32>
    %370 = vector.broadcast %46 : vector<1x512xf32> to vector<8x512xf32>
    %371 = arith.mulf %335, %370 : vector<8x512xf32>
    %cst_135 = arith.constant dense<0.000000e+00> : vector<8xf32>
    %372 = vector.multi_reduction <add>, %371, %cst_135 [1] : vector<8x512xf32> to vector<8xf32>
    %373 = vector.shape_cast %372 : vector<8xf32> to vector<8x1xf32>
    %cst_136 = arith.constant 3.906250e-03 : f32
    %374 = vector.broadcast %cst_136 : f32 to vector<8x1xf32>
    %375 = arith.mulf %373, %374 : vector<8x1xf32>
    %376 = arith.mulf %369, %369 : vector<8x1xf32>
    %377 = arith.subf %375, %376 : vector<8x1xf32>
    %cst_137 = arith.constant 9.99999974E-6 : f32
    %378 = vector.broadcast %cst_137 : f32 to vector<8x1xf32>
    %379 = arith.addf %377, %378 : vector<8x1xf32>
    %380 = math.rsqrt %379 : vector<8x1xf32>
    %381 = vector.extract_strided_slice %27 {offsets = [0, 1], sizes = [8, 1], strides = [1, 1]} : vector<8x2xf32> to vector<8x1xf32>
    %382 = arith.mulf %380, %381 : vector<8x1xf32>
    %383 = vector.extract_strided_slice %26 {offsets = [0, 1], sizes = [8, 1], strides = [1, 1]} : vector<8x2xf32> to vector<8x1xf32>
    %384 = arith.mulf %369, %382 : vector<8x1xf32>
    %385 = arith.subf %383, %384 : vector<8x1xf32>
    %386 = vector.broadcast %382 : vector<8x1xf32> to vector<8x512xf32>
    %387 = vector.broadcast %46 : vector<1x512xf32> to vector<8x512xf32>
    %388 = arith.mulf %386, %387 : vector<8x512xf32>
    %389 = vector.broadcast %385 : vector<8x1xf32> to vector<8x512xf32>
    %390 = vector.broadcast %46 : vector<1x512xf32> to vector<8x512xf32>
    %391 = arith.mulf %389, %390 : vector<8x512xf32>
    %392 = arith.addf %360, %388 : vector<8x512xf32>
    %393 = arith.addf %363, %391 : vector<8x512xf32>
    %394 = arith.mulf %334, %392 : vector<8x512xf32>
    %395 = arith.addf %394, %393 : vector<8x512xf32>
    %c17_i32_138 = arith.constant 17 : i32
    %396 = tpu.dynamic_rotate %395 by %c17_i32_138 dim 1 : vector<8x512xf32>, i32 -> vector<8x512xf32>
    %397 = vector.broadcast %63 : vector<1x512xf32> to vector<8x512xf32>
    %398 = arith.mulf %396, %397 : vector<8x512xf32>
    %c0_139 = arith.constant 0 : index
    %c0_140 = arith.constant 0 : index
    %399 = vector.load %arg19[%c0_139, %c0_140] : memref<72x512xf32, #tpu.memory_space<vmem>>, vector<8x512xf32>
    tpu.vector_store %arg19[%c0_139, %c0_140], %398 {strides = array<i32>} : memref<72x512xf32, #tpu.memory_space<vmem>>, vector<8x512xf32>,
    %c16_i32_141 = arith.constant 16 : i32
    %400 = tpu.dynamic_rotate %395 by %c16_i32_141 dim 1 : vector<8x512xf32>, i32 -> vector<8x512xf32>
    %401 = vector.broadcast %80 : vector<1x512xf32> to vector<8x512xf32>
    %402 = arith.mulf %400, %401 : vector<8x512xf32>
    %c8_142 = arith.constant 8 : index
    %c0_143 = arith.constant 0 : index
    %403 = vector.load %arg19[%c8_142, %c0_143] : memref<72x512xf32, #tpu.memory_space<vmem>>, vector<8x512xf32>
    tpu.vector_store %arg19[%c8_142, %c0_143], %402 {strides = array<i32>} : memref<72x512xf32, #tpu.memory_space<vmem>>, vector<8x512xf32>,
    %c15_i32_144 = arith.constant 15 : i32
    %404 = tpu.dynamic_rotate %395 by %c15_i32_144 dim 1 : vector<8x512xf32>, i32 -> vector<8x512xf32>
    %405 = vector.broadcast %97 : vector<1x512xf32> to vector<8x512xf32>
    %406 = arith.mulf %404, %405 : vector<8x512xf32>
    %c16_145 = arith.constant 16 : index
    %c0_146 = arith.constant 0 : index
    %407 = vector.load %arg19[%c16_145, %c0_146] : memref<72x512xf32, #tpu.memory_space<vmem>>, vector<8x512xf32>
    tpu.vector_store %arg19[%c16_145, %c0_146], %406 {strides = array<i32>} : memref<72x512xf32, #tpu.memory_space<vmem>>, vector<8x512xf32>,
    %c1_i32_147 = arith.constant 1 : i32
    %408 = tpu.dynamic_rotate %395 by %c1_i32_147 dim 1 : vector<8x512xf32>, i32 -> vector<8x512xf32>
    %409 = vector.broadcast %114 : vector<1x512xf32> to vector<8x512xf32>
    %410 = arith.mulf %408, %409 : vector<8x512xf32>
    %c24_148 = arith.constant 24 : index
    %c0_149 = arith.constant 0 : index
    %411 = vector.load %arg19[%c24_148, %c0_149] : memref<72x512xf32, #tpu.memory_space<vmem>>, vector<8x512xf32>
    tpu.vector_store %arg19[%c24_148, %c0_149], %410 {strides = array<i32>} : memref<72x512xf32, #tpu.memory_space<vmem>>, vector<8x512xf32>,
    %c32_150 = arith.constant 32 : index
    %c0_151 = arith.constant 0 : index
    %412 = vector.load %arg19[%c32_150, %c0_151] : memref<72x512xf32, #tpu.memory_space<vmem>>, vector<8x512xf32>
    tpu.vector_store %arg19[%c32_150, %c0_151], %395 {strides = array<i32>} : memref<72x512xf32, #tpu.memory_space<vmem>>, vector<8x512xf32>,
    %c511_i32_152 = arith.constant 511 : i32
    %413 = tpu.dynamic_rotate %395 by %c511_i32_152 dim 1 : vector<8x512xf32>, i32 -> vector<8x512xf32>
    %414 = vector.broadcast %131 : vector<1x512xf32> to vector<8x512xf32>
    %415 = arith.mulf %413, %414 : vector<8x512xf32>
    %c40_153 = arith.constant 40 : index
    %c0_154 = arith.constant 0 : index
    %416 = vector.load %arg19[%c40_153, %c0_154] : memref<72x512xf32, #tpu.memory_space<vmem>>, vector<8x512xf32>
    tpu.vector_store %arg19[%c40_153, %c0_154], %415 {strides = array<i32>} : memref<72x512xf32, #tpu.memory_space<vmem>>, vector<8x512xf32>,
    %c497_i32_155 = arith.constant 497 : i32
    %417 = tpu.dynamic_rotate %395 by %c497_i32_155 dim 1 : vector<8x512xf32>, i32 -> vector<8x512xf32>
    %418 = vector.broadcast %148 : vector<1x512xf32> to vector<8x512xf32>
    %419 = arith.mulf %417, %418 : vector<8x512xf32>
    %c48_156 = arith.constant 48 : index
    %c0_157 = arith.constant 0 : index
    %420 = vector.load %arg19[%c48_156, %c0_157] : memref<72x512xf32, #tpu.memory_space<vmem>>, vector<8x512xf32>
    tpu.vector_store %arg19[%c48_156, %c0_157], %419 {strides = array<i32>} : memref<72x512xf32, #tpu.memory_space<vmem>>, vector<8x512xf32>,
    %c496_i32_158 = arith.constant 496 : i32
    %421 = tpu.dynamic_rotate %395 by %c496_i32_158 dim 1 : vector<8x512xf32>, i32 -> vector<8x512xf32>
    %422 = vector.broadcast %165 : vector<1x512xf32> to vector<8x512xf32>
    %423 = arith.mulf %421, %422 : vector<8x512xf32>
    %c56_159 = arith.constant 56 : index
    %c0_160 = arith.constant 0 : index
    %424 = vector.load %arg19[%c56_159, %c0_160] : memref<72x512xf32, #tpu.memory_space<vmem>>, vector<8x512xf32>
    tpu.vector_store %arg19[%c56_159, %c0_160], %423 {strides = array<i32>} : memref<72x512xf32, #tpu.memory_space<vmem>>, vector<8x512xf32>,
    %c495_i32_161 = arith.constant 495 : i32
    %425 = tpu.dynamic_rotate %395 by %c495_i32_161 dim 1 : vector<8x512xf32>, i32 -> vector<8x512xf32>
    %426 = vector.broadcast %182 : vector<1x512xf32> to vector<8x512xf32>
    %427 = arith.mulf %425, %426 : vector<8x512xf32>
    %c64_162 = arith.constant 64 : index
    %c0_163 = arith.constant 0 : index
    %428 = vector.load %arg19[%c64_162, %c0_163] : memref<72x512xf32, #tpu.memory_space<vmem>>, vector<8x512xf32>
    tpu.vector_store %arg19[%c64_162, %c0_163], %427 {strides = array<i32>} : memref<72x512xf32, #tpu.memory_space<vmem>>, vector<8x512xf32>,
    %c0_164 = arith.constant 0 : index
    %c0_165 = arith.constant 0 : index
    %429 = vector.load %arg19[%c0_164, %c0_165] : memref<72x512xf32, #tpu.memory_space<vmem>>, vector<72x512xf32>
    %430 = arith.truncf %429 : vector<72x512xf32> to vector<72x512xbf16>
    %c0_166 = arith.constant 0 : index
    %c0_167 = arith.constant 0 : index
    %431 = vector.load %arg12[%c0_166, %c0_167] : memref<4x72xbf16, #tpu.memory_space<vmem>>, vector<4x72xbf16>
    %cst_168 = arith.constant dense<0.000000e+00> : vector<4x512xf32>
    %432 = tpu.matmul %431, %430, %cst_168 {dimension_numbers = #tpu.dot_dimension_numbers<[1], [0], [0], [1], [0, 0, 1, 1], [], []>} : vector<4x72xbf16>, vector<72x512xbf16>, vector<4x512xf32> -> vector<4x512xf32>
    %c0_169 = arith.constant 0 : index
    %c0_170 = arith.constant 0 : index
    %433 = vector.load %arg13[%c0_169, %c0_170] : memref<4x1xf32, #tpu.memory_space<vmem>>, vector<4x1xf32>
    %434 = vector.broadcast %433 : vector<4x1xf32> to vector<4x512xf32>
    %435 = arith.addf %432, %434 : vector<4x512xf32>
    %cst_171 = arith.constant dense<0.000000e+00> : vector<4xf32>
    %436 = vector.multi_reduction <add>, %435, %cst_171 [1] : vector<4x512xf32> to vector<4xf32>
    %437 = vector.shape_cast %436 : vector<4xf32> to vector<4x1xf32>
    %cst_172 = arith.constant 5.120000e+02 : f32
    %438 = vector.broadcast %cst_172 : f32 to vector<4x1xf32>
    %439 = arith.divf %437, %438 : vector<4x1xf32>
    %440 = vector.broadcast %439 : vector<4x1xf32> to vector<4x512xf32>
    %441 = arith.subf %435, %440 : vector<4x512xf32>
    %442 = arith.mulf %441, %441 : vector<4x512xf32>
    %cst_173 = arith.constant dense<0.000000e+00> : vector<4xf32>
    %443 = vector.multi_reduction <add>, %442, %cst_173 [1] : vector<4x512xf32> to vector<4xf32>
    %444 = vector.shape_cast %443 : vector<4xf32> to vector<4x1xf32>
    %cst_174 = arith.constant 5.120000e+02 : f32
    %445 = vector.broadcast %cst_174 : f32 to vector<4x1xf32>
    %446 = arith.divf %444, %445 : vector<4x1xf32>
    %447 = vector.broadcast %439 : vector<4x1xf32> to vector<4x512xf32>
    %448 = arith.subf %435, %447 : vector<4x512xf32>
    %cst_175 = arith.constant 9.99999974E-6 : f32
    %449 = vector.broadcast %cst_175 : f32 to vector<4x1xf32>
    %450 = arith.addf %446, %449 : vector<4x1xf32>
    %451 = math.rsqrt %450 : vector<4x1xf32>
    %c0_176 = arith.constant 0 : index
    %c0_177 = arith.constant 0 : index
    %452 = vector.load %arg16[%c0_176, %c0_177] : memref<4x1xf32, #tpu.memory_space<vmem>>, vector<4x1xf32>
    %453 = arith.mulf %451, %452 : vector<4x1xf32>
    %454 = vector.broadcast %453 : vector<4x1xf32> to vector<4x512xf32>
    %455 = arith.mulf %448, %454 : vector<4x512xf32>
    %c0_178 = arith.constant 0 : index
    %c0_179 = arith.constant 0 : index
    %456 = vector.load %arg17[%c0_178, %c0_179] : memref<4x1xf32, #tpu.memory_space<vmem>>, vector<4x1xf32>
    %457 = vector.broadcast %456 : vector<4x1xf32> to vector<4x512xf32>
    %458 = arith.addf %455, %457 : vector<4x512xf32>
    %c0_180 = arith.constant 0 : index
    %c0_181 = arith.constant 0 : index
    %459 = vector.load %arg14[%c0_180, %c0_181] : memref<4x9xf32, #tpu.memory_space<vmem>>, vector<4x9xf32>
    %c17_i32_182 = arith.constant 17 : i32
    %460 = tpu.dynamic_rotate %458 by %c17_i32_182 dim 1 : vector<4x512xf32>, i32 -> vector<4x512xf32>
    %461 = vector.broadcast %63 : vector<1x512xf32> to vector<4x512xf32>
    %462 = arith.mulf %460, %461 : vector<4x512xf32>
    %463 = vector.extract_strided_slice %459 {offsets = [0, 0], sizes = [4, 1], strides = [1, 1]} : vector<4x9xf32> to vector<4x1xf32>
    %464 = vector.broadcast %463 : vector<4x1xf32> to vector<4x512xf32>
    %465 = arith.mulf %462, %464 : vector<4x512xf32>
    %c16_i32_183 = arith.constant 16 : i32
    %466 = tpu.dynamic_rotate %458 by %c16_i32_183 dim 1 : vector<4x512xf32>, i32 -> vector<4x512xf32>
    %467 = vector.broadcast %80 : vector<1x512xf32> to vector<4x512xf32>
    %468 = arith.mulf %466, %467 : vector<4x512xf32>
    %469 = vector.extract_strided_slice %459 {offsets = [0, 1], sizes = [4, 1], strides = [1, 1]} : vector<4x9xf32> to vector<4x1xf32>
    %470 = vector.broadcast %469 : vector<4x1xf32> to vector<4x512xf32>
    %471 = arith.mulf %468, %470 : vector<4x512xf32>
    %472 = arith.addf %465, %471 : vector<4x512xf32>
    %c15_i32_184 = arith.constant 15 : i32
    %473 = tpu.dynamic_rotate %458 by %c15_i32_184 dim 1 : vector<4x512xf32>, i32 -> vector<4x512xf32>
    %474 = vector.broadcast %97 : vector<1x512xf32> to vector<4x512xf32>
    %475 = arith.mulf %473, %474 : vector<4x512xf32>
    %476 = vector.extract_strided_slice %459 {offsets = [0, 2], sizes = [4, 1], strides = [1, 1]} : vector<4x9xf32> to vector<4x1xf32>
    %477 = vector.broadcast %476 : vector<4x1xf32> to vector<4x512xf32>
    %478 = arith.mulf %475, %477 : vector<4x512xf32>
    %479 = arith.addf %472, %478 : vector<4x512xf32>
    %c1_i32_185 = arith.constant 1 : i32
    %480 = tpu.dynamic_rotate %458 by %c1_i32_185 dim 1 : vector<4x512xf32>, i32 -> vector<4x512xf32>
    %481 = vector.broadcast %114 : vector<1x512xf32> to vector<4x512xf32>
    %482 = arith.mulf %480, %481 : vector<4x512xf32>
    %483 = vector.extract_strided_slice %459 {offsets = [0, 3], sizes = [4, 1], strides = [1, 1]} : vector<4x9xf32> to vector<4x1xf32>
    %484 = vector.broadcast %483 : vector<4x1xf32> to vector<4x512xf32>
    %485 = arith.mulf %482, %484 : vector<4x512xf32>
    %486 = arith.addf %479, %485 : vector<4x512xf32>
    %487 = vector.extract_strided_slice %459 {offsets = [0, 4], sizes = [4, 1], strides = [1, 1]} : vector<4x9xf32> to vector<4x1xf32>
    %488 = vector.broadcast %487 : vector<4x1xf32> to vector<4x512xf32>
    %489 = arith.mulf %458, %488 : vector<4x512xf32>
    %490 = arith.addf %486, %489 : vector<4x512xf32>
    %c511_i32_186 = arith.constant 511 : i32
    %491 = tpu.dynamic_rotate %458 by %c511_i32_186 dim 1 : vector<4x512xf32>, i32 -> vector<4x512xf32>
    %492 = vector.broadcast %131 : vector<1x512xf32> to vector<4x512xf32>
    %493 = arith.mulf %491, %492 : vector<4x512xf32>
    %494 = vector.extract_strided_slice %459 {offsets = [0, 5], sizes = [4, 1], strides = [1, 1]} : vector<4x9xf32> to vector<4x1xf32>
    %495 = vector.broadcast %494 : vector<4x1xf32> to vector<4x512xf32>
    %496 = arith.mulf %493, %495 : vector<4x512xf32>
    %497 = arith.addf %490, %496 : vector<4x512xf32>
    %c497_i32_187 = arith.constant 497 : i32
    %498 = tpu.dynamic_rotate %458 by %c497_i32_187 dim 1 : vector<4x512xf32>, i32 -> vector<4x512xf32>
    %499 = vector.broadcast %148 : vector<1x512xf32> to vector<4x512xf32>
    %500 = arith.mulf %498, %499 : vector<4x512xf32>
    %501 = vector.extract_strided_slice %459 {offsets = [0, 6], sizes = [4, 1], strides = [1, 1]} : vector<4x9xf32> to vector<4x1xf32>
    %502 = vector.broadcast %501 : vector<4x1xf32> to vector<4x512xf32>
    %503 = arith.mulf %500, %502 : vector<4x512xf32>
    %504 = arith.addf %497, %503 : vector<4x512xf32>
    %c496_i32_188 = arith.constant 496 : i32
    %505 = tpu.dynamic_rotate %458 by %c496_i32_188 dim 1 : vector<4x512xf32>, i32 -> vector<4x512xf32>
    %506 = vector.broadcast %165 : vector<1x512xf32> to vector<4x512xf32>
    %507 = arith.mulf %505, %506 : vector<4x512xf32>
    %508 = vector.extract_strided_slice %459 {offsets = [0, 7], sizes = [4, 1], strides = [1, 1]} : vector<4x9xf32> to vector<4x1xf32>
    %509 = vector.broadcast %508 : vector<4x1xf32> to vector<4x512xf32>
    %510 = arith.mulf %507, %509 : vector<4x512xf32>
    %511 = arith.addf %504, %510 : vector<4x512xf32>
    %c495_i32_189 = arith.constant 495 : i32
    %512 = tpu.dynamic_rotate %458 by %c495_i32_189 dim 1 : vector<4x512xf32>, i32 -> vector<4x512xf32>
    %513 = vector.broadcast %182 : vector<1x512xf32> to vector<4x512xf32>
    %514 = arith.mulf %512, %513 : vector<4x512xf32>
    %515 = vector.extract_strided_slice %459 {offsets = [0, 8], sizes = [4, 1], strides = [1, 1]} : vector<4x9xf32> to vector<4x1xf32>
    %516 = vector.broadcast %515 : vector<4x1xf32> to vector<4x512xf32>
    %517 = arith.mulf %514, %516 : vector<4x512xf32>
    %518 = arith.addf %511, %517 : vector<4x512xf32>
    %cst_190 = arith.constant dense<0.000000e+00> : vector<512xf32>
    %519 = vector.multi_reduction <add>, %518, %cst_190 [0] : vector<4x512xf32> to vector<512xf32>
    %520 = vector.shape_cast %519 : vector<512xf32> to vector<1x512xf32>
    %c0_191 = arith.constant 0 : index
    %c0_192 = arith.constant 0 : index
    %521 = vector.load %arg15[%c0_191, %c0_192] : memref<1x1xf32, #tpu.memory_space<vmem>>, vector<1x1xf32>
    %522 = vector.broadcast %521 : vector<1x1xf32> to vector<1x512xf32>
    %523 = arith.addf %520, %522 : vector<1x512xf32>
    %524 = math.tanh %523 : vector<1x512xf32>
    %c0_193 = arith.constant 0 : index
    %c0_194 = arith.constant 0 : index
    %525 = vector.load %arg18[%c0_193, %c0_194] : memref<1x512xf32, #tpu.memory_space<vmem>>, vector<1x512xf32>
    tpu.vector_store %arg18[%c0_193, %c0_194], %524 {strides = array<i32>} : memref<1x512xf32, #tpu.memory_space<vmem>>, vector<1x512xf32>,
    return
  }
}

</mosaic_0001>

<llo_original>
// kernel: ada_decoder_forward.1
$region0: #{ada_decoder_forward.1}
  #allocation0 [shape = 'u32[]', space=smem, size = 0x4, offset = 0x4, fixed_abs, tag = 'smem constant byte address 0x4 - core index']
  #allocation1 [shape = 'u32[144,128]{1,0:T(1,128)}', space=vmem, size = 0x12000, scoped, tag = 'internal scratch']
  #allocation2 [shape = 'f32[72,512]{1,0:T(8,128)}', space=vmem, size = 0x24000, scoped, tag = 'scratch operand']
  #allocation3 [shape = 'f32[1,1]{1,0:T(1,128)S(1)}', space=vmem, size = 0x200, scoped, tag = 'scoped memory for ada_decoder_forward.1']
  %s0 = inlined_call_operand.vmem [shape: f32[8,512], index: 0, kind: input, shape index: {}]
  %s1 = inlined_call_operand.hbm [shape: f32[2,16], index: 1, kind: input, shape index: {}]
  %s2 = inlined_call_operand.hbm [shape: f32[16,256], index: 2, kind: input, shape index: {}]
  %s3 = inlined_call_operand.hbm [shape: f32[1,256], index: 3, kind: input, shape index: {}]
  %s4 = inlined_call_operand.vmem [shape: bf16[256,256], index: 4, kind: input, shape index: {}]
  %s5 = inlined_call_operand.hbm [shape: f32[1,256], index: 5, kind: input, shape index: {}]
  %s6 = inlined_call_operand.hbm [shape: bf16[32,256], index: 6, kind: input, shape index: {}]
  %s7 = inlined_call_operand.vmem [shape: f32[32,1], index: 7, kind: input, shape index: {}]
  %s8 = inlined_call_operand.hbm [shape: bf16[8,72], index: 8, kind: input, shape index: {}]
  %s9 = inlined_call_operand.vmem [shape: f32[8,1], index: 9, kind: input, shape index: {}]
  %s10 = inlined_call_operand.vmem [shape: bf16[8,72], index: 10, kind: input, shape index: {}]
  %s11 = inlined_call_operand.vmem [shape: f32[8,1], index: 11, kind: input, shape index: {}]
  %s12 = inlined_call_operand.vmem [shape: bf16[4,72], index: 12, kind: input, shape index: {}]
  %s13 = inlined_call_operand.vmem [shape: f32[4,1], index: 13, kind: input, shape index: {}]
  %s14 = inlined_call_operand.vmem [shape: f32[4,9], index: 14, kind: input, shape index: {}]
  %s15 = inlined_call_operand.<no memory space> [shape: f32[1,1], index: 15, kind: input, shape index: {}]
  %s16 = inlined_call_operand.vmem [shape: f32[4,1], index: 16, kind: input, shape index: {}]
  %s17 = inlined_call_operand.vmem [shape: f32[4,1], index: 17, kind: input, shape index: {}]
  %s18 = inlined_call_operand.vmem [shape: f32[1,512], index: 18, kind: output, shape index: {}]
  %s19 = sld [smem:[#allocation0]]
  $region106: #{ada_decoder_forward.1} parent=0
    _
  %s21 = ssub.s32 1, %s19
  %s22 = scalar_select 0, %s21, %s19
  %v23 = vstv %s15
  %24 = vst [vmem:[#allocation3] sm:$0x1] %v23
  $region1: #{ada_decoder_forward.1} parent=0
    #allocation4 [shape = 'u8[1024]{0}', space=vmem, size = 0x400, scoped, tag = 'input window, operand 1, single buffered']
    #allocation5 [shape = 's32[1]{0}', space=sflag, size = 0x4, scoped, tag = 'scoped memory for ada_decoder_forward.1']
    #allocation6 [shape = 'u8[16384]{0}', space=vmem, size = 0x4000, scoped, tag = 'input window, operand 2, single buffered']
    #allocation7 [shape = 's32[1]{0}', space=sflag, size = 0x4, scoped, tag = 'scoped memory for ada_decoder_forward.1']
    #allocation8 [shape = 'u8[1024]{0}', space=vmem, size = 0x400, scoped, tag = 'input window, operand 3, single buffered']
    #allocation9 [shape = 'u8[1024]{0}', space=vmem, size = 0x400, scoped, tag = 'input window, operand 5, single buffered']
    #allocation10 [shape = 's32[1]{0}', space=sflag, size = 0x4, scoped, tag = 'scoped memory for ada_decoder_forward.1']
    #allocation11 [shape = 'u8[16384]{0}', space=vmem, size = 0x4000, scoped, tag = 'input window, operand 6, single buffered']
    #allocation12 [shape = 'u8[2048]{0}', space=vmem, size = 0x800, scoped, tag = 'input window, operand 8, single buffered']
    #allocation13 [shape = 's32[1]{0}', space=sflag, size = 0x4, scoped, tag = 'scoped memory for ada_decoder_forward.1']
    %25 = vsyncpa [#allocation5], 0
    %26 = vsyncpa [#allocation7], 0
    %27 = vsyncpa [#allocation10], 0
    %28 = vsyncpa [#allocation13], 0
    // Predicated region
    $region2: #{ada_decoder_forward.1} parent=1 // pred_check
      _
    $region3: #{ada_decoder_forward.1} parent=1 // pred_check_branch
      %30 = sbr.rel (0) target = $region5
    $region4: #{ada_decoder_forward.1} parent=1 // pred_region
      _
    $region5: #{ada_decoder_forward.1} parent=1 // pred_fallthru
      _
    // Predicated region
    $region6: #{ada_decoder_forward.1} parent=1 // pred_check
      _
    $region7: #{ada_decoder_forward.1} parent=1 // pred_check_branch
      %32 = sbr.rel (0) target = $region9
    $region8: #{ada_decoder_forward.1} parent=1 // pred_region
      %s34 = ssub.s32 32, 32
      %35 = vsyncadd [#allocation5], %s34
      %s37 = sshll.u32 [#allocation4], 4
      %s38 = int_to_ptr.vmem [resolvable:$true] %s37
      %40 = dma.hbm_to_vmem [thread:$0]  %s1, 32, %s38, [#allocation5]
    $region9: #{ada_decoder_forward.1} parent=1 // pred_fallthru
      _
    // Predicated region
    $region10: #{ada_decoder_forward.1} parent=1 // pred_check
      _
    $region11: #{ada_decoder_forward.1} parent=1 // pred_check_branch
      %42 = sbr.rel (0) target = $region13
    $region12: #{ada_decoder_forward.1} parent=1 // pred_region
      %s44 = ssub.s32 512, 512
      %45 = vsyncadd [#allocation7], %s44
      %s46 = sshll.u32 [#allocation6], 4
      %s47 = int_to_ptr.vmem [resolvable:$true] %s46
      %52 = dma.hbm_to_vmem [thread:$0]  %s2, 512, %s47, [#allocation7], 256, 256, 16
    $region13: #{ada_decoder_forward.1} parent=1 // pred_fallthru
      _
    // Predicated region
    $region14: #{ada_decoder_forward.1} parent=1 // pred_check
      _
    $region15: #{ada_decoder_forward.1} parent=1 // pred_check_branch
      %54 = sbr.rel (0) target = $region17
    $region16: #{ada_decoder_forward.1} parent=1 // pred_region
      %s56 = ssub.s32 32, 32
      %57 = vsyncadd [#allocation7], %s56
      %s59 = sshll.u32 [#allocation8], 4
      %s60 = int_to_ptr.vmem [resolvable:$true] %s59
      %62 = dma.hbm_to_vmem [thread:$0]  %s3, 32, %s60, [#allocation7]
    $region17: #{ada_decoder_forward.1} parent=1 // pred_fallthru
      _
    // Predicated region
    $region18: #{ada_decoder_forward.1} parent=1 // pred_check
      _
    $region19: #{ada_decoder_forward.1} parent=1 // pred_check_branch
      %64 = sbr.rel (0) target = $region21
    $region20: #{ada_decoder_forward.1} parent=1 // pred_region
      _
    $region21: #{ada_decoder_forward.1} parent=1 // pred_fallthru
      _
    // Predicated region
    $region22: #{ada_decoder_forward.1} parent=1 // pred_check
      _
    $region23: #{ada_decoder_forward.1} parent=1 // pred_check_branch
      %66 = sbr.rel (0) target = $region25
    $region24: #{ada_decoder_forward.1} parent=1 // pred_region
      %s68 = ssub.s32 32, 32
      %69 = vsyncadd [#allocation10], %s68
      %s71 = sshll.u32 [#allocation9], 4
      %s72 = int_to_ptr.vmem [resolvable:$true] %s71
      %74 = dma.hbm_to_vmem [thread:$0]  %s5, 32, %s72, [#allocation10]
    $region25: #{ada_decoder_forward.1} parent=1 // pred_fallthru
      _
    // Predicated region
    $region26: #{ada_decoder_forward.1} parent=1 // pred_check
      _
    $region27: #{ada_decoder_forward.1} parent=1 // pred_check_branch
      %76 = sbr.rel (0) target = $region29
    $region28: #{ada_decoder_forward.1} parent=1 // pred_region
      %s78 = ssub.s32 512, 512
      %79 = vsyncadd [#allocation10], %s78
      %s80 = sshll.u32 [#allocation11], 4
      %s81 = int_to_ptr.vmem [resolvable:$true] %s80
      %86 = dma.hbm_to_vmem [thread:$0]  %s6, 512, %s81, [#allocation10], 128, 128, 8
    $region29: #{ada_decoder_forward.1} parent=1 // pred_fallthru
      _
    // Predicated region
    $region30: #{ada_decoder_forward.1} parent=1 // pred_check
      _
    $region31: #{ada_decoder_forward.1} parent=1 // pred_check_branch
      %88 = sbr.rel (0) target = $region33
    $region32: #{ada_decoder_forward.1} parent=1 // pred_region
      _
    $region33: #{ada_decoder_forward.1} parent=1 // pred_fallthru
      _
    // Predicated region
    $region34: #{ada_decoder_forward.1} parent=1 // pred_check
      _
    $region35: #{ada_decoder_forward.1} parent=1 // pred_check_branch
      %90 = sbr.rel (0) target = $region37
    $region36: #{ada_decoder_forward.1} parent=1 // pred_region
      %s92 = ssub.s32 64, 64
      %93 = vsyncadd [#allocation13], %s92
      %s95 = sshll.u32 [#allocation12], 4
      %s96 = int_to_ptr.vmem [resolvable:$true] %s95
      %98 = dma.hbm_to_vmem [thread:$0]  %s8, 64, %s96, [#allocation13]
    $region37: #{ada_decoder_forward.1} parent=1 // pred_fallthru
      _
    // Predicated region
    $region38: #{ada_decoder_forward.1} parent=1 // pred_check
      _
    $region39: #{ada_decoder_forward.1} parent=1 // pred_check_branch
      %100 = sbr.rel (0) target = $region41
    $region40: #{ada_decoder_forward.1} parent=1 // pred_region
      _
    $region41: #{ada_decoder_forward.1} parent=1 // pred_fallthru
      _
    // Predicated region
    $region42: #{ada_decoder_forward.1} parent=1 // pred_check
      _
    $region43: #{ada_decoder_forward.1} parent=1 // pred_check_branch
      %102 = sbr.rel (0) target = $region45
    $region44: #{ada_decoder_forward.1} parent=1 // pred_region
      _
    $region45: #{ada_decoder_forward.1} parent=1 // pred_fallthru
      _
    // Predicated region
    $region46: #{ada_decoder_forward.1} parent=1 // pred_check
      _
    $region47: #{ada_decoder_forward.1} parent=1 // pred_check_branch
      %104 = sbr.rel (0) target = $region49
    $region48: #{ada_decoder_forward.1} parent=1 // pred_region
      _
    $region49: #{ada_decoder_forward.1} parent=1 // pred_fallthru
      _
    // Predicated region
    $region50: #{ada_decoder_forward.1} parent=1 // pred_check
      _
    $region51: #{ada_decoder_forward.1} parent=1 // pred_check_branch
      %106 = sbr.rel (0) target = $region53
    $region52: #{ada_decoder_forward.1} parent=1 // pred_region
      _
    $region53: #{ada_decoder_forward.1} parent=1 // pred_fallthru
      _
    // Predicated region
    $region54: #{ada_decoder_forward.1} parent=1 // pred_check
      _
    $region55: #{ada_decoder_forward.1} parent=1 // pred_check_branch
      %108 = sbr.rel (0) target = $region57
    $region56: #{ada_decoder_forward.1} parent=1 // pred_region
      _
    $region57: #{ada_decoder_forward.1} parent=1 // pred_fallthru
      _
    // Predicated region
    $region58: #{ada_decoder_forward.1} parent=1 // pred_check
      _
    $region59: #{ada_decoder_forward.1} parent=1 // pred_check_branch
      %110 = sbr.rel (0) target = $region61
    $region60: #{ada_decoder_forward.1} parent=1 // pred_region
      _
    $region61: #{ada_decoder_forward.1} parent=1 // pred_fallthru
      _
    // Predicated region
    $region62: #{ada_decoder_forward.1} parent=1 // pred_check
      _
    $region63: #{ada_decoder_forward.1} parent=1 // pred_check_branch
      %112 = sbr.rel (0) target = $region65
    $region64: #{ada_decoder_forward.1} parent=1 // pred_region
      _
    $region65: #{ada_decoder_forward.1} parent=1 // pred_fallthru
      _
    // Predicated region
    $region66: #{ada_decoder_forward.1} parent=1 // pred_check
      _
    $region67: #{ada_decoder_forward.1} parent=1 // pred_check_branch
      %114 = sbr.rel (0) target = $region69
    $region68: #{ada_decoder_forward.1} parent=1 // pred_region
      _
    $region69: #{ada_decoder_forward.1} parent=1 // pred_fallthru
      _
    // Predicated region
    $region70: #{ada_decoder_forward.1} parent=1 // pred_check
      _
    $region71: #{ada_decoder_forward.1} parent=1 // pred_check_branch
      %116 = sbr.rel (0) target = $region73
    $region72: #{ada_decoder_forward.1} parent=1 // pred_region
      _
    $region73: #{ada_decoder_forward.1} parent=1 // pred_fallthru
      _
    // Predicated region
    $region74: #{ada_decoder_forward.1} parent=1 // pred_check
      _
    $region75: #{ada_decoder_forward.1} parent=1 // pred_check_branch
      %118 = sbr.rel (0) target = $region77
    $region76: #{ada_decoder_forward.1} parent=1 // pred_region
      %119 = dma.done [#allocation5], 32
    $region77: #{ada_decoder_forward.1} parent=1 // pred_fallthru
      _
    // Predicated region
    $region78: #{ada_decoder_forward.1} parent=1 // pred_check
      _
    $region79: #{ada_decoder_forward.1} parent=1 // pred_check_branch
      %121 = sbr.rel (0) target = $region81
    $region80: #{ada_decoder_forward.1} parent=1 // pred_region
      %122 = dma.done [#allocation7], 512
    $region81: #{ada_decoder_forward.1} parent=1 // pred_fallthru
      _
    // Predicated region
    $region82: #{ada_decoder_forward.1} parent=1 // pred_check
      _
    $region83: #{ada_decoder_forward.1} parent=1 // pred_check_branch
      %124 = sbr.rel (0) target = $region85
    $region84: #{ada_decoder_forward.1} parent=1 // pred_region
      %125 = dma.done [#allocation7], 32
    $region85: #{ada_decoder_forward.1} parent=1 // pred_fallthru
      _
    // Predicated region
    $region86: #{ada_decoder_forward.1} parent=1 // pred_check
      _
    $region87: #{ada_decoder_forward.1} parent=1 // pred_check_branch
      %127 = sbr.rel (0) target = $region89
    $region88: #{ada_decoder_forward.1} parent=1 // pred_region
      %128 = dma.done [#allocation10], 32
    $region89: #{ada_decoder_forward.1} parent=1 // pred_fallthru
      _
    // Predicated region
    $region90: #{ada_decoder_forward.1} parent=1 // pred_check
      _
    $region91: #{ada_decoder_forward.1} parent=1 // pred_check_branch
      %130 = sbr.rel (0) target = $region93
    $region92: #{ada_decoder_forward.1} parent=1 // pred_region
      %131 = dma.done [#allocation10], 512
    $region93: #{ada_decoder_forward.1} parent=1 // pred_fallthru
      _
    // Predicated region
    $region94: #{ada_decoder_forward.1} parent=1 // pred_check
      _
    $region95: #{ada_decoder_forward.1} parent=1 // pred_check_branch
      %133 = sbr.rel (0) target = $region97
    $region96: #{ada_decoder_forward.1} parent=1 // pred_region
      %134 = dma.done [#allocation13], 64
    $region97: #{ada_decoder_forward.1} parent=1 // pred_fallthru
      _
    %v136 = vld [vmem:[#allocation4] sm:$0x3]
    %v137 = vld [vmem:[#allocation6] sm:$0xff]
    %v138 = vld [vmem:[#allocation6 + $0x8] sm:$0xff]
    %v139 = vld [vmem:[#allocation6 + $0x10] sm:$0xff]
    %v140 = vld [vmem:[#allocation6 + $0x18] sm:$0xff]
    %v141 = vld [vmem:[#allocation8] sm:$0x3]
    %v143 = vlaneseq
    %v144 = vshrl.u32 %v143, 7
    %v145 = vsub.s32 0, %v144
    %v146 = vrot.slane %v141, %v145
    %v147 = vlaneseq
    %v148 = vshrl.u32 %v147, 7
    %v149 = vsub.s32 1, %v148
    %v150 = vrot.slane %v141, %v149
    %vm153 = vcmask 130048
    %v155 = vsel %vm153, %v136, 0
    %157 = vmatprep.subr.mxu0 0.0
    %158 = vmatpush1.msra.mxu0 0.0
    %159 = vmatprep.subr.mxu0 0.0
    %160 = vmatpush1.msra.mxu0 0.0
    %161 = vmatprep.subr.mxu0 0.0
    %162 = vmatpush1.msra.mxu0 0.0
    %163 = vmatprep.subr.mxu0 0.0
    %164 = vmatpush1.msra.mxu0 0.0
    %165 = vmatprep.subr.mxu0 0.0
    %166 = vmatpush1.msra.mxu0 0.0
    %167 = vmatprep.subr.mxu0 0.0
    %168 = vmatpush1.msra.mxu0 0.0
    %169 = vmatprep.subr.mxu0 0.0
    %170 = vmatpush1.msra.mxu0 0.0
    %171 = vmatprep.subr.mxu0 0.0
    %172 = vmatpush1.msra.mxu0 0.0
    %173 = vmatprep.subr.mxu0 0.0
    %174 = vmatpush1.msra.mxu0 0.0
    %175 = vmatprep.subr.mxu0 0.0
    %176 = vmatpush1.msra.mxu0 0.0
    %177 = vmatprep.subr.mxu0 0.0
    %178 = vmatpush1.msra.mxu0 0.0
    %179 = vmatprep.subr.mxu0 0.0
    %180 = vmatpush1.msra.mxu0 0.0
    %181 = vmatprep.subr.mxu0 0.0
    %182 = vmatpush1.msra.mxu0 0.0
    %183 = vmatprep.subr.mxu0 0.0
    %184 = vmatpush1.msra.mxu0 0.0
    %185 = vmatprep.subr.mxu0 %v140
    %186 = vmatpush1.msra.mxu0 %v139
    %187 = vmatprep.subr.mxu0 %v138
    %188 = vmatpush1.msra.mxu0 %v137
    %189 = vmatprep.subr.mxu0 0.0
    %190 = vmatpush2.msra.mxu0 0.0
    %191 = vmatprep.subr.mxu0 0.0
    %192 = vmatpush2.msra.mxu0 0.0
    %193 = vmatprep.subr.mxu0 0.0
    %194 = vmatpush2.msra.mxu0 0.0
    %195 = vmatprep.subr.mxu0 0.0
    %196 = vmatpush2.msra.mxu0 0.0
    %197 = vmatprep.subr.mxu0 0.0
    %198 = vmatpush2.msra.mxu0 0.0
    %199 = vmatprep.subr.mxu0 0.0
    %200 = vmatpush2.msra.mxu0 0.0
    %201 = vmatprep.subr.mxu0 0.0
    %202 = vmatpush2.msra.mxu0 0.0
    %203 = vmatprep.subr.mxu0 0.0
    %204 = vmatpush2.msra.mxu0 0.0
    %205 = vmatprep.subr.mxu0 0.0
    %206 = vmatpush2.msra.mxu0 0.0
    %207 = vmatprep.subr.mxu0 0.0
    %208 = vmatpush2.msra.mxu0 0.0
    %209 = vmatprep.subr.mxu0 0.0
    %210 = vmatpush2.msra.mxu0 0.0
    %211 = vmatprep.subr.mxu0 0.0
    %212 = vmatpush2.msra.mxu0 0.0
    %213 = vmatprep.subr.mxu0 0.0
    %214 = vmatpush2.msra.mxu0 0.0
    %215 = vmatprep.subr.mxu0 0.0
    %216 = vmatpush2.msra.mxu0 0.0
    %217 = vmatprep.subr.mxu0 0.0
    %218 = vmatpush2.msra.mxu0 0.0
    %219 = vmatprep.subr.mxu0 0.0
    %220 = vmatpush2.msra.mxu0 0.0
    %221 = vmatprep.mubr.f32.mxu0 0.0
    %222 = vmatmul.mubr.f32.gmra.mxu0 %v155
    %v223 = vpop.f32.mrf.mxu0
    %v224 = vadd.f32 %v146, %v223
    %v225 = vpop.f32.mrf.mxu0
    %v226 = vadd.f32 %v150, %v225
    %227 = vdwg.mxu0
    %v228 = vmax.f32 %v224, 0.0
    %v229 = vmax.f32 %v226, 0.0
    %v230 = vpack.c.bf16 %v228, %v228
    %v231 = vpack.c.bf16 %v229, %v229
    %v232 = vld [vmem:[%s4] sm:$0xff]
    %v233 = vld [vmem:[%s4 + $0x8] sm:$0xff]
    %v234 = vld [vmem:[%s4 + $0x10] sm:$0xff]
    %v235 = vld [vmem:[%s4 + $0x18] sm:$0xff]
    %v236 = vld [vmem:[%s4 + $0x20] sm:$0xff]
    %v237 = vld [vmem:[%s4 + $0x28] sm:$0xff]
    %v238 = vld [vmem:[%s4 + $0x30] sm:$0xff]
    %v239 = vld [vmem:[%s4 + $0x38] sm:$0xff]
    %v240 = vld [vmem:[%s4 + $0x40] sm:$0xff]
    %v241 = vld [vmem:[%s4 + $0x48] sm:$0xff]
    %v242 = vld [vmem:[%s4 + $0x50] sm:$0xff]
    %v243 = vld [vmem:[%s4 + $0x58] sm:$0xff]
    %v244 = vld [vmem:[%s4 + $0x60] sm:$0xff]
    %v245 = vld [vmem:[%s4 + $0x68] sm:$0xff]
    %v246 = vld [vmem:[%s4 + $0x70] sm:$0xff]
    %v247 = vld [vmem:[%s4 + $0x78] sm:$0xff]
    %v248 = vld [vmem:[%s4 + $0x80] sm:$0xff]
    %v249 = vld [vmem:[%s4 + $0x88] sm:$0xff]
    %v250 = vld [vmem:[%s4 + $0x90] sm:$0xff]
    %v251 = vld [vmem:[%s4 + $0x98] sm:$0xff]
    %v252 = vld [vmem:[%s4 + $0xa0] sm:$0xff]
    %v253 = vld [vmem:[%s4 + $0xa8] sm:$0xff]
    %v254 = vld [vmem:[%s4 + $0xb0] sm:$0xff]
    %v255 = vld [vmem:[%s4 + $0xb8] sm:$0xff]
    %v256 = vld [vmem:[%s4 + $0xc0] sm:$0xff]
    %v257 = vld [vmem:[%s4 + $0xc8] sm:$0xff]
    %v258 = vld [vmem:[%s4 + $0xd0] sm:$0xff]
    %v259 = vld [vmem:[%s4 + $0xd8] sm:$0xff]
    %v260 = vld [vmem:[%s4 + $0xe0] sm:$0xff]
    %v261 = vld [vmem:[%s4 + $0xe8] sm:$0xff]
    %v262 = vld [vmem:[%s4 + $0xf0] sm:$0xff]
    %v263 = vld [vmem:[%s4 + $0xf8] sm:$0xff]
    %v264 = vld [vmem:[#allocation9] sm:$0x3]
    %v266 = vlaneseq
    %v267 = vshrl.u32 %v266, 7
    %v268 = vsub.s32 0, %v267
    %v269 = vrot.slane %v264, %v268
    %v270 = vlaneseq
    %v271 = vshrl.u32 %v270, 7
    %v272 = vsub.s32 1, %v271
    %v273 = vrot.slane %v264, %v272
    %v308 = vunpack.c.l.b16 %v232
    %v309 = vunpack.c.h.b16 %v232
    %v310 = vunpack.c.l.b16 %v233
    %v311 = vunpack.c.h.b16 %v233
    %v312 = vunpack.c.l.b16 %v234
    %v313 = vunpack.c.h.b16 %v234
    %v314 = vunpack.c.l.b16 %v235
    %v315 = vunpack.c.h.b16 %v235
    %v316 = vunpack.c.l.b16 %v236
    %v317 = vunpack.c.h.b16 %v236
    %v318 = vunpack.c.l.b16 %v237
    %v319 = vunpack.c.h.b16 %v237
    %v320 = vunpack.c.l.b16 %v238
    %v321 = vunpack.c.h.b16 %v238
    %v322 = vunpack.c.l.b16 %v239
    %v323 = vunpack.c.h.b16 %v239
    %v324 = vunpack.c.l.b16 %v240
    %v325 = vunpack.c.h.b16 %v240
    %v326 = vunpack.c.l.b16 %v241
    %v327 = vunpack.c.h.b16 %v241
    %v328 = vunpack.c.l.b16 %v242
    %v329 = vunpack.c.h.b16 %v242
    %v330 = vunpack.c.l.b16 %v243
    %v331 = vunpack.c.h.b16 %v243
    %v332 = vunpack.c.l.b16 %v244
    %v333 = vunpack.c.h.b16 %v244
    %v334 = vunpack.c.l.b16 %v245
    %v335 = vunpack.c.h.b16 %v245
    %v336 = vunpack.c.l.b16 %v246
    %v337 = vunpack.c.h.b16 %v246
    %v338 = vunpack.c.l.b16 %v247
    %v339 = vunpack.c.h.b16 %v247
    %v340 = vunpack.c.l.b16 %v248
    %v341 = vunpack.c.h.b16 %v248
    %v342 = vunpack.c.l.b16 %v249
    %v343 = vunpack.c.h.b16 %v249
    %v344 = vunpack.c.l.b16 %v250
    %v345 = vunpack.c.h.b16 %v250
    %v346 = vunpack.c.l.b16 %v251
    %v347 = vunpack.c.h.b16 %v251
    %v348 = vunpack.c.l.b16 %v252
    %v349 = vunpack.c.h.b16 %v252
    %v350 = vunpack.c.l.b16 %v253
    %v351 = vunpack.c.h.b16 %v253
    %v352 = vunpack.c.l.b16 %v254
    %v353 = vunpack.c.h.b16 %v254
    %v354 = vunpack.c.l.b16 %v255
    %v355 = vunpack.c.h.b16 %v255
    %v356 = vunpack.c.l.b16 %v256
    %v357 = vunpack.c.h.b16 %v256
    %v358 = vunpack.c.l.b16 %v257
    %v359 = vunpack.c.h.b16 %v257
    %v360 = vunpack.c.l.b16 %v258
    %v361 = vunpack.c.h.b16 %v258
    %v362 = vunpack.c.l.b16 %v259
    %v363 = vunpack.c.h.b16 %v259
    %v364 = vunpack.c.l.b16 %v260
    %v365 = vunpack.c.h.b16 %v260
    %v366 = vunpack.c.l.b16 %v261
    %v367 = vunpack.c.h.b16 %v261
    %v368 = vunpack.c.l.b16 %v262
    %v369 = vunpack.c.h.b16 %v262
    %v370 = vunpack.c.l.b16 %v263
    %v371 = vunpack.c.h.b16 %v263
    %v372 = vpack.c.b16 %v310, %v308
    %v373 = vpack.c.b16 %v311, %v309
    %v374 = vpack.c.b16 %v314, %v312
    %v375 = vpack.c.b16 %v315, %v313
    %v376 = vpack.c.b16 %v318, %v316
    %v377 = vpack.c.b16 %v319, %v317
    %v378 = vpack.c.b16 %v322, %v320
    %v379 = vpack.c.b16 %v323, %v321
    %v380 = vpack.c.b16 %v326, %v324
    %v381 = vpack.c.b16 %v327, %v325
    %v382 = vpack.c.b16 %v330, %v328
    %v383 = vpack.c.b16 %v331, %v329
    %v384 = vpack.c.b16 %v334, %v332
    %v385 = vpack.c.b16 %v335, %v333
    %v386 = vpack.c.b16 %v338, %v336
    %v387 = vpack.c.b16 %v339, %v337
    %v388 = vpack.c.b16 %v342, %v340
    %v389 = vpack.c.b16 %v343, %v341
    %v390 = vpack.c.b16 %v346, %v344
    %v391 = vpack.c.b16 %v347, %v345
    %v392 = vpack.c.b16 %v350, %v348
    %v393 = vpack.c.b16 %v351, %v349
    %v394 = vpack.c.b16 %v354, %v352
    %v395 = vpack.c.b16 %v355, %v353
    %v396 = vpack.c.b16 %v358, %v356
    %v397 = vpack.c.b16 %v359, %v357
    %v398 = vpack.c.b16 %v362, %v360
    %v399 = vpack.c.b16 %v363, %v361
    %v400 = vpack.c.b16 %v366, %v364
    %v401 = vpack.c.b16 %v367, %v365
    %v402 = vpack.c.b16 %v370, %v368
    %v403 = vpack.c.b16 %v371, %v369
    %436 = vmatprep.subr.bf16.mxu0 %v387
    %437 = vmatpush1.bf16.msra.mxu0 %v386
    %438 = vmatprep.subr.bf16.mxu0 %v385
    %439 = vmatpush1.bf16.msra.mxu0 %v384
    %440 = vmatprep.subr.bf16.mxu0 %v383
    %441 = vmatpush1.bf16.msra.mxu0 %v382
    %442 = vmatprep.subr.bf16.mxu0 %v381
    %443 = vmatpush1.bf16.msra.mxu0 %v380
    %444 = vmatprep.subr.bf16.mxu0 %v379
    %445 = vmatpush1.bf16.msra.mxu0 %v378
    %446 = vmatprep.subr.bf16.mxu0 %v377
    %447 = vmatpush1.bf16.msra.mxu0 %v376
    %448 = vmatprep.subr.bf16.mxu0 %v375
    %449 = vmatpush1.bf16.msra.mxu0 %v374
    %450 = vmatprep.subr.bf16.mxu0 %v373
    %451 = vmatpush1.bf16.msra.mxu0 %v372
    %452 = vmatprep.subr.bf16.mxu0 %v403
    %453 = vmatpush2.bf16.msra.mxu0 %v402
    %454 = vmatprep.subr.bf16.mxu0 %v401
    %455 = vmatpush2.bf16.msra.mxu0 %v400
    %456 = vmatprep.subr.bf16.mxu0 %v399
    %457 = vmatpush2.bf16.msra.mxu0 %v398
    %458 = vmatprep.subr.bf16.mxu0 %v397
    %459 = vmatpush2.bf16.msra.mxu0 %v396
    %460 = vmatprep.subr.bf16.mxu0 %v395
    %461 = vmatpush2.bf16.msra.mxu0 %v394
    %462 = vmatprep.subr.bf16.mxu0 %v393
    %463 = vmatpush2.bf16.msra.mxu0 %v392
    %464 = vmatprep.subr.bf16.mxu0 %v391
    %465 = vmatpush2.bf16.msra.mxu0 %v390
    %466 = vmatprep.subr.bf16.mxu0 %v389
    %467 = vmatpush2.bf16.msra.mxu0 %v388
    %468 = vmatprep.mubr.bf16.mxu0 %v231
    %469 = vmatmul.mubr.bf16.gmra.mxu0 %v230
    %v470 = vpop.f32.mrf.mxu0
    %v471 = vadd.f32 %v269, %v470
    %v472 = vpop.f32.mrf.mxu0
    %v473 = vadd.f32 %v273, %v472
    %v474 = vpop.f32.mrf.mxu0
    %v475 = vpop.f32.mrf.mxu0
    %476 = vdwg.mxu0
    %v477 = vmax.f32 %v471, 0.0
    %v478 = vmax.f32 %v473, 0.0
    %v479 = vld [vmem:[#allocation11] sm:$0xff]
    %v480 = vld [vmem:[#allocation11 + $0x8] sm:$0xff]
    %v481 = vld [vmem:[#allocation11 + $0x10] sm:$0xff]
    %v482 = vld [vmem:[#allocation11 + $0x18] sm:$0xff]
    %v483 = vpack.c.bf16 %v477, %v477
    %v484 = vpack.c.bf16 %v478, %v478
    %v485 = vld [vmem:[%s7] sm:$0xff]
    %v486 = vld [vmem:[%s7 + $0x8] sm:$0xff]
    %v487 = vld [vmem:[%s7 + $0x10] sm:$0xff]
    %v488 = vld [vmem:[%s7 + $0x18] sm:$0xff]
    %490 = vset.pattern.permute.xlu0 0
    %491 = vperm.xlu0 %490, %v485
    %v492 = vpop.permute.xlu0 %491
    %495 = vset.pattern.permute.xlu0 0
    %496 = vperm.xlu0 %495, %v486
    %v497 = vpop.permute.xlu0 %496
    %500 = vset.pattern.permute.xlu0 0
    %501 = vperm.xlu0 %500, %v487
    %v502 = vpop.permute.xlu0 %501
    %505 = vset.pattern.permute.xlu0 0
    %506 = vperm.xlu0 %505, %v488
    %v507 = vpop.permute.xlu0 %506
    %v513 = vunpack.c.l.b16 %v479
    %v514 = vunpack.c.h.b16 %v479
    %v515 = vunpack.c.l.b16 %v480
    %v516 = vunpack.c.h.b16 %v480
    %v517 = vunpack.c.l.b16 %v481
    %v518 = vunpack.c.h.b16 %v481
    %v519 = vunpack.c.l.b16 %v482
    %v520 = vunpack.c.h.b16 %v482
    %v521 = vpack.c.b16 %v515, %v513
    %v522 = vpack.c.b16 %v516, %v514
    %v523 = vpack.c.b16 %v519, %v517
    %v524 = vpack.c.b16 %v520, %v518
    %529 = vmatprep.subr.bf16.mxu0 0
    %530 = vmatpush1.bf16.xpose.msra.mxu0 0
    %531 = vmatprep.subr.bf16.mxu0 0
    %532 = vmatpush1.bf16.xpose.msra.mxu0 0
    %533 = vmatprep.subr.bf16.mxu0 0
    %534 = vmatpush1.bf16.xpose.msra.mxu0 0
    %535 = vmatprep.subr.bf16.mxu0 0
    %536 = vmatpush1.bf16.xpose.msra.mxu0 0
    %537 = vmatprep.subr.bf16.mxu0 0
    %538 = vmatpush1.bf16.xpose.msra.mxu0 0
    %539 = vmatprep.subr.bf16.mxu0 0
    %540 = vmatpush1.bf16.xpose.msra.mxu0 0
    %541 = vmatprep.subr.bf16.mxu0 0
    %542 = vmatpush1.bf16.xpose.msra.mxu0 0
    %543 = vmatprep.subr.bf16.mxu0 %v484
    %544 = vmatpush1.bf16.xpose.msra.mxu0 %v483
    %545 = vmatprep.subr.bf16.mxu0 0
    %546 = vmatpush2.bf16.xpose.msra.mxu0 0
    %547 = vmatprep.subr.bf16.mxu0 0
    %548 = vmatpush2.bf16.xpose.msra.mxu0 0
    %549 = vmatprep.subr.bf16.mxu0 0
    %550 = vmatpush2.bf16.xpose.msra.mxu0 0
    %551 = vmatprep.subr.bf16.mxu0 0
    %552 = vmatpush2.bf16.xpose.msra.mxu0 0
    %553 = vmatprep.subr.bf16.mxu0 0
    %554 = vmatpush2.bf16.xpose.msra.mxu0 0
    %555 = vmatprep.subr.bf16.mxu0 0
    %556 = vmatpush2.bf16.xpose.msra.mxu0 0
    %557 = vmatprep.subr.bf16.mxu0 0
    %558 = vmatpush2.bf16.xpose.msra.mxu0 0
    %559 = vmatprep.subr.bf16.mxu0 0
    %560 = vmatpush2.bf16.xpose.msra.mxu0 0
    %561 = vmatprep.mubr.bf16.mxu0 %v522
    %562 = vmatmul.mubr.bf16.gmra.mxu0 %v521
    %v563 = vpop.f32.mrf.mxu0
    %v564 = vadd.f32 %v492, %v563
    %v565 = vpop.f32.mrf.mxu0
    %v566 = vpop.f32.mrf.mxu0
    %v567 = vadd.f32 %v497, %v566
    %v568 = vpop.f32.mrf.mxu0
    %569 = vmatprep.mubr.bf16.mxu0 %v524
    %570 = vmatmul.mubr.bf16.gmra.mxu0 %v523
    %v571 = vpop.f32.mrf.mxu0
    %v572 = vadd.f32 %v502, %v571
    %v573 = vpop.f32.mrf.mxu0
    %v574 = vpop.f32.mrf.mxu0
    %v575 = vadd.f32 %v507, %v574
    %v576 = vpop.f32.mrf.mxu0
    %577 = vdwg.mxu0
    %v578 = vmax.f32 %v564, 0.0
    %v579 = vmax.f32 %v567, 0.0
    %v580 = vmax.f32 %v572, 0.0
    %v581 = vmax.f32 %v575, 0.0
    %v582 = vlaneseq
    %v583 = vand.u32 %v582, 127
    %v584 = vadd.s32 %v583, 128
    %v585 = vadd.s32 %v583, 256
    %v586 = vadd.s32 %v583, 384
    %v587 = vand.u32 %v583, 255
    %v588 = vand.u32 %v584, 255
    %v589 = vand.u32 %v585, 255
    %v590 = vand.u32 %v586, 255
    %v591 = vand.u32 %v583, 15
    %v592 = vand.u32 %v584, 15
    %v593 = vand.u32 %v585, 15
    %v594 = vand.u32 %v586, 15
    %vm595 = vcmp.ge.s32.totalorder %v583, 0
    %vm596 = vcmp.ge.s32.totalorder %v584, 0
    %vm597 = vcmp.ge.s32.totalorder %v585, 0
    %vm598 = vcmp.ge.s32.totalorder %v586, 0
    %vm599 = vcmp.lt.s32.totalorder %v583, 256
    %vm600 = vcmp.lt.s32.totalorder %v584, 256
    %vm601 = vcmp.lt.s32.totalorder %v585, 256
    %vm602 = vcmp.lt.s32.totalorder %v586, 256
    %vm603 = vmand %vm595, %vm599
    %vm604 = vmand %vm596, %vm600
    %vm605 = vmand %vm597, %vm601
    %vm606 = vmand %vm598, %vm602
    %v607 = vsel %vm603, 1, 0
    %v608 = vsel %vm604, 1, 0
    %v609 = vsel %vm605, 1, 0
    %v610 = vsel %vm606, 1, 0
    %v611 = vcvt.s32.f32 %v607
    %v612 = vcvt.s32.f32 %v608
    %v613 = vcvt.s32.f32 %v609
    %v614 = vcvt.s32.f32 %v610
    %vm615 = vcmp.ge.s32.totalorder %v583, 256
    %vm616 = vcmp.ge.s32.totalorder %v584, 256
    %vm617 = vcmp.ge.s32.totalorder %v585, 256
    %vm618 = vcmp.ge.s32.totalorder %v586, 256
    %vm619 = vcmp.lt.s32.totalorder %v583, 512
    %vm620 = vcmp.lt.s32.totalorder %v584, 512
    %vm621 = vcmp.lt.s32.totalorder %v585, 512
    %vm622 = vcmp.lt.s32.totalorder %v586, 512
    %vm623 = vmand %vm615, %vm619
    %vm624 = vmand %vm616, %vm620
    %vm625 = vmand %vm617, %vm621
    %vm626 = vmand %vm618, %vm622
    %v627 = vsel %vm623, 1, 0
    %v628 = vsel %vm624, 1, 0
    %v629 = vsel %vm625, 1, 0
    %v630 = vsel %vm626, 1, 0
    %v631 = vcvt.s32.f32 %v627
    %v632 = vcvt.s32.f32 %v628
    %v633 = vcvt.s32.f32 %v629
    %v634 = vcvt.s32.f32 %v630
    %vm635 = vcmp.ge.s32.totalorder %v587, 16
    %vm636 = vcmp.ge.s32.totalorder %v588, 16
    %vm637 = vcmp.ge.s32.totalorder %v589, 16
    %vm638 = vcmp.ge.s32.totalorder %v590, 16
    %vm639 = vcmp.lt.s32.totalorder %v587, 272
    %vm640 = vcmp.lt.s32.totalorder %v588, 272
    %vm641 = vcmp.lt.s32.totalorder %v589, 272
    %vm642 = vcmp.lt.s32.totalorder %v590, 272
    %vm643 = vmand %vm635, %vm639
    %vm644 = vmand %vm636, %vm640
    %vm645 = vmand %vm637, %vm641
    %vm646 = vmand %vm638, %vm642
    %v647 = vadd.s32 %v591, 4294967295
    %v648 = vadd.s32 %v592, 4294967295
    %v649 = vadd.s32 %v593, 4294967295
    %v650 = vadd.s32 %v594, 4294967295
    %vm651 = vcmp.ge.s32.totalorder %v647, 0
    %vm652 = vcmp.ge.s32.totalorder %v648, 0
    %vm653 = vcmp.ge.s32.totalorder %v649, 0
    %vm654 = vcmp.ge.s32.totalorder %v650, 0
    %vm655 = vmand %vm643, %vm651
    %vm656 = vmand %vm644, %vm652
    %vm657 = vmand %vm645, %vm653
    %vm658 = vmand %vm646, %vm654
    %vm659 = vcmp.lt.s32.totalorder %v647, 16
    %vm660 = vcmp.lt.s32.totalorder %v648, 16
    %vm661 = vcmp.lt.s32.totalorder %v649, 16
    %vm662 = vcmp.lt.s32.totalorder %v650, 16
    %vm663 = vmand %vm655, %vm659
    %vm664 = vmand %vm656, %vm660
    %vm665 = vmand %vm657, %vm661
    %vm666 = vmand %vm658, %vm662
    %v667 = vsel %vm663, 1, 0
    %v668 = vsel %vm664, 1, 0
    %v669 = vsel %vm665, 1, 0
    %v670 = vsel %vm666, 1, 0
    %v671 = vcvt.s32.f32 %v667
    %v672 = vcvt.s32.f32 %v668
    %v673 = vcvt.s32.f32 %v669
    %v674 = vcvt.s32.f32 %v670
    %vm675 = vcmp.ge.s32.totalorder %v591, 0
    %vm676 = vcmp.ge.s32.totalorder %v592, 0
    %vm677 = vcmp.ge.s32.totalorder %v593, 0
    %vm678 = vcmp.ge.s32.totalorder %v594, 0
    %vm679 = vmand %vm643, %vm675
    %vm680 = vmand %vm644, %vm676
    %vm681 = vmand %vm645, %vm677
    %vm682 = vmand %vm646, %vm678
    %vm683 = vcmp.lt.s32.totalorder %v591, 16
    %vm684 = vcmp.lt.s32.totalorder %v592, 16
    %vm685 = vcmp.lt.s32.totalorder %v593, 16
    %vm686 = vcmp.lt.s32.totalorder %v594, 16
    %vm687 = vmand %vm679, %vm683
    %vm688 = vmand %vm680, %vm684
    %vm689 = vmand %vm681, %vm685
    %vm690 = vmand %vm682, %vm686
    %v691 = vsel %vm687, 1, 0
    %v692 = vsel %vm688, 1, 0
    %v693 = vsel %vm689, 1, 0
    %v694 = vsel %vm690, 1, 0
    %v695 = vcvt.s32.f32 %v691
    %v696 = vcvt.s32.f32 %v692
    %v697 = vcvt.s32.f32 %v693
    %v698 = vcvt.s32.f32 %v694
    %v699 = vadd.s32 %v591, 1
    %v700 = vadd.s32 %v592, 1
    %v701 = vadd.s32 %v593, 1
    %v702 = vadd.s32 %v594, 1
    %vm703 = vcmp.ge.s32.totalorder %v699, 0
    %vm704 = vcmp.ge.s32.totalorder %v700, 0
    %vm705 = vcmp.ge.s32.totalorder %v701, 0
    %vm706 = vcmp.ge.s32.totalorder %v702, 0
    %vm707 = vmand %vm643, %vm703
    %vm708 = vmand %vm644, %vm704
    %vm709 = vmand %vm645, %vm705
    %vm710 = vmand %vm646, %vm706
    %vm711 = vcmp.lt.s32.totalorder %v699, 16
    %vm712 = vcmp.lt.s32.totalorder %v700, 16
    %vm713 = vcmp.lt.s32.totalorder %v701, 16
    %vm714 = vcmp.lt.s32.totalorder %v702, 16
    %vm715 = vmand %vm707, %vm711
    %vm716 = vmand %vm708, %vm712
    %vm717 = vmand %vm709, %vm713
    %vm718 = vmand %vm710, %vm714
    %v719 = vsel %vm715, 1, 0
    %v720 = vsel %vm716, 1, 0
    %v721 = vsel %vm717, 1, 0
    %v722 = vsel %vm718, 1, 0
    %v723 = vcvt.s32.f32 %v719
    %v724 = vcvt.s32.f32 %v720
    %v725 = vcvt.s32.f32 %v721
    %v726 = vcvt.s32.f32 %v722
    %vm727 = vcmp.ge.s32.totalorder %v587, 0
    %vm728 = vcmp.ge.s32.totalorder %v588, 0
    %vm729 = vcmp.ge.s32.totalorder %v589, 0
    %vm730 = vcmp.ge.s32.totalorder %v590, 0
    %vm731 = vcmp.lt.s32.totalorder %v587, 256
    %vm732 = vcmp.lt.s32.totalorder %v588, 256
    %vm733 = vcmp.lt.s32.totalorder %v589, 256
    %vm734 = vcmp.lt.s32.totalorder %v590, 256
    %vm735 = vmand %vm727, %vm731
    %vm736 = vmand %vm728, %vm732
    %vm737 = vmand %vm729, %vm733
    %vm738 = vmand %vm730, %vm734
    %vm739 = vmand %vm735, %vm651
    %vm740 = vmand %vm736, %vm652
    %vm741 = vmand %vm737, %vm653
    %vm742 = vmand %vm738, %vm654
    %vm743 = vmand %vm739, %vm659
    %vm744 = vmand %vm740, %vm660
    %vm745 = vmand %vm741, %vm661
    %vm746 = vmand %vm742, %vm662
    %v747 = vsel %vm743, 1, 0
    %v748 = vsel %vm744, 1, 0
    %v749 = vsel %vm745, 1, 0
    %v750 = vsel %vm746, 1, 0
    %v751 = vcvt.s32.f32 %v747
    %v752 = vcvt.s32.f32 %v748
    %v753 = vcvt.s32.f32 %v749
    %v754 = vcvt.s32.f32 %v750
    %vm755 = vmand %vm735, %vm703
    %vm756 = vmand %vm736, %vm704
    %vm757 = vmand %vm737, %vm705
    %vm758 = vmand %vm738, %vm706
    %vm759 = vmand %vm755, %vm711
    %vm760 = vmand %vm756, %vm712
    %vm761 = vmand %vm757, %vm713
    %vm762 = vmand %vm758, %vm714
    %v763 = vsel %vm759, 1, 0
    %v764 = vsel %vm760, 1, 0
    %v765 = vsel %vm761, 1, 0
    %v766 = vsel %vm762, 1, 0
    %v767 = vcvt.s32.f32 %v763
    %v768 = vcvt.s32.f32 %v764
    %v769 = vcvt.s32.f32 %v765
    %v770 = vcvt.s32.f32 %v766
    %vm771 = vcmp.ge.s32.totalorder %v587, 4294967280
    %vm772 = vcmp.ge.s32.totalorder %v588, 4294967280
    %vm773 = vcmp.ge.s32.totalorder %v589, 4294967280
    %vm774 = vcmp.ge.s32.totalorder %v590, 4294967280
    %vm775 = vcmp.lt.s32.totalorder %v587, 240
    %vm776 = vcmp.lt.s32.totalorder %v588, 240
    %vm777 = vcmp.lt.s32.totalorder %v589, 240
    %vm778 = vcmp.lt.s32.totalorder %v590, 240
    %vm779 = vmand %vm771, %vm775
    %vm780 = vmand %vm772, %vm776
    %vm781 = vmand %vm773, %vm777
    %vm782 = vmand %vm774, %vm778
    %vm783 = vmand %vm779, %vm651
    %vm784 = vmand %vm780, %vm652
    %vm785 = vmand %vm781, %vm653
    %vm786 = vmand %vm782, %vm654
    %vm787 = vmand %vm783, %vm659
    %vm788 = vmand %vm784, %vm660
    %vm789 = vmand %vm785, %vm661
    %vm790 = vmand %vm786, %vm662
    %v791 = vsel %vm787, 1, 0
    %v792 = vsel %vm788, 1, 0
    %v793 = vsel %vm789, 1, 0
    %v794 = vsel %vm790, 1, 0
    %v795 = vcvt.s32.f32 %v791
    %v796 = vcvt.s32.f32 %v792
    %v797 = vcvt.s32.f32 %v793
    %v798 = vcvt.s32.f32 %v794
    %vm799 = vmand %vm779, %vm675
    %vm800 = vmand %vm780, %vm676
    %vm801 = vmand %vm781, %vm677
    %vm802 = vmand %vm782, %vm678
    %vm803 = vmand %vm799, %vm683
    %vm804 = vmand %vm800, %vm684
    %vm805 = vmand %vm801, %vm685
    %vm806 = vmand %vm802, %vm686
    %v807 = vsel %vm803, 1, 0
    %v808 = vsel %vm804, 1, 0
    %v809 = vsel %vm805, 1, 0
    %v810 = vsel %vm806, 1, 0
    %v811 = vcvt.s32.f32 %v807
    %v812 = vcvt.s32.f32 %v808
    %v813 = vcvt.s32.f32 %v809
    %v814 = vcvt.s32.f32 %v810
    %vm815 = vmand %vm779, %vm703
    %vm816 = vmand %vm780, %vm704
    %vm817 = vmand %vm781, %vm705
    %vm818 = vmand %vm782, %vm706
    %vm819 = vmand %vm815, %vm711
    %vm820 = vmand %vm816, %vm712
    %vm821 = vmand %vm817, %vm713
    %vm822 = vmand %vm818, %vm714
    %v823 = vsel %vm819, 1, 0
    %v824 = vsel %vm820, 1, 0
    %v825 = vsel %vm821, 1, 0
    %v826 = vsel %vm822, 1, 0
    %v827 = vcvt.s32.f32 %v823
    %v828 = vcvt.s32.f32 %v824
    %v829 = vcvt.s32.f32 %v825
    %v830 = vcvt.s32.f32 %v826
    %v831 = vld [vmem:[%s0] sm:$0xff]
    %v832 = vld [vmem:[%s0 + $0x8] sm:$0xff]
    %v833 = vld [vmem:[%s0 + $0x10] sm:$0xff]
    %v834 = vld [vmem:[%s0 + $0x18] sm:$0xff]
    %v835 = vrot.slane %v831, 4
    %v836 = vmax.f32 %v831, %v835
    %v837 = vrot.slane %v836, 2
    %v838 = vmax.f32 %v836, %v837
    %v839 = vrot.slane %v838, 1
    %v840 = vmax.f32 %v838, %v839
    %v841 = vrot.slane %v832, 4
    %v842 = vmax.f32 %v832, %v841
    %v843 = vrot.slane %v842, 2
    %v844 = vmax.f32 %v842, %v843
    %v845 = vrot.slane %v844, 1
    %v846 = vmax.f32 %v844, %v845
    %v847 = vrot.slane %v833, 4
    %v848 = vmax.f32 %v833, %v847
    %v849 = vrot.slane %v848, 2
    %v850 = vmax.f32 %v848, %v849
    %v851 = vrot.slane %v850, 1
    %v852 = vmax.f32 %v850, %v851
    %v853 = vrot.slane %v834, 4
    %v854 = vmax.f32 %v834, %v853
    %v855 = vrot.slane %v854, 2
    %v856 = vmax.f32 %v854, %v855
    %v857 = vrot.slane %v856, 1
    %v858 = vmax.f32 %v856, %v857
    %v859 = vsub.f32 %v831, %v840
    %v860 = vsub.f32 %v832, %v846
    %v861 = vsub.f32 %v833, %v852
    %v862 = vsub.f32 %v834, %v858
    %v863 = vmul.f32 %v859, 1.442695
    %v864 = vpow.pop %v863
    %v865 = vmul.f32 %v860, 1.442695
    %v866 = vpow.pop %v865
    %v867 = vmul.f32 %v861, 1.442695
    %v868 = vpow.pop %v867
    %v869 = vmul.f32 %v862, 1.442695
    %v870 = vpow.pop %v869
    %v871 = vrot.slane %v864, 4
    %v872 = vadd.f32 %v864, %v871
    %v873 = vrot.slane %v872, 2
    %v874 = vadd.f32 %v872, %v873
    %v875 = vrot.slane %v874, 1
    %v876 = vadd.f32 %v874, %v875
    %v877 = vrot.slane %v866, 4
    %v878 = vadd.f32 %v866, %v877
    %v879 = vrot.slane %v878, 2
    %v880 = vadd.f32 %v878, %v879
    %v881 = vrot.slane %v880, 1
    %v882 = vadd.f32 %v880, %v881
    %v883 = vrot.slane %v868, 4
    %v884 = vadd.f32 %v868, %v883
    %v885 = vrot.slane %v884, 2
    %v886 = vadd.f32 %v884, %v885
    %v887 = vrot.slane %v886, 1
    %v888 = vadd.f32 %v886, %v887
    %v889 = vrot.slane %v870, 4
    %v890 = vadd.f32 %v870, %v889
    %v891 = vrot.slane %v890, 2
    %v892 = vadd.f32 %v890, %v891
    %v893 = vrot.slane %v892, 1
    %v894 = vadd.f32 %v892, %v893
    %v895 = vrcp.pop %v876
    %v896 = vrcp.pop %v882
    %v897 = vrcp.pop %v888
    %v898 = vrcp.pop %v894
    %v899 = vmul.f32 %v864, %v895
    %v900 = vmul.f32 %v866, %v896
    %v901 = vmul.f32 %v868, %v897
    %v902 = vmul.f32 %v870, %v898
    %903 = vrot.lane.b32.xlu0 %v899, 17
    %v904 = vpop.permute.xlu0 %903
    %905 = vrot.lane.b32.xlu0 %v900, 17
    %v906 = vpop.permute.xlu0 %905
    %907 = vrot.lane.b32.xlu0 %v901, 17
    %v908 = vpop.permute.xlu0 %907
    %909 = vrot.lane.b32.xlu0 %v902, 17
    %v910 = vpop.permute.xlu0 %909
    %vm911 = vcmp.lt.s32.totalorder %v583, 17
    %v912 = vsel %vm911, %v908, %v910
    %v913 = vsel %vm911, %v906, %v908
    %v914 = vsel %vm911, %v904, %v906
    %v915 = vsel %vm911, %v910, %v904
    %v916 = vmul.f32 %v915, %v671
    %v917 = vmul.f32 %v914, %v672
    %v918 = vmul.f32 %v913, %v673
    %v919 = vmul.f32 %v912, %v674
    %920 = vst [vmem:[#allocation2] sm:$0xff] %v916
    %921 = vst [vmem:[#allocation2 + $0x8] sm:$0xff] %v917
    %922 = vst [vmem:[#allocation2 + $0x10] sm:$0xff] %v918
    %923 = vst [vmem:[#allocation2 + $0x18] sm:$0xff] %v919
    %924 = vrot.lane.b32.xlu0 %v899, 16
    %v925 = vpop.permute.xlu0 %924
    %926 = vrot.lane.b32.xlu0 %v900, 16
    %v927 = vpop.permute.xlu0 %926
    %928 = vrot.lane.b32.xlu0 %v901, 16
    %v929 = vpop.permute.xlu0 %928
    %930 = vrot.lane.b32.xlu0 %v902, 16
    %v931 = vpop.permute.xlu0 %930
    %vm932 = vcmp.lt.s32.totalorder %v583, 16
    %v933 = vsel %vm932, %v929, %v931
    %v934 = vsel %vm932, %v927, %v929
    %v935 = vsel %vm932, %v925, %v927
    %v936 = vsel %vm932, %v931, %v925
    %v937 = vmul.f32 %v936, %v695
    %v938 = vmul.f32 %v935, %v696
    %v939 = vmul.f32 %v934, %v697
    %v940 = vmul.f32 %v933, %v698
    %941 = vst [vmem:[#allocation2 + $0x20] sm:$0xff] %v937
    %942 = vst [vmem:[#allocation2 + $0x28] sm:$0xff] %v938
    %943 = vst [vmem:[#allocation2 + $0x30] sm:$0xff] %v939
    %944 = vst [vmem:[#allocation2 + $0x38] sm:$0xff] %v940
    %945 = vrot.lane.b32.xlu0 %v899, 15
    %v946 = vpop.permute.xlu0 %945
    %947 = vrot.lane.b32.xlu0 %v900, 15
    %v948 = vpop.permute.xlu0 %947
    %949 = vrot.lane.b32.xlu0 %v901, 15
    %v950 = vpop.permute.xlu0 %949
    %951 = vrot.lane.b32.xlu0 %v902, 15
    %v952 = vpop.permute.xlu0 %951
    %vm953 = vcmp.lt.s32.totalorder %v583, 15
    %v954 = vsel %vm953, %v950, %v952
    %v955 = vsel %vm953, %v948, %v950
    %v956 = vsel %vm953, %v946, %v948
    %v957 = vsel %vm953, %v952, %v946
    %v958 = vmul.f32 %v957, %v723
    %v959 = vmul.f32 %v956, %v724
    %v960 = vmul.f32 %v955, %v725
    %v961 = vmul.f32 %v954, %v726
    %962 = vst [vmem:[#allocation2 + $0x40] sm:$0xff] %v958
    %963 = vst [vmem:[#allocation2 + $0x48] sm:$0xff] %v959
    %964 = vst [vmem:[#allocation2 + $0x50] sm:$0xff] %v960
    %965 = vst [vmem:[#allocation2 + $0x58] sm:$0xff] %v961
    %966 = vrot.lane.b32.xlu0 %v899, 1
    %v967 = vpop.permute.xlu0 %966
    %968 = vrot.lane.b32.xlu0 %v900, 1
    %v969 = vpop.permute.xlu0 %968
    %970 = vrot.lane.b32.xlu0 %v901, 1
    %v971 = vpop.permute.xlu0 %970
    %972 = vrot.lane.b32.xlu0 %v902, 1
    %v973 = vpop.permute.xlu0 %972
    %vm974 = vcmp.lt.s32.totalorder %v583, 1
    %v975 = vsel %vm974, %v971, %v973
    %v976 = vsel %vm974, %v969, %v971
    %v977 = vsel %vm974, %v967, %v969
    %v978 = vsel %vm974, %v973, %v967
    %v979 = vmul.f32 %v978, %v751
    %v980 = vmul.f32 %v977, %v752
    %v981 = vmul.f32 %v976, %v753
    %v982 = vmul.f32 %v975, %v754
    %983 = vst [vmem:[#allocation2 + $0x60] sm:$0xff] %v979
    %984 = vst [vmem:[#allocation2 + $0x68] sm:$0xff] %v980
    %985 = vst [vmem:[#allocation2 + $0x70] sm:$0xff] %v981
    %986 = vst [vmem:[#allocation2 + $0x78] sm:$0xff] %v982
    %987 = vst [vmem:[#allocation2 + $0x80] sm:$0xff] %v899
    %988 = vst [vmem:[#allocation2 + $0x88] sm:$0xff] %v900
    %989 = vst [vmem:[#allocation2 + $0x90] sm:$0xff] %v901
    %990 = vst [vmem:[#allocation2 + $0x98] sm:$0xff] %v902
    %991 = vrot.lane.b32.xlu0 %v899, 127
    %v992 = vpop.permute.xlu0 %991
    %993 = vrot.lane.b32.xlu0 %v900, 127
    %v994 = vpop.permute.xlu0 %993
    %995 = vrot.lane.b32.xlu0 %v901, 127
    %v996 = vpop.permute.xlu0 %995
    %997 = vrot.lane.b32.xlu0 %v902, 127
    %v998 = vpop.permute.xlu0 %997
    %vm999 = vcmp.lt.s32.totalorder %v583, 127
    %v1000 = vsel %vm999, %v996, %v998
    %v1001 = vsel %vm999, %v994, %v996
    %v1002 = vsel %vm999, %v992, %v994
    %v1003 = vsel %vm999, %v998, %v992
    %v1004 = vmul.f32 %v1002, %v767
    %v1005 = vmul.f32 %v1001, %v768
    %v1006 = vmul.f32 %v1000, %v769
    %v1007 = vmul.f32 %v1003, %v770
    %1008 = vst [vmem:[#allocation2 + $0xa0] sm:$0xff] %v1004
    %1009 = vst [vmem:[#allocation2 + $0xa8] sm:$0xff] %v1005
    %1010 = vst [vmem:[#allocation2 + $0xb0] sm:$0xff] %v1006
    %1011 = vst [vmem:[#allocation2 + $0xb8] sm:$0xff] %v1007
    %1012 = vrot.lane.b32.xlu0 %v899, 113
    %v1013 = vpop.permute.xlu0 %1012
    %1014 = vrot.lane.b32.xlu0 %v900, 113
    %v1015 = vpop.permute.xlu0 %1014
    %1016 = vrot.lane.b32.xlu0 %v901, 113
    %v1017 = vpop.permute.xlu0 %1016
    %1018 = vrot.lane.b32.xlu0 %v902, 113
    %v1019 = vpop.permute.xlu0 %1018
    %vm1020 = vcmp.lt.s32.totalorder %v583, 113
    %v1021 = vsel %vm1020, %v1017, %v1019
    %v1022 = vsel %vm1020, %v1015, %v1017
    %v1023 = vsel %vm1020, %v1013, %v1015
    %v1024 = vsel %vm1020, %v1019, %v1013
    %v1025 = vmul.f32 %v1023, %v795
    %v1026 = vmul.f32 %v1022, %v796
    %v1027 = vmul.f32 %v1021, %v797
    %v1028 = vmul.f32 %v1024, %v798
    %1029 = vst [vmem:[#allocation2 + $0xc0] sm:$0xff] %v1025
    %1030 = vst [vmem:[#allocation2 + $0xc8] sm:$0xff] %v1026
    %1031 = vst [vmem:[#allocation2 + $0xd0] sm:$0xff] %v1027
    %1032 = vst [vmem:[#allocation2 + $0xd8] sm:$0xff] %v1028
    %1033 = vrot.lane.b32.xlu0 %v899, 112
    %v1034 = vpop.permute.xlu0 %1033
    %1035 = vrot.lane.b32.xlu0 %v900, 112
    %v1036 = vpop.permute.xlu0 %1035
    %1037 = vrot.lane.b32.xlu0 %v901, 112
    %v1038 = vpop.permute.xlu0 %1037
    %1039 = vrot.lane.b32.xlu0 %v902, 112
    %v1040 = vpop.permute.xlu0 %1039
    %vm1041 = vcmp.lt.s32.totalorder %v583, 112
    %v1042 = vsel %vm1041, %v1038, %v1040
    %v1043 = vsel %vm1041, %v1036, %v1038
    %v1044 = vsel %vm1041, %v1034, %v1036
    %v1045 = vsel %vm1041, %v1040, %v1034
    %v1046 = vmul.f32 %v1044, %v811
    %v1047 = vmul.f32 %v1043, %v812
    %v1048 = vmul.f32 %v1042, %v813
    %v1049 = vmul.f32 %v1045, %v814
    %1050 = vst [vmem:[#allocation2 + $0xe0] sm:$0xff] %v1046
    %1051 = vst [vmem:[#allocation2 + $0xe8] sm:$0xff] %v1047
    %1052 = vst [vmem:[#allocation2 + $0xf0] sm:$0xff] %v1048
    %1053 = vst [vmem:[#allocation2 + $0xf8] sm:$0xff] %v1049
    %1054 = vrot.lane.b32.xlu0 %v899, 111
    %v1055 = vpop.permute.xlu0 %1054
    %1056 = vrot.lane.b32.xlu0 %v900, 111
    %v1057 = vpop.permute.xlu0 %1056
    %1058 = vrot.lane.b32.xlu0 %v901, 111
    %v1059 = vpop.permute.xlu0 %1058
    %1060 = vrot.lane.b32.xlu0 %v902, 111
    %v1061 = vpop.permute.xlu0 %1060
    %vm1062 = vcmp.lt.s32.totalorder %v583, 111
    %v1063 = vsel %vm1062, %v1059, %v1061
    %v1064 = vsel %vm1062, %v1057, %v1059
    %v1065 = vsel %vm1062, %v1055, %v1057
    %v1066 = vsel %vm1062, %v1061, %v1055
    %v1067 = vmul.f32 %v1065, %v827
    %v1068 = vmul.f32 %v1064, %v828
    %v1069 = vmul.f32 %v1063, %v829
    %v1070 = vmul.f32 %v1066, %v830
    %1071 = vst [vmem:[#allocation2 + $0x100] sm:$0xff] %v1067
    %1072 = vst [vmem:[#allocation2 + $0x108] sm:$0xff] %v1068
    %1073 = vst [vmem:[#allocation2 + $0x110] sm:$0xff] %v1069
    %1074 = vst [vmem:[#allocation2 + $0x118] sm:$0xff] %v1070
    %v1075 = vld [vmem:[#allocation2] sm:$0xff]
    %v1076 = vld [vmem:[#allocation2 + $0x8] sm:$0xff]
    %v1077 = vld [vmem:[#allocation2 + $0x10] sm:$0xff]
    %v1078 = vld [vmem:[#allocation2 + $0x18] sm:$0xff]
    %v1079 = vld [vmem:[#allocation2 + $0x20] sm:$0xff]
    %v1080 = vld [vmem:[#allocation2 + $0x28] sm:$0xff]
    %v1081 = vld [vmem:[#allocation2 + $0x30] sm:$0xff]
    %v1082 = vld [vmem:[#allocation2 + $0x38] sm:$0xff]
    %v1083 = vld [vmem:[#allocation2 + $0x40] sm:$0xff]
    %v1084 = vld [vmem:[#allocation2 + $0x48] sm:$0xff]
    %v1085 = vld [vmem:[#allocation2 + $0x50] sm:$0xff]
    %v1086 = vld [vmem:[#allocation2 + $0x58] sm:$0xff]
    %v1087 = vld [vmem:[#allocation2 + $0x60] sm:$0xff]
    %v1088 = vld [vmem:[#allocation2 + $0x68] sm:$0xff]
    %v1089 = vld [vmem:[#allocation2 + $0x70] sm:$0xff]
    %v1090 = vld [vmem:[#allocation2 + $0x78] sm:$0xff]
    %v1091 = vld [vmem:[#allocation2 + $0x80] sm:$0xff]
    %v1092 = vld [vmem:[#allocation2 + $0x88] sm:$0xff]
    %v1093 = vld [vmem:[#allocation2 + $0x90] sm:$0xff]
    %v1094 = vld [vmem:[#allocation2 + $0x98] sm:$0xff]
    %v1095 = vld [vmem:[#allocation2 + $0xa0] sm:$0xff]
    %v1096 = vld [vmem:[#allocation2 + $0xa8] sm:$0xff]
    %v1097 = vld [vmem:[#allocation2 + $0xb0] sm:$0xff]
    %v1098 = vld [vmem:[#allocation2 + $0xb8] sm:$0xff]
    %v1099 = vld [vmem:[#allocation2 + $0xc0] sm:$0xff]
    %v1100 = vld [vmem:[#allocation2 + $0xc8] sm:$0xff]
    %v1101 = vld [vmem:[#allocation2 + $0xd0] sm:$0xff]
    %v1102 = vld [vmem:[#allocation2 + $0xd8] sm:$0xff]
    %v1103 = vld [vmem:[#allocation2 + $0xe0] sm:$0xff]
    %v1104 = vld [vmem:[#allocation2 + $0xe8] sm:$0xff]
    %v1105 = vld [vmem:[#allocation2 + $0xf0] sm:$0xff]
    %v1106 = vld [vmem:[#allocation2 + $0xf8] sm:$0xff]
    %v1107 = vld [vmem:[#allocation2 + $0x100] sm:$0xff]
    %v1108 = vld [vmem:[#allocation2 + $0x108] sm:$0xff]
    %v1109 = vld [vmem:[#allocation2 + $0x110] sm:$0xff]
    %v1110 = vld [vmem:[#allocation2 + $0x118] sm:$0xff]
    %v1111 = vpack.c.bf16 %v1079, %v1075
    %v1112 = vpack.c.bf16 %v1080, %v1076
    %v1113 = vpack.c.bf16 %v1081, %v1077
    %v1114 = vpack.c.bf16 %v1082, %v1078
    %v1115 = vpack.c.bf16 %v1087, %v1083
    %v1116 = vpack.c.bf16 %v1088, %v1084
    %v1117 = vpack.c.bf16 %v1089, %v1085
    %v1118 = vpack.c.bf16 %v1090, %v1086
    %v1119 = vpack.c.bf16 %v1095, %v1091
    %v1120 = vpack.c.bf16 %v1096, %v1092
    %v1121 = vpack.c.bf16 %v1097, %v1093
    %v1122 = vpack.c.bf16 %v1098, %v1094
    %v1123 = vpack.c.bf16 %v1103, %v1099
    %v1124 = vpack.c.bf16 %v1104, %v1100
    %v1125 = vpack.c.bf16 %v1105, %v1101
    %v1126 = vpack.c.bf16 %v1106, %v1102
    %v1127 = vpack.c.bf16 %v1107, %v1107
    %v1128 = vpack.c.bf16 %v1108, %v1108
    %v1129 = vpack.c.bf16 %v1109, %v1109
    %v1130 = vpack.c.bf16 %v1110, %v1110
    %v1131 = vld [vmem:[#allocation12] sm:$0xf]
    %v1132 = vld [vmem:[%s9] sm:$0xff]
    %1134 = vset.pattern.permute.xlu0 0
    %1135 = vperm.xlu0 %1134, %v1132
    %v1136 = vpop.permute.xlu0 %1135
    %vm1138 = vcmask 588800
    %v1140 = vsel %vm1138, %v1131, 0
    %vm1142 = vcmask 1043456
    %v1144 = vsel %vm1142, %v1127, 0
    %v1147 = vsel %vm1142, %v1128, 0
    %v1150 = vsel %vm1142, %v1129, 0
    %v1153 = vsel %vm1142, %v1130, 0
    %1155 = vmatprep.subr.bf16.mxu0 0
    %1156 = vmatpush1.bf16.msra.mxu0 0
    %1157 = vmatprep.subr.bf16.mxu0 0
    %1158 = vmatpush1.bf16.msra.mxu0 0
    %1159 = vmatprep.subr.bf16.mxu0 0
    %1160 = vmatpush1.bf16.msra.mxu0 0
    %1161 = vmatprep.subr.bf16.mxu0 %v1147
    %1162 = vmatpush1.bf16.msra.mxu0 %v1144
    %1163 = vmatprep.subr.bf16.mxu0 %v1124
    %1164 = vmatpush1.bf16.msra.mxu0 %v1123
    %1165 = vmatprep.subr.bf16.mxu0 %v1120
    %1166 = vmatpush1.bf16.msra.mxu0 %v1119
    %1167 = vmatprep.subr.bf16.mxu0 %v1116
    %1168 = vmatpush1.bf16.msra.mxu0 %v1115
    %1169 = vmatprep.subr.bf16.mxu0 %v1112
    %1170 = vmatpush1.bf16.msra.mxu0 %v1111
    %1171 = vmatprep.subr.bf16.mxu0 0
    %1172 = vmatpush2.bf16.msra.mxu0 0
    %1173 = vmatprep.subr.bf16.mxu0 0
    %1174 = vmatpush2.bf16.msra.mxu0 0
    %1175 = vmatprep.subr.bf16.mxu0 0
    %1176 = vmatpush2.bf16.msra.mxu0 0
    %1177 = vmatprep.subr.bf16.mxu0 0
    %1178 = vmatpush2.bf16.msra.mxu0 0
    %1179 = vmatprep.subr.bf16.mxu0 0
    %1180 = vmatpush2.bf16.msra.mxu0 0
    %1181 = vmatprep.subr.bf16.mxu0 0
    %1182 = vmatpush2.bf16.msra.mxu0 0
    %1183 = vmatprep.subr.bf16.mxu0 0
    %1184 = vmatpush2.bf16.msra.mxu0 0
    %1185 = vmatprep.subr.bf16.mxu0 0
    %1186 = vmatpush2.bf16.msra.mxu0 0
    %1187 = vmatprep.mubr.bf16.mxu0 0
    %1188 = vmatmul.mubr.bf16.gmra.mxu0 %v1140
    %v1189 = vpop.f32.mrf.mxu0
    %v1190 = vadd.f32 %v1136, %v1189
    %v1191 = vpop.f32.mrf.mxu0
    %v1192 = vadd.f32 %v1136, %v1191
    %v1193 = vpop.f32.mrf.mxu0
    %v1194 = vpop.f32.mrf.mxu0
    %1195 = vdwg.mxu0
    %1196 = vmatprep.subr.bf16.mxu0 0
    %1197 = vmatpush1.bf16.msra.mxu0 0
    %1198 = vmatprep.subr.bf16.mxu0 0
    %1199 = vmatpush1.bf16.msra.mxu0 0
    %1200 = vmatprep.subr.bf16.mxu0 0
    %1201 = vmatpush1.bf16.msra.mxu0 0
    %1202 = vmatprep.subr.bf16.mxu0 %v1153
    %1203 = vmatpush1.bf16.msra.mxu0 %v1150
    %1204 = vmatprep.subr.bf16.mxu0 %v1126
    %1205 = vmatpush1.bf16.msra.mxu0 %v1125
    %1206 = vmatprep.subr.bf16.mxu0 %v1122
    %1207 = vmatpush1.bf16.msra.mxu0 %v1121
    %1208 = vmatprep.subr.bf16.mxu0 %v1118
    %1209 = vmatpush1.bf16.msra.mxu0 %v1117
    %1210 = vmatprep.subr.bf16.mxu0 %v1114
    %1211 = vmatpush1.bf16.msra.mxu0 %v1113
    %1212 = vmatprep.subr.bf16.mxu0 0
    %1213 = vmatpush2.bf16.msra.mxu0 0
    %1214 = vmatprep.subr.bf16.mxu0 0
    %1215 = vmatpush2.bf16.msra.mxu0 0
    %1216 = vmatprep.subr.bf16.mxu0 0
    %1217 = vmatpush2.bf16.msra.mxu0 0
    %1218 = vmatprep.subr.bf16.mxu0 0
    %1219 = vmatpush2.bf16.msra.mxu0 0
    %1220 = vmatprep.subr.bf16.mxu0 0
    %1221 = vmatpush2.bf16.msra.mxu0 0
    %1222 = vmatprep.subr.bf16.mxu0 0
    %1223 = vmatpush2.bf16.msra.mxu0 0
    %1224 = vmatprep.subr.bf16.mxu0 0
    %1225 = vmatpush2.bf16.msra.mxu0 0
    %1226 = vmatprep.subr.bf16.mxu0 0
    %1227 = vmatpush2.bf16.msra.mxu0 0
    %1228 = vmatprep.mubr.bf16.mxu0 0
    %1229 = vmatmul.mubr.bf16.gmra.mxu0 %v1140
    %v1230 = vpop.f32.mrf.mxu0
    %v1231 = vadd.f32 %v1136, %v1230
    %v1232 = vpop.f32.mrf.mxu0
    %v1233 = vadd.f32 %v1136, %v1232
    %v1234 = vpop.f32.mrf.mxu0
    %v1235 = vpop.f32.mrf.mxu0
    %1236 = vdwg.mxu0
    %v1237 = vmul.f32 %v1190, %v1190
    %v1238 = vmul.f32 %v1192, %v1192
    %v1239 = vmul.f32 %v1231, %v1231
    %v1240 = vmul.f32 %v1233, %v1233
    %v1241 = vmul.f32 %v1190, %v611
    %v1242 = vmul.f32 %v1192, %v612
    %v1243 = vmul.f32 %v1231, %v613
    %v1244 = vmul.f32 %v1233, %v614
    %v1245 = vadd.f32 %v1241, %v1242
    %v1246 = vadd.f32 %v1245, %v1243
    %v1247 = vadd.f32 %v1246, %v1244
    %1248 = vadd.xlane.f32.xlu0 %v1247
    %v1249 = vpop.xlane.xlu0 %1248
    %v1250 = vmul.f32 %v1249, 0.00390625
    %v1251 = vmul.f32 %v1237, %v611
    %v1252 = vmul.f32 %v1238, %v612
    %v1253 = vmul.f32 %v1239, %v613
    %v1254 = vmul.f32 %v1240, %v614
    %v1255 = vadd.f32 %v1251, %v1252
    %v1256 = vadd.f32 %v1255, %v1253
    %v1257 = vadd.f32 %v1256, %v1254
    %1258 = vadd.xlane.f32.xlu0 %v1257
    %v1259 = vpop.xlane.xlu0 %1258
    %v1260 = vmul.f32 %v1259, 0.00390625
    %v1261 = vmul.f32 %v1250, %v1250
    %v1262 = vsub.f32 %v1260, %v1261
    %v1263 = vadd.f32 %v1262, 1e-05
    %v1264 = vrsqrt.pop %v1263
    %v1265 = vmul.f32 %v1264, %v579
    %v1266 = vmul.f32 %v1250, %v1265
    %v1267 = vsub.f32 %v578, %v1266
    %1269 = vset.pattern.permute.xlu0 0
    %1270 = vperm.xlu0 %1269, %v1265
    %v1271 = vpop.permute.xlu0 %1270
    %v1273 = vmul.f32 %v1271, %v611
    %v1274 = vmul.f32 %v1271, %v612
    %v1275 = vmul.f32 %v1271, %v613
    %v1276 = vmul.f32 %v1271, %v614
    %1278 = vset.pattern.permute.xlu0 0
    %1279 = vperm.xlu0 %1278, %v1267
    %v1280 = vpop.permute.xlu0 %1279
    %v1282 = vmul.f32 %v1280, %v611
    %v1283 = vmul.f32 %v1280, %v612
    %v1284 = vmul.f32 %v1280, %v613
    %v1285 = vmul.f32 %v1280, %v614
    %v1286 = vmul.f32 %v1190, %v631
    %v1287 = vmul.f32 %v1192, %v632
    %v1288 = vmul.f32 %v1231, %v633
    %v1289 = vmul.f32 %v1233, %v634
    %v1290 = vadd.f32 %v1286, %v1287
    %v1291 = vadd.f32 %v1290, %v1288
    %v1292 = vadd.f32 %v1291, %v1289
    %1293 = vadd.xlane.f32.xlu0 %v1292
    %v1294 = vpop.xlane.xlu0 %1293
    %v1295 = vmul.f32 %v1294, 0.00390625
    %v1296 = vmul.f32 %v1237, %v631
    %v1297 = vmul.f32 %v1238, %v632
    %v1298 = vmul.f32 %v1239, %v633
    %v1299 = vmul.f32 %v1240, %v634
    %v1300 = vadd.f32 %v1296, %v1297
    %v1301 = vadd.f32 %v1300, %v1298
    %v1302 = vadd.f32 %v1301, %v1299
    %1303 = vadd.xlane.f32.xlu0 %v1302
    %v1304 = vpop.xlane.xlu0 %1303
    %v1305 = vmul.f32 %v1304, 0.00390625
    %v1306 = vmul.f32 %v1295, %v1295
    %v1307 = vsub.f32 %v1305, %v1306
    %v1308 = vadd.f32 %v1307, 1e-05
    %v1309 = vrsqrt.pop %v1308
    %v1310 = vmul.f32 %v1309, %v579
    %v1311 = vmul.f32 %v1295, %v1310
    %v1312 = vsub.f32 %v578, %v1311
    %1314 = vset.pattern.permute.xlu0 1
    %1315 = vperm.xlu0 %1314, %v1310
    %v1316 = vpop.permute.xlu0 %1315
    %v1318 = vmul.f32 %v1316, %v631
    %v1319 = vmul.f32 %v1316, %v632
    %v1320 = vmul.f32 %v1316, %v633
    %v1321 = vmul.f32 %v1316, %v634
    %1323 = vset.pattern.permute.xlu0 1
    %1324 = vperm.xlu0 %1323, %v1312
    %v1325 = vpop.permute.xlu0 %1324
    %v1327 = vmul.f32 %v1325, %v631
    %v1328 = vmul.f32 %v1325, %v632
    %v1329 = vmul.f32 %v1325, %v633
    %v1330 = vmul.f32 %v1325, %v634
    %v1331 = vadd.f32 %v1273, %v1318
    %v1332 = vadd.f32 %v1274, %v1319
    %v1333 = vadd.f32 %v1275, %v1320
    %v1334 = vadd.f32 %v1276, %v1321
    %v1335 = vadd.f32 %v1282, %v1327
    %v1336 = vadd.f32 %v1283, %v1328
    %v1337 = vadd.f32 %v1284, %v1329
    %v1338 = vadd.f32 %v1285, %v1330
    %v1339 = vmul.f32 %v1190, %v1331
    %v1340 = vmul.f32 %v1192, %v1332
    %v1341 = vmul.f32 %v1231, %v1333
    %v1342 = vmul.f32 %v1233, %v1334
    %v1343 = vadd.f32 %v1339, %v1335
    %v1344 = vadd.f32 %v1340, %v1336
    %v1345 = vadd.f32 %v1341, %v1337
    %v1346 = vadd.f32 %v1342, %v1338
    %1347 = vrot.lane.b32.xlu0 %v1343, 17
    %v1348 = vpop.permute.xlu0 %1347
    %1349 = vrot.lane.b32.xlu0 %v1344, 17
    %v1350 = vpop.permute.xlu0 %1349
    %1351 = vrot.lane.b32.xlu0 %v1345, 17
    %v1352 = vpop.permute.xlu0 %1351
    %1353 = vrot.lane.b32.xlu0 %v1346, 17
    %v1354 = vpop.permute.xlu0 %1353
    %v1355 = vsel %vm911, %v1352, %v1354
    %v1356 = vsel %vm911, %v1350, %v1352
    %v1357 = vsel %vm911, %v1348, %v1350
    %v1358 = vsel %vm911, %v1354, %v1348
    %v1359 = vmul.f32 %v1358, %v671
    %v1360 = vmul.f32 %v1357, %v672
    %v1361 = vmul.f32 %v1356, %v673
    %v1362 = vmul.f32 %v1355, %v674
    %1363 = vst [vmem:[#allocation2] sm:$0xff] %v1359
    %1364 = vst [vmem:[#allocation2 + $0x8] sm:$0xff] %v1360
    %1365 = vst [vmem:[#allocation2 + $0x10] sm:$0xff] %v1361
    %1366 = vst [vmem:[#allocation2 + $0x18] sm:$0xff] %v1362
    %1367 = vrot.lane.b32.xlu0 %v1343, 16
    %v1368 = vpop.permute.xlu0 %1367
    %1369 = vrot.lane.b32.xlu0 %v1344, 16
    %v1370 = vpop.permute.xlu0 %1369
    %1371 = vrot.lane.b32.xlu0 %v1345, 16
    %v1372 = vpop.permute.xlu0 %1371
    %1373 = vrot.lane.b32.xlu0 %v1346, 16
    %v1374 = vpop.permute.xlu0 %1373
    %v1375 = vsel %vm932, %v1372, %v1374
    %v1376 = vsel %vm932, %v1370, %v1372
    %v1377 = vsel %vm932, %v1368, %v1370
    %v1378 = vsel %vm932, %v1374, %v1368
    %v1379 = vmul.f32 %v1378, %v695
    %v1380 = vmul.f32 %v1377, %v696
    %v1381 = vmul.f32 %v1376, %v697
    %v1382 = vmul.f32 %v1375, %v698
    %1383 = vst [vmem:[#allocation2 + $0x20] sm:$0xff] %v1379
    %1384 = vst [vmem:[#allocation2 + $0x28] sm:$0xff] %v1380
    %1385 = vst [vmem:[#allocation2 + $0x30] sm:$0xff] %v1381
    %1386 = vst [vmem:[#allocation2 + $0x38] sm:$0xff] %v1382
    %1387 = vrot.lane.b32.xlu0 %v1343, 15
    %v1388 = vpop.permute.xlu0 %1387
    %1389 = vrot.lane.b32.xlu0 %v1344, 15
    %v1390 = vpop.permute.xlu0 %1389
    %1391 = vrot.lane.b32.xlu0 %v1345, 15
    %v1392 = vpop.permute.xlu0 %1391
    %1393 = vrot.lane.b32.xlu0 %v1346, 15
    %v1394 = vpop.permute.xlu0 %1393
    %v1395 = vsel %vm953, %v1392, %v1394
    %v1396 = vsel %vm953, %v1390, %v1392
    %v1397 = vsel %vm953, %v1388, %v1390
    %v1398 = vsel %vm953, %v1394, %v1388
    %v1399 = vmul.f32 %v1398, %v723
    %v1400 = vmul.f32 %v1397, %v724
    %v1401 = vmul.f32 %v1396, %v725
    %v1402 = vmul.f32 %v1395, %v726
    %1403 = vst [vmem:[#allocation2 + $0x40] sm:$0xff] %v1399
    %1404 = vst [vmem:[#allocation2 + $0x48] sm:$0xff] %v1400
    %1405 = vst [vmem:[#allocation2 + $0x50] sm:$0xff] %v1401
    %1406 = vst [vmem:[#allocation2 + $0x58] sm:$0xff] %v1402
    %1407 = vrot.lane.b32.xlu0 %v1343, 1
    %v1408 = vpop.permute.xlu0 %1407
    %1409 = vrot.lane.b32.xlu0 %v1344, 1
    %v1410 = vpop.permute.xlu0 %1409
    %1411 = vrot.lane.b32.xlu0 %v1345, 1
    %v1412 = vpop.permute.xlu0 %1411
    %1413 = vrot.lane.b32.xlu0 %v1346, 1
    %v1414 = vpop.permute.xlu0 %1413
    %v1415 = vsel %vm974, %v1412, %v1414
    %v1416 = vsel %vm974, %v1410, %v1412
    %v1417 = vsel %vm974, %v1408, %v1410
    %v1418 = vsel %vm974, %v1414, %v1408
    %v1419 = vmul.f32 %v1418, %v751
    %v1420 = vmul.f32 %v1417, %v752
    %v1421 = vmul.f32 %v1416, %v753
    %v1422 = vmul.f32 %v1415, %v754
    %1423 = vst [vmem:[#allocation2 + $0x60] sm:$0xff] %v1419
    %1424 = vst [vmem:[#allocation2 + $0x68] sm:$0xff] %v1420
    %1425 = vst [vmem:[#allocation2 + $0x70] sm:$0xff] %v1421
    %1426 = vst [vmem:[#allocation2 + $0x78] sm:$0xff] %v1422
    %1427 = vst [vmem:[#allocation2 + $0x80] sm:$0xff] %v1343
    %1428 = vst [vmem:[#allocation2 + $0x88] sm:$0xff] %v1344
    %1429 = vst [vmem:[#allocation2 + $0x90] sm:$0xff] %v1345
    %1430 = vst [vmem:[#allocation2 + $0x98] sm:$0xff] %v1346
    %1431 = vrot.lane.b32.xlu0 %v1343, 127
    %v1432 = vpop.permute.xlu0 %1431
    %1433 = vrot.lane.b32.xlu0 %v1344, 127
    %v1434 = vpop.permute.xlu0 %1433
    %1435 = vrot.lane.b32.xlu0 %v1345, 127
    %v1436 = vpop.permute.xlu0 %1435
    %1437 = vrot.lane.b32.xlu0 %v1346, 127
    %v1438 = vpop.permute.xlu0 %1437
    %v1439 = vsel %vm999, %v1436, %v1438
    %v1440 = vsel %vm999, %v1434, %v1436
    %v1441 = vsel %vm999, %v1432, %v1434
    %v1442 = vsel %vm999, %v1438, %v1432
    %v1443 = vmul.f32 %v1441, %v767
    %v1444 = vmul.f32 %v1440, %v768
    %v1445 = vmul.f32 %v1439, %v769
    %v1446 = vmul.f32 %v1442, %v770
    %1447 = vst [vmem:[#allocation2 + $0xa0] sm:$0xff] %v1443
    %1448 = vst [vmem:[#allocation2 + $0xa8] sm:$0xff] %v1444
    %1449 = vst [vmem:[#allocation2 + $0xb0] sm:$0xff] %v1445
    %1450 = vst [vmem:[#allocation2 + $0xb8] sm:$0xff] %v1446
    %1451 = vrot.lane.b32.xlu0 %v1343, 113
    %v1452 = vpop.permute.xlu0 %1451
    %1453 = vrot.lane.b32.xlu0 %v1344, 113
    %v1454 = vpop.permute.xlu0 %1453
    %1455 = vrot.lane.b32.xlu0 %v1345, 113
    %v1456 = vpop.permute.xlu0 %1455
    %1457 = vrot.lane.b32.xlu0 %v1346, 113
    %v1458 = vpop.permute.xlu0 %1457
    %v1459 = vsel %vm1020, %v1456, %v1458
    %v1460 = vsel %vm1020, %v1454, %v1456
    %v1461 = vsel %vm1020, %v1452, %v1454
    %v1462 = vsel %vm1020, %v1458, %v1452
    %v1463 = vmul.f32 %v1461, %v795
    %v1464 = vmul.f32 %v1460, %v796
    %v1465 = vmul.f32 %v1459, %v797
    %v1466 = vmul.f32 %v1462, %v798
    %1467 = vst [vmem:[#allocation2 + $0xc0] sm:$0xff] %v1463
    %1468 = vst [vmem:[#allocation2 + $0xc8] sm:$0xff] %v1464
    %1469 = vst [vmem:[#allocation2 + $0xd0] sm:$0xff] %v1465
    %1470 = vst [vmem:[#allocation2 + $0xd8] sm:$0xff] %v1466
    %1471 = vrot.lane.b32.xlu0 %v1343, 112
    %v1472 = vpop.permute.xlu0 %1471
    %1473 = vrot.lane.b32.xlu0 %v1344, 112
    %v1474 = vpop.permute.xlu0 %1473
    %1475 = vrot.lane.b32.xlu0 %v1345, 112
    %v1476 = vpop.permute.xlu0 %1475
    %1477 = vrot.lane.b32.xlu0 %v1346, 112
    %v1478 = vpop.permute.xlu0 %1477
    %v1479 = vsel %vm1041, %v1476, %v1478
    %v1480 = vsel %vm1041, %v1474, %v1476
    %v1481 = vsel %vm1041, %v1472, %v1474
    %v1482 = vsel %vm1041, %v1478, %v1472
    %v1483 = vmul.f32 %v1481, %v811
    %v1484 = vmul.f32 %v1480, %v812
    %v1485 = vmul.f32 %v1479, %v813
    %v1486 = vmul.f32 %v1482, %v814
    %1487 = vst [vmem:[#allocation2 + $0xe0] sm:$0xff] %v1483
    %1488 = vst [vmem:[#allocation2 + $0xe8] sm:$0xff] %v1484
    %1489 = vst [vmem:[#allocation2 + $0xf0] sm:$0xff] %v1485
    %1490 = vst [vmem:[#allocation2 + $0xf8] sm:$0xff] %v1486
    %1491 = vrot.lane.b32.xlu0 %v1343, 111
    %v1492 = vpop.permute.xlu0 %1491
    %1493 = vrot.lane.b32.xlu0 %v1344, 111
    %v1494 = vpop.permute.xlu0 %1493
    %1495 = vrot.lane.b32.xlu0 %v1345, 111
    %v1496 = vpop.permute.xlu0 %1495
    %1497 = vrot.lane.b32.xlu0 %v1346, 111
    %v1498 = vpop.permute.xlu0 %1497
    %v1499 = vsel %vm1062, %v1496, %v1498
    %v1500 = vsel %vm1062, %v1494, %v1496
    %v1501 = vsel %vm1062, %v1492, %v1494
    %v1502 = vsel %vm1062, %v1498, %v1492
    %v1503 = vmul.f32 %v1501, %v827
    %v1504 = vmul.f32 %v1500, %v828
    %v1505 = vmul.f32 %v1499, %v829
    %v1506 = vmul.f32 %v1502, %v830
    %1507 = vst [vmem:[#allocation2 + $0x100] sm:$0xff] %v1503
    %1508 = vst [vmem:[#allocation2 + $0x108] sm:$0xff] %v1504
    %1509 = vst [vmem:[#allocation2 + $0x110] sm:$0xff] %v1505
    %1510 = vst [vmem:[#allocation2 + $0x118] sm:$0xff] %v1506
    %v1511 = vld [vmem:[#allocation2] sm:$0xff]
    %v1512 = vld [vmem:[#allocation2 + $0x8] sm:$0xff]
    %v1513 = vld [vmem:[#allocation2 + $0x10] sm:$0xff]
    %v1514 = vld [vmem:[#allocation2 + $0x18] sm:$0xff]
    %v1515 = vld [vmem:[#allocation2 + $0x20] sm:$0xff]
    %v1516 = vld [vmem:[#allocation2 + $0x28] sm:$0xff]
    %v1517 = vld [vmem:[#allocation2 + $0x30] sm:$0xff]
    %v1518 = vld [vmem:[#allocation2 + $0x38] sm:$0xff]
    %v1519 = vld [vmem:[#allocation2 + $0x40] sm:$0xff]
    %v1520 = vld [vmem:[#allocation2 + $0x48] sm:$0xff]
    %v1521 = vld [vmem:[#allocation2 + $0x50] sm:$0xff]
    %v1522 = vld [vmem:[#allocation2 + $0x58] sm:$0xff]
    %v1523 = vld [vmem:[#allocation2 + $0x60] sm:$0xff]
    %v1524 = vld [vmem:[#allocation2 + $0x68] sm:$0xff]
    %v1525 = vld [vmem:[#allocation2 + $0x70] sm:$0xff]
    %v1526 = vld [vmem:[#allocation2 + $0x78] sm:$0xff]
    %v1527 = vld [vmem:[#allocation2 + $0x80] sm:$0xff]
    %v1528 = vld [vmem:[#allocation2 + $0x88] sm:$0xff]
    %v1529 = vld [vmem:[#allocation2 + $0x90] sm:$0xff]
    %v1530 = vld [vmem:[#allocation2 + $0x98] sm:$0xff]
    %v1531 = vld [vmem:[#allocation2 + $0xa0] sm:$0xff]
    %v1532 = vld [vmem:[#allocation2 + $0xa8] sm:$0xff]
    %v1533 = vld [vmem:[#allocation2 + $0xb0] sm:$0xff]
    %v1534 = vld [vmem:[#allocation2 + $0xb8] sm:$0xff]
    %v1535 = vld [vmem:[#allocation2 + $0xc0] sm:$0xff]
    %v1536 = vld [vmem:[#allocation2 + $0xc8] sm:$0xff]
    %v1537 = vld [vmem:[#allocation2 + $0xd0] sm:$0xff]
    %v1538 = vld [vmem:[#allocation2 + $0xd8] sm:$0xff]
    %v1539 = vld [vmem:[#allocation2 + $0xe0] sm:$0xff]
    %v1540 = vld [vmem:[#allocation2 + $0xe8] sm:$0xff]
    %v1541 = vld [vmem:[#allocation2 + $0xf0] sm:$0xff]
    %v1542 = vld [vmem:[#allocation2 + $0xf8] sm:$0xff]
    %v1543 = vld [vmem:[#allocation2 + $0x100] sm:$0xff]
    %v1544 = vld [vmem:[#allocation2 + $0x108] sm:$0xff]
    %v1545 = vld [vmem:[#allocation2 + $0x110] sm:$0xff]
    %v1546 = vld [vmem:[#allocation2 + $0x118] sm:$0xff]
    %v1547 = vpack.c.bf16 %v1515, %v1511
    %v1548 = vpack.c.bf16 %v1516, %v1512
    %v1549 = vpack.c.bf16 %v1517, %v1513
    %v1550 = vpack.c.bf16 %v1518, %v1514
    %v1551 = vpack.c.bf16 %v1523, %v1519
    %v1552 = vpack.c.bf16 %v1524, %v1520
    %v1553 = vpack.c.bf16 %v1525, %v1521
    %v1554 = vpack.c.bf16 %v1526, %v1522
    %v1555 = vpack.c.bf16 %v1531, %v1527
    %v1556 = vpack.c.bf16 %v1532, %v1528
    %v1557 = vpack.c.bf16 %v1533, %v1529
    %v1558 = vpack.c.bf16 %v1534, %v1530
    %v1559 = vpack.c.bf16 %v1539, %v1535
    %v1560 = vpack.c.bf16 %v1540, %v1536
    %v1561 = vpack.c.bf16 %v1541, %v1537
    %v1562 = vpack.c.bf16 %v1542, %v1538
    %v1563 = vpack.c.bf16 %v1543, %v1543
    %v1564 = vpack.c.bf16 %v1544, %v1544
    %v1565 = vpack.c.bf16 %v1545, %v1545
    %v1566 = vpack.c.bf16 %v1546, %v1546
    %v1567 = vld [vmem:[%s10] sm:$0xf]
    %v1568 = vld [vmem:[%s11] sm:$0xff]
    %1570 = vset.pattern.permute.xlu0 0
    %1571 = vperm.xlu0 %1570, %v1568
    %v1572 = vpop.permute.xlu0 %1571
    %v1575 = vsel %vm1138, %v1567, 0
    %v1578 = vsel %vm1142, %v1563, 0
    %v1581 = vsel %vm1142, %v1564, 0
    %v1584 = vsel %vm1142, %v1565, 0
    %v1587 = vsel %vm1142, %v1566, 0
    %1589 = vmatprep.subr.bf16.mxu0 0
    %1590 = vmatpush1.bf16.msra.mxu0 0
    %1591 = vmatprep.subr.bf16.mxu0 0
    %1592 = vmatpush1.bf16.msra.mxu0 0
    %1593 = vmatprep.subr.bf16.mxu0 0
    %1594 = vmatpush1.bf16.msra.mxu0 0
    %1595 = vmatprep.subr.bf16.mxu0 %v1581
    %1596 = vmatpush1.bf16.msra.mxu0 %v1578
    %1597 = vmatprep.subr.bf16.mxu0 %v1560
    %1598 = vmatpush1.bf16.msra.mxu0 %v1559
    %1599 = vmatprep.subr.bf16.mxu0 %v1556
    %1600 = vmatpush1.bf16.msra.mxu0 %v1555
    %1601 = vmatprep.subr.bf16.mxu0 %v1552
    %1602 = vmatpush1.bf16.msra.mxu0 %v1551
    %1603 = vmatprep.subr.bf16.mxu0 %v1548
    %1604 = vmatpush1.bf16.msra.mxu0 %v1547
    %1605 = vmatprep.subr.bf16.mxu0 0
    %1606 = vmatpush2.bf16.msra.mxu0 0
    %1607 = vmatprep.subr.bf16.mxu0 0
    %1608 = vmatpush2.bf16.msra.mxu0 0
    %1609 = vmatprep.subr.bf16.mxu0 0
    %1610 = vmatpush2.bf16.msra.mxu0 0
    %1611 = vmatprep.subr.bf16.mxu0 0
    %1612 = vmatpush2.bf16.msra.mxu0 0
    %1613 = vmatprep.subr.bf16.mxu0 0
    %1614 = vmatpush2.bf16.msra.mxu0 0
    %1615 = vmatprep.subr.bf16.mxu0 0
    %1616 = vmatpush2.bf16.msra.mxu0 0
    %1617 = vmatprep.subr.bf16.mxu0 0
    %1618 = vmatpush2.bf16.msra.mxu0 0
    %1619 = vmatprep.subr.bf16.mxu0 0
    %1620 = vmatpush2.bf16.msra.mxu0 0
    %1621 = vmatprep.mubr.bf16.mxu0 0
    %1622 = vmatmul.mubr.bf16.gmra.mxu0 %v1575
    %v1623 = vpop.f32.mrf.mxu0
    %v1624 = vadd.f32 %v1572, %v1623
    %v1625 = vpop.f32.mrf.mxu0
    %v1626 = vadd.f32 %v1572, %v1625
    %v1627 = vpop.f32.mrf.mxu0
    %v1628 = vpop.f32.mrf.mxu0
    %1629 = vdwg.mxu0
    %1630 = vmatprep.subr.bf16.mxu0 0
    %1631 = vmatpush1.bf16.msra.mxu0 0
    %1632 = vmatprep.subr.bf16.mxu0 0
    %1633 = vmatpush1.bf16.msra.mxu0 0
    %1634 = vmatprep.subr.bf16.mxu0 0
    %1635 = vmatpush1.bf16.msra.mxu0 0
    %1636 = vmatprep.subr.bf16.mxu0 %v1587
    %1637 = vmatpush1.bf16.msra.mxu0 %v1584
    %1638 = vmatprep.subr.bf16.mxu0 %v1562
    %1639 = vmatpush1.bf16.msra.mxu0 %v1561
    %1640 = vmatprep.subr.bf16.mxu0 %v1558
    %1641 = vmatpush1.bf16.msra.mxu0 %v1557
    %1642 = vmatprep.subr.bf16.mxu0 %v1554
    %1643 = vmatpush1.bf16.msra.mxu0 %v1553
    %1644 = vmatprep.subr.bf16.mxu0 %v1550
    %1645 = vmatpush1.bf16.msra.mxu0 %v1549
    %1646 = vmatprep.subr.bf16.mxu0 0
    %1647 = vmatpush2.bf16.msra.mxu0 0
    %1648 = vmatprep.subr.bf16.mxu0 0
    %1649 = vmatpush2.bf16.msra.mxu0 0
    %1650 = vmatprep.subr.bf16.mxu0 0
    %1651 = vmatpush2.bf16.msra.mxu0 0
    %1652 = vmatprep.subr.bf16.mxu0 0
    %1653 = vmatpush2.bf16.msra.mxu0 0
    %1654 = vmatprep.subr.bf16.mxu0 0
    %1655 = vmatpush2.bf16.msra.mxu0 0
    %1656 = vmatprep.subr.bf16.mxu0 0
    %1657 = vmatpush2.bf16.msra.mxu0 0
    %1658 = vmatprep.subr.bf16.mxu0 0
    %1659 = vmatpush2.bf16.msra.mxu0 0
    %1660 = vmatprep.subr.bf16.mxu0 0
    %1661 = vmatpush2.bf16.msra.mxu0 0
    %1662 = vmatprep.mubr.bf16.mxu0 0
    %1663 = vmatmul.mubr.bf16.gmra.mxu0 %v1575
    %v1664 = vpop.f32.mrf.mxu0
    %v1665 = vadd.f32 %v1572, %v1664
    %v1666 = vpop.f32.mrf.mxu0
    %v1667 = vadd.f32 %v1572, %v1666
    %v1668 = vpop.f32.mrf.mxu0
    %v1669 = vpop.f32.mrf.mxu0
    %1670 = vdwg.mxu0
    %v1671 = vmul.f32 %v1624, %v1624
    %v1672 = vmul.f32 %v1626, %v1626
    %v1673 = vmul.f32 %v1665, %v1665
    %v1674 = vmul.f32 %v1667, %v1667
    %v1675 = vmul.f32 %v1624, %v611
    %v1676 = vmul.f32 %v1626, %v612
    %v1677 = vmul.f32 %v1665, %v613
    %v1678 = vmul.f32 %v1667, %v614
    %v1679 = vadd.f32 %v1675, %v1676
    %v1680 = vadd.f32 %v1679, %v1677
    %v1681 = vadd.f32 %v1680, %v1678
    %1682 = vadd.xlane.f32.xlu0 %v1681
    %v1683 = vpop.xlane.xlu0 %1682
    %v1684 = vmul.f32 %v1683, 0.00390625
    %v1685 = vmul.f32 %v1671, %v611
    %v1686 = vmul.f32 %v1672, %v612
    %v1687 = vmul.f32 %v1673, %v613
    %v1688 = vmul.f32 %v1674, %v614
    %v1689 = vadd.f32 %v1685, %v1686
    %v1690 = vadd.f32 %v1689, %v1687
    %v1691 = vadd.f32 %v1690, %v1688
    %1692 = vadd.xlane.f32.xlu0 %v1691
    %v1693 = vpop.xlane.xlu0 %1692
    %v1694 = vmul.f32 %v1693, 0.00390625
    %v1695 = vmul.f32 %v1684, %v1684
    %v1696 = vsub.f32 %v1694, %v1695
    %v1697 = vadd.f32 %v1696, 1e-05
    %v1698 = vrsqrt.pop %v1697
    %v1699 = vmul.f32 %v1698, %v581
    %v1700 = vmul.f32 %v1684, %v1699
    %v1701 = vsub.f32 %v580, %v1700
    %1703 = vset.pattern.permute.xlu0 0
    %1704 = vperm.xlu0 %1703, %v1699
    %v1705 = vpop.permute.xlu0 %1704
    %v1707 = vmul.f32 %v1705, %v611
    %v1708 = vmul.f32 %v1705, %v612
    %v1709 = vmul.f32 %v1705, %v613
    %v1710 = vmul.f32 %v1705, %v614
    %1712 = vset.pattern.permute.xlu0 0
    %1713 = vperm.xlu0 %1712, %v1701
    %v1714 = vpop.permute.xlu0 %1713
    %v1716 = vmul.f32 %v1714, %v611
    %v1717 = vmul.f32 %v1714, %v612
    %v1718 = vmul.f32 %v1714, %v613
    %v1719 = vmul.f32 %v1714, %v614
    %v1720 = vmul.f32 %v1624, %v631
    %v1721 = vmul.f32 %v1626, %v632
    %v1722 = vmul.f32 %v1665, %v633
    %v1723 = vmul.f32 %v1667, %v634
    %v1724 = vadd.f32 %v1720, %v1721
    %v1725 = vadd.f32 %v1724, %v1722
    %v1726 = vadd.f32 %v1725, %v1723
    %1727 = vadd.xlane.f32.xlu0 %v1726
    %v1728 = vpop.xlane.xlu0 %1727
    %v1729 = vmul.f32 %v1728, 0.00390625
    %v1730 = vmul.f32 %v1671, %v631
    %v1731 = vmul.f32 %v1672, %v632
    %v1732 = vmul.f32 %v1673, %v633
    %v1733 = vmul.f32 %v1674, %v634
    %v1734 = vadd.f32 %v1730, %v1731
    %v1735 = vadd.f32 %v1734, %v1732
    %v1736 = vadd.f32 %v1735, %v1733
    %1737 = vadd.xlane.f32.xlu0 %v1736
    %v1738 = vpop.xlane.xlu0 %1737
    %v1739 = vmul.f32 %v1738, 0.00390625
    %v1740 = vmul.f32 %v1729, %v1729
    %v1741 = vsub.f32 %v1739, %v1740
    %v1742 = vadd.f32 %v1741, 1e-05
    %v1743 = vrsqrt.pop %v1742
    %v1744 = vmul.f32 %v1743, %v581
    %v1745 = vmul.f32 %v1729, %v1744
    %v1746 = vsub.f32 %v580, %v1745
    %1748 = vset.pattern.permute.xlu0 1
    %1749 = vperm.xlu0 %1748, %v1744
    %v1750 = vpop.permute.xlu0 %1749
    %v1752 = vmul.f32 %v1750, %v631
    %v1753 = vmul.f32 %v1750, %v632
    %v1754 = vmul.f32 %v1750, %v633
    %v1755 = vmul.f32 %v1750, %v634
    %1757 = vset.pattern.permute.xlu0 1
    %1758 = vperm.xlu0 %1757, %v1746
    %v1759 = vpop.permute.xlu0 %1758
    %v1761 = vmul.f32 %v1759, %v631
    %v1762 = vmul.f32 %v1759, %v632
    %v1763 = vmul.f32 %v1759, %v633
    %v1764 = vmul.f32 %v1759, %v634
    %v1765 = vadd.f32 %v1707, %v1752
    %v1766 = vadd.f32 %v1708, %v1753
    %v1767 = vadd.f32 %v1709, %v1754
    %v1768 = vadd.f32 %v1710, %v1755
    %v1769 = vadd.f32 %v1716, %v1761
    %v1770 = vadd.f32 %v1717, %v1762
    %v1771 = vadd.f32 %v1718, %v1763
    %v1772 = vadd.f32 %v1719, %v1764
    %v1773 = vmul.f32 %v1624, %v1765
    %v1774 = vmul.f32 %v1626, %v1766
    %v1775 = vmul.f32 %v1665, %v1767
    %v1776 = vmul.f32 %v1667, %v1768
    %v1777 = vadd.f32 %v1773, %v1769
    %v1778 = vadd.f32 %v1774, %v1770
    %v1779 = vadd.f32 %v1775, %v1771
    %v1780 = vadd.f32 %v1776, %v1772
    %1781 = vrot.lane.b32.xlu0 %v1777, 17
    %v1782 = vpop.permute.xlu0 %1781
    %1783 = vrot.lane.b32.xlu0 %v1778, 17
    %v1784 = vpop.permute.xlu0 %1783
    %1785 = vrot.lane.b32.xlu0 %v1779, 17
    %v1786 = vpop.permute.xlu0 %1785
    %1787 = vrot.lane.b32.xlu0 %v1780, 17
    %v1788 = vpop.permute.xlu0 %1787
    %v1789 = vsel %vm911, %v1786, %v1788
    %v1790 = vsel %vm911, %v1784, %v1786
    %v1791 = vsel %vm911, %v1782, %v1784
    %v1792 = vsel %vm911, %v1788, %v1782
    %v1793 = vmul.f32 %v1792, %v671
    %v1794 = vmul.f32 %v1791, %v672
    %v1795 = vmul.f32 %v1790, %v673
    %v1796 = vmul.f32 %v1789, %v674
    %1797 = vst [vmem:[#allocation2] sm:$0xff] %v1793
    %1798 = vst [vmem:[#allocation2 + $0x8] sm:$0xff] %v1794
    %1799 = vst [vmem:[#allocation2 + $0x10] sm:$0xff] %v1795
    %1800 = vst [vmem:[#allocation2 + $0x18] sm:$0xff] %v1796
    %1801 = vrot.lane.b32.xlu0 %v1777, 16
    %v1802 = vpop.permute.xlu0 %1801
    %1803 = vrot.lane.b32.xlu0 %v1778, 16
    %v1804 = vpop.permute.xlu0 %1803
    %1805 = vrot.lane.b32.xlu0 %v1779, 16
    %v1806 = vpop.permute.xlu0 %1805
    %1807 = vrot.lane.b32.xlu0 %v1780, 16
    %v1808 = vpop.permute.xlu0 %1807
    %v1809 = vsel %vm932, %v1806, %v1808
    %v1810 = vsel %vm932, %v1804, %v1806
    %v1811 = vsel %vm932, %v1802, %v1804
    %v1812 = vsel %vm932, %v1808, %v1802
    %v1813 = vmul.f32 %v1812, %v695
    %v1814 = vmul.f32 %v1811, %v696
    %v1815 = vmul.f32 %v1810, %v697
    %v1816 = vmul.f32 %v1809, %v698
    %1817 = vst [vmem:[#allocation2 + $0x20] sm:$0xff] %v1813
    %1818 = vst [vmem:[#allocation2 + $0x28] sm:$0xff] %v1814
    %1819 = vst [vmem:[#allocation2 + $0x30] sm:$0xff] %v1815
    %1820 = vst [vmem:[#allocation2 + $0x38] sm:$0xff] %v1816
    %1821 = vrot.lane.b32.xlu0 %v1777, 15
    %v1822 = vpop.permute.xlu0 %1821
    %1823 = vrot.lane.b32.xlu0 %v1778, 15
    %v1824 = vpop.permute.xlu0 %1823
    %1825 = vrot.lane.b32.xlu0 %v1779, 15
    %v1826 = vpop.permute.xlu0 %1825
    %1827 = vrot.lane.b32.xlu0 %v1780, 15
    %v1828 = vpop.permute.xlu0 %1827
    %v1829 = vsel %vm953, %v1826, %v1828
    %v1830 = vsel %vm953, %v1824, %v1826
    %v1831 = vsel %vm953, %v1822, %v1824
    %v1832 = vsel %vm953, %v1828, %v1822
    %v1833 = vmul.f32 %v1832, %v723
    %v1834 = vmul.f32 %v1831, %v724
    %v1835 = vmul.f32 %v1830, %v725
    %v1836 = vmul.f32 %v1829, %v726
    %1837 = vst [vmem:[#allocation2 + $0x40] sm:$0xff] %v1833
    %1838 = vst [vmem:[#allocation2 + $0x48] sm:$0xff] %v1834
    %1839 = vst [vmem:[#allocation2 + $0x50] sm:$0xff] %v1835
    %1840 = vst [vmem:[#allocation2 + $0x58] sm:$0xff] %v1836
    %1841 = vrot.lane.b32.xlu0 %v1777, 1
    %v1842 = vpop.permute.xlu0 %1841
    %1843 = vrot.lane.b32.xlu0 %v1778, 1
    %v1844 = vpop.permute.xlu0 %1843
    %1845 = vrot.lane.b32.xlu0 %v1779, 1
    %v1846 = vpop.permute.xlu0 %1845
    %1847 = vrot.lane.b32.xlu0 %v1780, 1
    %v1848 = vpop.permute.xlu0 %1847
    %v1849 = vsel %vm974, %v1846, %v1848
    %v1850 = vsel %vm974, %v1844, %v1846
    %v1851 = vsel %vm974, %v1842, %v1844
    %v1852 = vsel %vm974, %v1848, %v1842
    %v1853 = vmul.f32 %v1852, %v751
    %v1854 = vmul.f32 %v1851, %v752
    %v1855 = vmul.f32 %v1850, %v753
    %v1856 = vmul.f32 %v1849, %v754
    %1857 = vst [vmem:[#allocation2 + $0x60] sm:$0xff] %v1853
    %1858 = vst [vmem:[#allocation2 + $0x68] sm:$0xff] %v1854
    %1859 = vst [vmem:[#allocation2 + $0x70] sm:$0xff] %v1855
    %1860 = vst [vmem:[#allocation2 + $0x78] sm:$0xff] %v1856
    %1861 = vst [vmem:[#allocation2 + $0x80] sm:$0xff] %v1777
    %1862 = vst [vmem:[#allocation2 + $0x88] sm:$0xff] %v1778
    %1863 = vst [vmem:[#allocation2 + $0x90] sm:$0xff] %v1779
    %1864 = vst [vmem:[#allocation2 + $0x98] sm:$0xff] %v1780
    %1865 = vrot.lane.b32.xlu0 %v1777, 127
    %v1866 = vpop.permute.xlu0 %1865
    %1867 = vrot.lane.b32.xlu0 %v1778, 127
    %v1868 = vpop.permute.xlu0 %1867
    %1869 = vrot.lane.b32.xlu0 %v1779, 127
    %v1870 = vpop.permute.xlu0 %1869
    %1871 = vrot.lane.b32.xlu0 %v1780, 127
    %v1872 = vpop.permute.xlu0 %1871
    %v1873 = vsel %vm999, %v1870, %v1872
    %v1874 = vsel %vm999, %v1868, %v1870
    %v1875 = vsel %vm999, %v1866, %v1868
    %v1876 = vsel %vm999, %v1872, %v1866
    %v1877 = vmul.f32 %v1875, %v767
    %v1878 = vmul.f32 %v1874, %v768
    %v1879 = vmul.f32 %v1873, %v769
    %v1880 = vmul.f32 %v1876, %v770
    %1881 = vst [vmem:[#allocation2 + $0xa0] sm:$0xff] %v1877
    %1882 = vst [vmem:[#allocation2 + $0xa8] sm:$0xff] %v1878
    %1883 = vst [vmem:[#allocation2 + $0xb0] sm:$0xff] %v1879
    %1884 = vst [vmem:[#allocation2 + $0xb8] sm:$0xff] %v1880
    %1885 = vrot.lane.b32.xlu0 %v1777, 113
    %v1886 = vpop.permute.xlu0 %1885
    %1887 = vrot.lane.b32.xlu0 %v1778, 113
    %v1888 = vpop.permute.xlu0 %1887
    %1889 = vrot.lane.b32.xlu0 %v1779, 113
    %v1890 = vpop.permute.xlu0 %1889
    %1891 = vrot.lane.b32.xlu0 %v1780, 113
    %v1892 = vpop.permute.xlu0 %1891
    %v1893 = vsel %vm1020, %v1890, %v1892
    %v1894 = vsel %vm1020, %v1888, %v1890
    %v1895 = vsel %vm1020, %v1886, %v1888
    %v1896 = vsel %vm1020, %v1892, %v1886
    %v1897 = vmul.f32 %v1895, %v795
    %v1898 = vmul.f32 %v1894, %v796
    %v1899 = vmul.f32 %v1893, %v797
    %v1900 = vmul.f32 %v1896, %v798
    %1901 = vst [vmem:[#allocation2 + $0xc0] sm:$0xff] %v1897
    %1902 = vst [vmem:[#allocation2 + $0xc8] sm:$0xff] %v1898
    %1903 = vst [vmem:[#allocation2 + $0xd0] sm:$0xff] %v1899
    %1904 = vst [vmem:[#allocation2 + $0xd8] sm:$0xff] %v1900
    %1905 = vrot.lane.b32.xlu0 %v1777, 112
    %v1906 = vpop.permute.xlu0 %1905
    %1907 = vrot.lane.b32.xlu0 %v1778, 112
    %v1908 = vpop.permute.xlu0 %1907
    %1909 = vrot.lane.b32.xlu0 %v1779, 112
    %v1910 = vpop.permute.xlu0 %1909
    %1911 = vrot.lane.b32.xlu0 %v1780, 112
    %v1912 = vpop.permute.xlu0 %1911
    %v1913 = vsel %vm1041, %v1910, %v1912
    %v1914 = vsel %vm1041, %v1908, %v1910
    %v1915 = vsel %vm1041, %v1906, %v1908
    %v1916 = vsel %vm1041, %v1912, %v1906
    %v1917 = vmul.f32 %v1915, %v811
    %v1918 = vmul.f32 %v1914, %v812
    %v1919 = vmul.f32 %v1913, %v813
    %v1920 = vmul.f32 %v1916, %v814
    %1921 = vst [vmem:[#allocation2 + $0xe0] sm:$0xff] %v1917
    %1922 = vst [vmem:[#allocation2 + $0xe8] sm:$0xff] %v1918
    %1923 = vst [vmem:[#allocation2 + $0xf0] sm:$0xff] %v1919
    %1924 = vst [vmem:[#allocation2 + $0xf8] sm:$0xff] %v1920
    %1925 = vrot.lane.b32.xlu0 %v1777, 111
    %v1926 = vpop.permute.xlu0 %1925
    %1927 = vrot.lane.b32.xlu0 %v1778, 111
    %v1928 = vpop.permute.xlu0 %1927
    %1929 = vrot.lane.b32.xlu0 %v1779, 111
    %v1930 = vpop.permute.xlu0 %1929
    %1931 = vrot.lane.b32.xlu0 %v1780, 111
    %v1932 = vpop.permute.xlu0 %1931
    %v1933 = vsel %vm1062, %v1930, %v1932
    %v1934 = vsel %vm1062, %v1928, %v1930
    %v1935 = vsel %vm1062, %v1926, %v1928
    %v1936 = vsel %vm1062, %v1932, %v1926
    %v1937 = vmul.f32 %v1935, %v827
    %v1938 = vmul.f32 %v1934, %v828
    %v1939 = vmul.f32 %v1933, %v829
    %v1940 = vmul.f32 %v1936, %v830
    %1941 = vst [vmem:[#allocation2 + $0x100] sm:$0xff] %v1937
    %1942 = vst [vmem:[#allocation2 + $0x108] sm:$0xff] %v1938
    %1943 = vst [vmem:[#allocation2 + $0x110] sm:$0xff] %v1939
    %1944 = vst [vmem:[#allocation2 + $0x118] sm:$0xff] %v1940
    %v1945 = vld [vmem:[#allocation2] sm:$0xff]
    %v1946 = vld [vmem:[#allocation2 + $0x8] sm:$0xff]
    %v1947 = vld [vmem:[#allocation2 + $0x10] sm:$0xff]
    %v1948 = vld [vmem:[#allocation2 + $0x18] sm:$0xff]
    %v1949 = vld [vmem:[#allocation2 + $0x20] sm:$0xff]
    %v1950 = vld [vmem:[#allocation2 + $0x28] sm:$0xff]
    %v1951 = vld [vmem:[#allocation2 + $0x30] sm:$0xff]
    %v1952 = vld [vmem:[#allocation2 + $0x38] sm:$0xff]
    %v1953 = vld [vmem:[#allocation2 + $0x40] sm:$0xff]
    %v1954 = vld [vmem:[#allocation2 + $0x48] sm:$0xff]
    %v1955 = vld [vmem:[#allocation2 + $0x50] sm:$0xff]
    %v1956 = vld [vmem:[#allocation2 + $0x58] sm:$0xff]
    %v1957 = vld [vmem:[#allocation2 + $0x60] sm:$0xff]
    %v1958 = vld [vmem:[#allocation2 + $0x68] sm:$0xff]
    %v1959 = vld [vmem:[#allocation2 + $0x70] sm:$0xff]
    %v1960 = vld [vmem:[#allocation2 + $0x78] sm:$0xff]
    %v1961 = vld [vmem:[#allocation2 + $0x80] sm:$0xff]
    %v1962 = vld [vmem:[#allocation2 + $0x88] sm:$0xff]
    %v1963 = vld [vmem:[#allocation2 + $0x90] sm:$0xff]
    %v1964 = vld [vmem:[#allocation2 + $0x98] sm:$0xff]
    %v1965 = vld [vmem:[#allocation2 + $0xa0] sm:$0xff]
    %v1966 = vld [vmem:[#allocation2 + $0xa8] sm:$0xff]
    %v1967 = vld [vmem:[#allocation2 + $0xb0] sm:$0xff]
    %v1968 = vld [vmem:[#allocation2 + $0xb8] sm:$0xff]
    %v1969 = vld [vmem:[#allocation2 + $0xc0] sm:$0xff]
    %v1970 = vld [vmem:[#allocation2 + $0xc8] sm:$0xff]
    %v1971 = vld [vmem:[#allocation2 + $0xd0] sm:$0xff]
    %v1972 = vld [vmem:[#allocation2 + $0xd8] sm:$0xff]
    %v1973 = vld [vmem:[#allocation2 + $0xe0] sm:$0xff]
    %v1974 = vld [vmem:[#allocation2 + $0xe8] sm:$0xff]
    %v1975 = vld [vmem:[#allocation2 + $0xf0] sm:$0xff]
    %v1976 = vld [vmem:[#allocation2 + $0xf8] sm:$0xff]
    %v1977 = vld [vmem:[#allocation2 + $0x100] sm:$0xff]
    %v1978 = vld [vmem:[#allocation2 + $0x108] sm:$0xff]
    %v1979 = vld [vmem:[#allocation2 + $0x110] sm:$0xff]
    %v1980 = vld [vmem:[#allocation2 + $0x118] sm:$0xff]
    %v1981 = vpack.c.bf16 %v1949, %v1945
    %v1982 = vpack.c.bf16 %v1950, %v1946
    %v1983 = vpack.c.bf16 %v1951, %v1947
    %v1984 = vpack.c.bf16 %v1952, %v1948
    %v1985 = vpack.c.bf16 %v1957, %v1953
    %v1986 = vpack.c.bf16 %v1958, %v1954
    %v1987 = vpack.c.bf16 %v1959, %v1955
    %v1988 = vpack.c.bf16 %v1960, %v1956
    %v1989 = vpack.c.bf16 %v1965, %v1961
    %v1990 = vpack.c.bf16 %v1966, %v1962
    %v1991 = vpack.c.bf16 %v1967, %v1963
    %v1992 = vpack.c.bf16 %v1968, %v1964
    %v1993 = vpack.c.bf16 %v1973, %v1969
    %v1994 = vpack.c.bf16 %v1974, %v1970
    %v1995 = vpack.c.bf16 %v1975, %v1971
    %v1996 = vpack.c.bf16 %v1976, %v1972
    %v1997 = vpack.c.bf16 %v1977, %v1977
    %v1998 = vpack.c.bf16 %v1978, %v1978
    %v1999 = vpack.c.bf16 %v1979, %v1979
    %v2000 = vpack.c.bf16 %v1980, %v1980
    %v2001 = vld [vmem:[%s12] sm:$0x3]
    %v2002 = vld [vmem:[%s13] sm:$0xf]
    %2004 = vset.pattern.permute.xlu0 0
    %2005 = vperm.xlu0 %2004, %v2002
    %v2006 = vpop.permute.xlu0 %2005
    %v2009 = vsel %vm1138, %v2001, 0
    %v2012 = vsel %vm1142, %v1997, 0
    %v2015 = vsel %vm1142, %v1998, 0
    %v2018 = vsel %vm1142, %v1999, 0
    %v2021 = vsel %vm1142, %v2000, 0
    %2023 = vmatprep.subr.bf16.mxu0 0
    %2024 = vmatpush1.bf16.msra.mxu0 0
    %2025 = vmatprep.subr.bf16.mxu0 0
    %2026 = vmatpush1.bf16.msra.mxu0 0
    %2027 = vmatprep.subr.bf16.mxu0 0
    %2028 = vmatpush1.bf16.msra.mxu0 0
    %2029 = vmatprep.subr.bf16.mxu0 %v2015
    %2030 = vmatpush1.bf16.msra.mxu0 %v2012
    %2031 = vmatprep.subr.bf16.mxu0 %v1994
    %2032 = vmatpush1.bf16.msra.mxu0 %v1993
    %2033 = vmatprep.subr.bf16.mxu0 %v1990
    %2034 = vmatpush1.bf16.msra.mxu0 %v1989
    %2035 = vmatprep.subr.bf16.mxu0 %v1986
    %2036 = vmatpush1.bf16.msra.mxu0 %v1985
    %2037 = vmatprep.subr.bf16.mxu0 %v1982
    %2038 = vmatpush1.bf16.msra.mxu0 %v1981
    %2039 = vmatprep.subr.bf16.mxu0 0
    %2040 = vmatpush2.bf16.msra.mxu0 0
    %2041 = vmatprep.subr.bf16.mxu0 0
    %2042 = vmatpush2.bf16.msra.mxu0 0
    %2043 = vmatprep.subr.bf16.mxu0 0
    %2044 = vmatpush2.bf16.msra.mxu0 0
    %2045 = vmatprep.subr.bf16.mxu0 0
    %2046 = vmatpush2.bf16.msra.mxu0 0
    %2047 = vmatprep.subr.bf16.mxu0 0
    %2048 = vmatpush2.bf16.msra.mxu0 0
    %2049 = vmatprep.subr.bf16.mxu0 0
    %2050 = vmatpush2.bf16.msra.mxu0 0
    %2051 = vmatprep.subr.bf16.mxu0 0
    %2052 = vmatpush2.bf16.msra.mxu0 0
    %2053 = vmatprep.subr.bf16.mxu0 0
    %2054 = vmatpush2.bf16.msra.mxu0 0
    %2055 = vmatprep.mubr.bf16.mxu0 0
    %2056 = vmatmul.mubr.bf16.gmra.mxu0 %v2009
    %v2057 = vpop.f32.mrf.mxu0
    %v2058 = vadd.f32 %v2006, %v2057
    %v2059 = vpop.f32.mrf.mxu0
    %v2060 = vadd.f32 %v2006, %v2059
    %v2061 = vpop.f32.mrf.mxu0
    %v2062 = vpop.f32.mrf.mxu0
    %2063 = vdwg.mxu0
    %2064 = vmatprep.subr.bf16.mxu0 0
    %2065 = vmatpush1.bf16.msra.mxu0 0
    %2066 = vmatprep.subr.bf16.mxu0 0
    %2067 = vmatpush1.bf16.msra.mxu0 0
    %2068 = vmatprep.subr.bf16.mxu0 0
    %2069 = vmatpush1.bf16.msra.mxu0 0
    %2070 = vmatprep.subr.bf16.mxu0 %v2021
    %2071 = vmatpush1.bf16.msra.mxu0 %v2018
    %2072 = vmatprep.subr.bf16.mxu0 %v1996
    %2073 = vmatpush1.bf16.msra.mxu0 %v1995
    %2074 = vmatprep.subr.bf16.mxu0 %v1992
    %2075 = vmatpush1.bf16.msra.mxu0 %v1991
    %2076 = vmatprep.subr.bf16.mxu0 %v1988
    %2077 = vmatpush1.bf16.msra.mxu0 %v1987
    %2078 = vmatprep.subr.bf16.mxu0 %v1984
    %2079 = vmatpush1.bf16.msra.mxu0 %v1983
    %2080 = vmatprep.subr.bf16.mxu0 0
    %2081 = vmatpush2.bf16.msra.mxu0 0
    %2082 = vmatprep.subr.bf16.mxu0 0
    %2083 = vmatpush2.bf16.msra.mxu0 0
    %2084 = vmatprep.subr.bf16.mxu0 0
    %2085 = vmatpush2.bf16.msra.mxu0 0
    %2086 = vmatprep.subr.bf16.mxu0 0
    %2087 = vmatpush2.bf16.msra.mxu0 0
    %2088 = vmatprep.subr.bf16.mxu0 0
    %2089 = vmatpush2.bf16.msra.mxu0 0
    %2090 = vmatprep.subr.bf16.mxu0 0
    %2091 = vmatpush2.bf16.msra.mxu0 0
    %2092 = vmatprep.subr.bf16.mxu0 0
    %2093 = vmatpush2.bf16.msra.mxu0 0
    %2094 = vmatprep.subr.bf16.mxu0 0
    %2095 = vmatpush2.bf16.msra.mxu0 0
    %2096 = vmatprep.mubr.bf16.mxu0 0
    %2097 = vmatmul.mubr.bf16.gmra.mxu0 %v2009
    %v2098 = vpop.f32.mrf.mxu0
    %v2099 = vadd.f32 %v2006, %v2098
    %v2100 = vpop.f32.mrf.mxu0
    %v2101 = vadd.f32 %v2006, %v2100
    %v2102 = vpop.f32.mrf.mxu0
    %v2103 = vpop.f32.mrf.mxu0
    %2104 = vdwg.mxu0
    %v2105 = vsel %vm1142, %v2058, 0.0
    %v2106 = vsel %vm1142, %v2060, 0.0
    %v2107 = vadd.f32 %v2105, %v2106
    %v2108 = vsel %vm1142, %v2099, 0.0
    %v2109 = vadd.f32 %v2107, %v2108
    %v2110 = vsel %vm1142, %v2101, 0.0
    %v2111 = vadd.f32 %v2109, %v2110
    %2112 = vadd.xlane.f32.xlu0 %v2111
    %v2113 = vpop.xlane.xlu0 %2112
    %v2114 = vrcp.pop 512.0
    %v2115 = vmul.f32 %v2113, %v2114
    %v2116 = vsub.f32 %v2058, %v2115
    %v2117 = vsub.f32 %v2060, %v2115
    %v2118 = vsub.f32 %v2099, %v2115
    %v2119 = vsub.f32 %v2101, %v2115
    %v2120 = vmul.f32 %v2116, %v2116
    %v2121 = vmul.f32 %v2117, %v2117
    %v2122 = vmul.f32 %v2118, %v2118
    %v2123 = vmul.f32 %v2119, %v2119
    %v2124 = vsel %vm1142, %v2120, 0.0
    %v2125 = vsel %vm1142, %v2121, 0.0
    %v2126 = vadd.f32 %v2124, %v2125
    %v2127 = vsel %vm1142, %v2122, 0.0
    %v2128 = vadd.f32 %v2126, %v2127
    %v2129 = vsel %vm1142, %v2123, 0.0
    %v2130 = vadd.f32 %v2128, %v2129
    %2131 = vadd.xlane.f32.xlu0 %v2130
    %v2132 = vpop.xlane.xlu0 %2131
    %v2133 = vmul.f32 %v2132, %v2114
    %v2134 = vadd.f32 %v2133, 1e-05
    %v2135 = vrsqrt.pop %v2134
    %v2136 = vld [vmem:[%s16] sm:$0xf]
    %v2137 = vmul.f32 %v2135, %v2136
    %2139 = vset.pattern.permute.xlu0 0
    %2140 = vperm.xlu0 %2139, %v2137
    %v2141 = vpop.permute.xlu0 %2140
    %v2143 = vmul.f32 %v2116, %v2141
    %v2144 = vmul.f32 %v2117, %v2141
    %v2145 = vmul.f32 %v2118, %v2141
    %v2146 = vmul.f32 %v2119, %v2141
    %v2147 = vld [vmem:[%s17] sm:$0xf]
    %2149 = vset.pattern.permute.xlu0 0
    %2150 = vperm.xlu0 %2149, %v2147
    %v2151 = vpop.permute.xlu0 %2150
    %v2153 = vadd.f32 %v2143, %v2151
    %v2154 = vadd.f32 %v2144, %v2151
    %v2155 = vadd.f32 %v2145, %v2151
    %v2156 = vadd.f32 %v2146, %v2151
    %v2157 = vld [vmem:[%s14] sm:$0xf]
    %2158 = vrot.lane.b32.xlu0 %v2153, 17
    %v2159 = vpop.permute.xlu0 %2158
    %2160 = vrot.lane.b32.xlu0 %v2154, 17
    %v2161 = vpop.permute.xlu0 %2160
    %2162 = vrot.lane.b32.xlu0 %v2155, 17
    %v2163 = vpop.permute.xlu0 %2162
    %2164 = vrot.lane.b32.xlu0 %v2156, 17
    %v2165 = vpop.permute.xlu0 %2164
    %v2166 = vsel %vm911, %v2163, %v2165
    %v2167 = vsel %vm911, %v2161, %v2163
    %v2168 = vsel %vm911, %v2159, %v2161
    %v2169 = vsel %vm911, %v2165, %v2159
    %v2170 = vmul.f32 %v2169, %v671
    %v2171 = vmul.f32 %v2168, %v672
    %v2172 = vmul.f32 %v2167, %v673
    %v2173 = vmul.f32 %v2166, %v674
    %2175 = vset.pattern.permute.xlu0 0
    %2176 = vperm.xlu0 %2175, %v2157
    %v2177 = vpop.permute.xlu0 %2176
    %v2179 = vmul.f32 %v2170, %v2177
    %v2180 = vmul.f32 %v2171, %v2177
    %v2181 = vmul.f32 %v2172, %v2177
    %v2182 = vmul.f32 %v2173, %v2177
    %2183 = vrot.lane.b32.xlu0 %v2153, 16
    %v2184 = vpop.permute.xlu0 %2183
    %2185 = vrot.lane.b32.xlu0 %v2154, 16
    %v2186 = vpop.permute.xlu0 %2185
    %2187 = vrot.lane.b32.xlu0 %v2155, 16
    %v2188 = vpop.permute.xlu0 %2187
    %2189 = vrot.lane.b32.xlu0 %v2156, 16
    %v2190 = vpop.permute.xlu0 %2189
    %v2191 = vsel %vm932, %v2188, %v2190
    %v2192 = vsel %vm932, %v2186, %v2188
    %v2193 = vsel %vm932, %v2184, %v2186
    %v2194 = vsel %vm932, %v2190, %v2184
    %v2195 = vmul.f32 %v2194, %v695
    %v2196 = vmul.f32 %v2193, %v696
    %v2197 = vmul.f32 %v2192, %v697
    %v2198 = vmul.f32 %v2191, %v698
    %2199 = vset.pattern.permute.xlu0 1
    %2200 = vperm.xlu0 %2199, %v2157
    %v2201 = vpop.permute.xlu0 %2200
    %v2203 = vmul.f32 %v2195, %v2201
    %v2204 = vmul.f32 %v2196, %v2201
    %v2205 = vmul.f32 %v2197, %v2201
    %v2206 = vmul.f32 %v2198, %v2201
    %v2207 = vadd.f32 %v2179, %v2203
    %v2208 = vadd.f32 %v2180, %v2204
    %v2209 = vadd.f32 %v2181, %v2205
    %v2210 = vadd.f32 %v2182, %v2206
    %2211 = vrot.lane.b32.xlu0 %v2153, 15
    %v2212 = vpop.permute.xlu0 %2211
    %2213 = vrot.lane.b32.xlu0 %v2154, 15
    %v2214 = vpop.permute.xlu0 %2213
    %2215 = vrot.lane.b32.xlu0 %v2155, 15
    %v2216 = vpop.permute.xlu0 %2215
    %2217 = vrot.lane.b32.xlu0 %v2156, 15
    %v2218 = vpop.permute.xlu0 %2217
    %v2219 = vsel %vm953, %v2216, %v2218
    %v2220 = vsel %vm953, %v2214, %v2216
    %v2221 = vsel %vm953, %v2212, %v2214
    %v2222 = vsel %vm953, %v2218, %v2212
    %v2223 = vmul.f32 %v2222, %v723
    %v2224 = vmul.f32 %v2221, %v724
    %v2225 = vmul.f32 %v2220, %v725
    %v2226 = vmul.f32 %v2219, %v726
    %2227 = vset.pattern.permute.xlu0 2
    %2228 = vperm.xlu0 %2227, %v2157
    %v2229 = vpop.permute.xlu0 %2228
    %v2231 = vmul.f32 %v2223, %v2229
    %v2232 = vmul.f32 %v2224, %v2229
    %v2233 = vmul.f32 %v2225, %v2229
    %v2234 = vmul.f32 %v2226, %v2229
    %v2235 = vadd.f32 %v2207, %v2231
    %v2236 = vadd.f32 %v2208, %v2232
    %v2237 = vadd.f32 %v2209, %v2233
    %v2238 = vadd.f32 %v2210, %v2234
    %2239 = vrot.lane.b32.xlu0 %v2153, 1
    %v2240 = vpop.permute.xlu0 %2239
    %2241 = vrot.lane.b32.xlu0 %v2154, 1
    %v2242 = vpop.permute.xlu0 %2241
    %2243 = vrot.lane.b32.xlu0 %v2155, 1
    %v2244 = vpop.permute.xlu0 %2243
    %2245 = vrot.lane.b32.xlu0 %v2156, 1
    %v2246 = vpop.permute.xlu0 %2245
    %v2247 = vsel %vm974, %v2244, %v2246
    %v2248 = vsel %vm974, %v2242, %v2244
    %v2249 = vsel %vm974, %v2240, %v2242
    %v2250 = vsel %vm974, %v2246, %v2240
    %v2251 = vmul.f32 %v2250, %v751
    %v2252 = vmul.f32 %v2249, %v752
    %v2253 = vmul.f32 %v2248, %v753
    %v2254 = vmul.f32 %v2247, %v754
    %2255 = vset.pattern.permute.xlu0 3
    %2256 = vperm.xlu0 %2255, %v2157
    %v2257 = vpop.permute.xlu0 %2256
    %v2259 = vmul.f32 %v2251, %v2257
    %v2260 = vmul.f32 %v2252, %v2257
    %v2261 = vmul.f32 %v2253, %v2257
    %v2262 = vmul.f32 %v2254, %v2257
    %v2263 = vadd.f32 %v2235, %v2259
    %v2264 = vadd.f32 %v2236, %v2260
    %v2265 = vadd.f32 %v2237, %v2261
    %v2266 = vadd.f32 %v2238, %v2262
    %2267 = vset.pattern.permute.xlu0 4
    %2268 = vperm.xlu0 %2267, %v2157
    %v2269 = vpop.permute.xlu0 %2268
    %v2271 = vmul.f32 %v2153, %v2269
    %v2272 = vmul.f32 %v2154, %v2269
    %v2273 = vmul.f32 %v2155, %v2269
    %v2274 = vmul.f32 %v2156, %v2269
    %v2275 = vadd.f32 %v2263, %v2271
    %v2276 = vadd.f32 %v2264, %v2272
    %v2277 = vadd.f32 %v2265, %v2273
    %v2278 = vadd.f32 %v2266, %v2274
    %2279 = vrot.lane.b32.xlu0 %v2153, 127
    %v2280 = vpop.permute.xlu0 %2279
    %2281 = vrot.lane.b32.xlu0 %v2154, 127
    %v2282 = vpop.permute.xlu0 %2281
    %2283 = vrot.lane.b32.xlu0 %v2155, 127
    %v2284 = vpop.permute.xlu0 %2283
    %2285 = vrot.lane.b32.xlu0 %v2156, 127
    %v2286 = vpop.permute.xlu0 %2285
    %v2287 = vsel %vm999, %v2284, %v2286
    %v2288 = vsel %vm999, %v2282, %v2284
    %v2289 = vsel %vm999, %v2280, %v2282
    %v2290 = vsel %vm999, %v2286, %v2280
    %v2291 = vmul.f32 %v2289, %v767
    %v2292 = vmul.f32 %v2288, %v768
    %v2293 = vmul.f32 %v2287, %v769
    %v2294 = vmul.f32 %v2290, %v770
    %2295 = vset.pattern.permute.xlu0 5
    %2296 = vperm.xlu0 %2295, %v2157
    %v2297 = vpop.permute.xlu0 %2296
    %v2299 = vmul.f32 %v2291, %v2297
    %v2300 = vmul.f32 %v2292, %v2297
    %v2301 = vmul.f32 %v2293, %v2297
    %v2302 = vmul.f32 %v2294, %v2297
    %v2303 = vadd.f32 %v2275, %v2299
    %v2304 = vadd.f32 %v2276, %v2300
    %v2305 = vadd.f32 %v2277, %v2301
    %v2306 = vadd.f32 %v2278, %v2302
    %2307 = vrot.lane.b32.xlu0 %v2153, 113
    %v2308 = vpop.permute.xlu0 %2307
    %2309 = vrot.lane.b32.xlu0 %v2154, 113
    %v2310 = vpop.permute.xlu0 %2309
    %2311 = vrot.lane.b32.xlu0 %v2155, 113
    %v2312 = vpop.permute.xlu0 %2311
    %2313 = vrot.lane.b32.xlu0 %v2156, 113
    %v2314 = vpop.permute.xlu0 %2313
    %v2315 = vsel %vm1020, %v2312, %v2314
    %v2316 = vsel %vm1020, %v2310, %v2312
    %v2317 = vsel %vm1020, %v2308, %v2310
    %v2318 = vsel %vm1020, %v2314, %v2308
    %v2319 = vmul.f32 %v2317, %v795
    %v2320 = vmul.f32 %v2316, %v796
    %v2321 = vmul.f32 %v2315, %v797
    %v2322 = vmul.f32 %v2318, %v798
    %2323 = vset.pattern.permute.xlu0 6
    %2324 = vperm.xlu0 %2323, %v2157
    %v2325 = vpop.permute.xlu0 %2324
    %v2327 = vmul.f32 %v2319, %v2325
    %v2328 = vmul.f32 %v2320, %v2325
    %v2329 = vmul.f32 %v2321, %v2325
    %v2330 = vmul.f32 %v2322, %v2325
    %v2331 = vadd.f32 %v2303, %v2327
    %v2332 = vadd.f32 %v2304, %v2328
    %v2333 = vadd.f32 %v2305, %v2329
    %v2334 = vadd.f32 %v2306, %v2330
    %2335 = vrot.lane.b32.xlu0 %v2153, 112
    %v2336 = vpop.permute.xlu0 %2335
    %2337 = vrot.lane.b32.xlu0 %v2154, 112
    %v2338 = vpop.permute.xlu0 %2337
    %2339 = vrot.lane.b32.xlu0 %v2155, 112
    %v2340 = vpop.permute.xlu0 %2339
    %2341 = vrot.lane.b32.xlu0 %v2156, 112
    %v2342 = vpop.permute.xlu0 %2341
    %v2343 = vsel %vm1041, %v2340, %v2342
    %v2344 = vsel %vm1041, %v2338, %v2340
    %v2345 = vsel %vm1041, %v2336, %v2338
    %v2346 = vsel %vm1041, %v2342, %v2336
    %v2347 = vmul.f32 %v2345, %v811
    %v2348 = vmul.f32 %v2344, %v812
    %v2349 = vmul.f32 %v2343, %v813
    %v2350 = vmul.f32 %v2346, %v814
    %2351 = vset.pattern.permute.xlu0 7
    %2352 = vperm.xlu0 %2351, %v2157
    %v2353 = vpop.permute.xlu0 %2352
    %v2355 = vmul.f32 %v2347, %v2353
    %v2356 = vmul.f32 %v2348, %v2353
    %v2357 = vmul.f32 %v2349, %v2353
    %v2358 = vmul.f32 %v2350, %v2353
    %v2359 = vadd.f32 %v2331, %v2355
    %v2360 = vadd.f32 %v2332, %v2356
    %v2361 = vadd.f32 %v2333, %v2357
    %v2362 = vadd.f32 %v2334, %v2358
    %2363 = vrot.lane.b32.xlu0 %v2153, 111
    %v2364 = vpop.permute.xlu0 %2363
    %2365 = vrot.lane.b32.xlu0 %v2154, 111
    %v2366 = vpop.permute.xlu0 %2365
    %2367 = vrot.lane.b32.xlu0 %v2155, 111
    %v2368 = vpop.permute.xlu0 %2367
    %2369 = vrot.lane.b32.xlu0 %v2156, 111
    %v2370 = vpop.permute.xlu0 %2369
    %v2371 = vsel %vm1062, %v2368, %v2370
    %v2372 = vsel %vm1062, %v2366, %v2368
    %v2373 = vsel %vm1062, %v2364, %v2366
    %v2374 = vsel %vm1062, %v2370, %v2364
    %v2375 = vmul.f32 %v2373, %v827
    %v2376 = vmul.f32 %v2372, %v828
    %v2377 = vmul.f32 %v2371, %v829
    %v2378 = vmul.f32 %v2374, %v830
    %2379 = vset.pattern.permute.xlu0 8
    %2380 = vperm.xlu0 %2379, %v2157
    %v2381 = vpop.permute.xlu0 %2380
    %v2383 = vmul.f32 %v2375, %v2381
    %v2384 = vmul.f32 %v2376, %v2381
    %v2385 = vmul.f32 %v2377, %v2381
    %v2386 = vmul.f32 %v2378, %v2381
    %v2387 = vadd.f32 %v2359, %v2383
    %v2388 = vadd.f32 %v2360, %v2384
    %v2389 = vadd.f32 %v2361, %v2385
    %v2390 = vadd.f32 %v2362, %v2386
    %v2391 = vsel %vm1142, %v2387, 0.0
    %v2392 = vrot.slane %v2391, 4
    %v2393 = vadd.f32 %v2391, %v2392
    %v2394 = vrot.slane %v2393, 2
    %v2395 = vadd.f32 %v2393, %v2394
    %v2396 = vrot.slane %v2395, 1
    %v2397 = vadd.f32 %v2395, %v2396
    %v2398 = vsel %vm1142, %v2388, 0.0
    %v2399 = vrot.slane %v2398, 4
    %v2400 = vadd.f32 %v2398, %v2399
    %v2401 = vrot.slane %v2400, 2
    %v2402 = vadd.f32 %v2400, %v2401
    %v2403 = vrot.slane %v2402, 1
    %v2404 = vadd.f32 %v2402, %v2403
    %v2405 = vsel %vm1142, %v2389, 0.0
    %v2406 = vrot.slane %v2405, 4
    %v2407 = vadd.f32 %v2405, %v2406
    %v2408 = vrot.slane %v2407, 2
    %v2409 = vadd.f32 %v2407, %v2408
    %v2410 = vrot.slane %v2409, 1
    %v2411 = vadd.f32 %v2409, %v2410
    %v2412 = vsel %vm1142, %v2390, 0.0
    %v2413 = vrot.slane %v2412, 4
    %v2414 = vadd.f32 %v2412, %v2413
    %v2415 = vrot.slane %v2414, 2
    %v2416 = vadd.f32 %v2414, %v2415
    %v2417 = vrot.slane %v2416, 1
    %v2418 = vadd.f32 %v2416, %v2417
    %v2419 = vld [vmem:[#allocation3] sm:$0x1]
    %2421 = vset.pattern.permute.xlu0 0
    %2422 = vperm.xlu0 %2421, %v2419
    %v2423 = vpop.permute.xlu0 %2422
    %v2425 = vlaneseq
    %v2426 = vshrl.u32 %v2425, 7
    %v2427 = vsub.s32 0, %v2426
    %v2428 = vrot.slane %v2423, %v2427
    %v2429 = vadd.f32 %v2397, %v2428
    %v2430 = vadd.f32 %v2404, %v2428
    %v2431 = vadd.f32 %v2411, %v2428
    %v2432 = vadd.f32 %v2418, %v2428
    %v2433 = vtanh.pop %v2429
    %v2434 = vtanh.pop %v2430
    %v2435 = vtanh.pop %v2431
    %v2436 = vtanh.pop %v2432
    %v2441 = vcombine.low %v2433, %v2434
    %v2442 = vcombine.low %v2435, %v2436
    %v2444 = vunpack.c.l.s4 1966171168
    %v2445 = vunpack.c.0.s8 %v2444
    %v2446 = vlaneseq
    %v2447 = vshrl.u32 %v2446, 7
    %v2448 = vsub.s32 %v2445, %v2447
    %v2449 = vrot.slane %v2441, %v2448
    %v2451 = vunpack.c.l.s4 1966171168
    %v2452 = vunpack.c.0.s8 %v2451
    %v2453 = vlaneseq
    %v2454 = vshrl.u32 %v2453, 7
    %v2455 = vsub.s32 %v2452, %v2454
    %v2456 = vrot.slane %v2442, %v2455
    %v2457 = vcombine.low %v2449, %v2456
    %v2459 = vunpack.c.l.s4 1966171168
    %v2460 = vunpack.c.0.s8 %v2459
    %v2461 = vlaneseq
    %v2462 = vshrl.u32 %v2461, 7
    %v2463 = vsub.s32 %v2460, %v2462
    %v2464 = vrot.slane %v2457, %v2463
    %v2466 = vlaneseq
    %vm2467 = vcmp.ge.s32.totalorder %v2466, 0
    %vm2468 = vcmp.lt.s32.totalorder %v2466, 512
    %vm2469 = vmand %vm2467, %vm2468
    %2470 = vst.msk [vmem:[%s18] sm:$0xf] %vm2469, %v2464
    // Predicated region
    $region98: #{ada_decoder_forward.1} parent=1 // pred_check
      _
    $region99: #{ada_decoder_forward.1} parent=1 // pred_check_branch
      %2472 = sbr.rel (0) target = $region101
    $region100: #{ada_decoder_forward.1} parent=1 // pred_region
      _
    $region101: #{ada_decoder_forward.1} parent=1 // pred_fallthru
      _
    // Predicated region
    $region102: #{ada_decoder_forward.1} parent=1 // pred_check
      _
    $region103: #{ada_decoder_forward.1} parent=1 // pred_check_branch
      %2474 = sbr.rel (0) target = $region105
    $region104: #{ada_decoder_forward.1} parent=1 // pred_region
      _
    $region105: #{ada_decoder_forward.1} parent=1 // pred_fallthru
      _
    %2475 = vsyncpa [#allocation5], 1
    %2476 = vsyncpa [#allocation7], 1
    %2477 = vsyncpa [#allocation10], 1
    %2478 = vsyncpa [#allocation13], 1

</llo_original>
